<compile_context>
chip_gen: v7x
topology: tpu7x:2x2x1
jax: 0.10.0
libtpu: 0.0.40
codegen_flags: <defaults>
</compile_context>

<pallas_src>
import math

import jax
import jax.numpy as jnp
from jax.experimental import pallas as pl
from jax.experimental.pallas import tpu as pltpu

LN_EPS = 1e-5


# ---------------------------------------------------------------------------
# In-kernel helpers (traced inside the Pallas kernel body)
# ---------------------------------------------------------------------------
def _layer_norm(x, g_ref, b_ref):
    # x: (S, D) f32; g_ref/b_ref: (1, D) f32
    mu = jnp.mean(x, axis=-1, keepdims=True)
    var = jnp.mean((x - mu) ** 2, axis=-1, keepdims=True)
    return (x - mu) * jax.lax.rsqrt(var + LN_EPS) * g_ref[0] + b_ref[0]


def _linear(x_f32, w_ref, b_ref):
    # bf16 operands on the MXU, f32 accumulation, bias added in f32.
    y = jnp.dot(x_f32.astype(jnp.bfloat16), w_ref[...],
                preferred_element_type=jnp.float32)
    return y + b_ref[0]


def _gelu_tanh(x):
    c = math.sqrt(2.0 / math.pi)
    return 0.5 * x * (1.0 + jnp.tanh(c * (x + 0.044715 * x * x * x)))


def _attn_into_out(q, k, v, wo_ref, n_heads):
    """softmax(q k^T / sqrt(hd)) v folded into the output projection.

    q: (Sq, D) f32, k/v: (Skv, D) f32, wo_ref: (D, D) bf16 ref.
    Returns concat_h(ctx_h) @ Wo  ==  sum_h ctx_h @ Wo[h*hd:(h+1)*hd, :]  (f32),
    without materializing any transpose or narrow-lane concatenate.
    """
    D = q.shape[-1]
    hd = D // n_heads
    scale = 1.0 / math.sqrt(hd)
    out = jnp.zeros((q.shape[0], D), jnp.float32)
    for h in range(n_heads):                       # static unroll (small n_heads)
        sl = slice(h * hd, (h + 1) * hd)           # lane-tile aligned (hd % 128 == 0)
        qh = q[:, sl].astype(jnp.bfloat16)
        kh = k[:, sl].astype(jnp.bfloat16)
        vh = v[:, sl].astype(jnp.bfloat16)
        # q @ k^T via contracting dims (no explicit XLU transpose).
        s = jax.lax.dot_general(qh, kh, (((1,), (1,)), ((), ())),
                                preferred_element_type=jnp.float32) * scale
        s = s - jnp.max(s, axis=-1, keepdims=True)
        p = jnp.exp(s)
        p = p * pl.reciprocal(jnp.sum(p, axis=-1, keepdims=True), approx=True)
        ctx = jnp.dot(p.astype(jnp.bfloat16), vh,
                      preferred_element_type=jnp.float32)        # (Sq, hd)
        out = out + jnp.dot(ctx.astype(jnp.bfloat16), wo_ref[sl, :],
                            preferred_element_type=jnp.float32)  # (Sq, D)
    return out


# ---------------------------------------------------------------------------
# Fused decoder-block kernel (one batch element per grid step)
# ---------------------------------------------------------------------------
def _make_kernel(n_heads, with_xa):
    def kernel(*refs):
        if with_xa:
            (x_ref, kv_ref,
             g1, be1, wqkv, bqkv, wo, bo,
             g2, be2, wxq, bxq, wxkv, bxkv, wxo, bxo,
             g3, be3, w1, bm1, w2, bm2,
             out_ref) = refs
        else:
            (x_ref,
             g1, be1, wqkv, bqkv, wo, bo,
             g3, be3, w1, bm1, w2, bm2,
             out_ref) = refs

        x = x_ref[0].astype(jnp.float32)   # (S, D)
        D = x.shape[-1]

        # ---- self attention: q,k,v = sa_qkv(ln1(x)).chunk(3, -1) ----
        h1 = _layer_norm(x, g1, be1)
        qkv = _linear(h1, wqkv, bqkv)                       # (S, 3D) f32
        q, k, v = qkv[:, :D], qkv[:, D:2 * D], qkv[:, 2 * D:]
        x = x + _attn_into_out(q, k, v, wo, n_heads) + bo[0]

        # ---- optional cross attention ----
        if with_xa:
            kv_in = kv_ref[0].astype(jnp.float32)           # (Skv, D)
            h2 = _layer_norm(x, g2, be2)
            qx = _linear(h2, wxq, bxq)                      # (S, D)
            kvp = _linear(kv_in, wxkv, bxkv)                # (Skv, 2D)
            kx, vx = kvp[:, :D], kvp[:, D:]
            x = x + _attn_into_out(qx, kx, vx, wxo, n_heads) + bxo[0]

        # ---- MLP: x + W2 @ gelu(W1 @ ln3(x)) ----
        h3 = _layer_norm(x, g3, be3)
        m = _linear(_gelu_tanh(_linear(h3, w1, bm1)), w2, bm2)
        out_ref[0] = (x + m).astype(out_ref.dtype)

    return kernel


def _full_spec(arr):
    return pl.BlockSpec(arr.shape, lambda b, _nd=arr.ndim: (0,) * _nd)


def decoder_block(x, kv, params, *, n_heads, with_xa):
    B, S, D = x.shape
    args = [x]
    specs = [pl.BlockSpec((1, S, D), lambda b: (b, 0, 0))]

    if with_xa:
        Skv = kv.shape[1]
        args.append(kv)
        specs.append(pl.BlockSpec((1, Skv, D), lambda b: (b, 0, 0)))
        wnames = ["ln1_g", "ln1_b", "wqkv", "bqkv", "wo", "bo",
                  "ln2_g", "ln2_b", "wxq", "bxq", "wxkv", "bxkv", "wxo", "bxo",
                  "ln3_g", "ln3_b", "w1", "b1", "w2", "b2"]
    else:
        Skv = 0
        wnames = ["ln1_g", "ln1_b", "wqkv", "bqkv", "wo", "bo",
                  "ln3_g", "ln3_b", "w1", "b1", "w2", "b2"]

    for name in wnames:
        w = params[name]
        args.append(w)
        specs.append(_full_spec(w))

    # --- advisory cost estimate so XLA can schedule around the kernel ---
    H = params["w1"].shape[1]
    per_b = 2 * S * D * 3 * D                 # qkv projection
    per_b += 4 * S * S * D                    # self-attn scores + ctx
    per_b += 2 * S * D * D                    # sa_o
    if with_xa:
        per_b += 2 * S * D * D                # xa_q
        per_b += 2 * Skv * D * 2 * D          # xa_kv
        per_b += 4 * S * Skv * D              # cross-attn scores + ctx
        per_b += 2 * S * D * D                # xa_o
    per_b += 4 * S * D * H                    # MLP
    flops = B * per_b
    transc = B * (n_heads * S * (S + (Skv if with_xa else 0)) + S * H + 3 * S)
    bytes_accessed = (2 * x.size * x.dtype.itemsize
                      + (kv.size * kv.dtype.itemsize if with_xa else 0)
                      + sum(int(params[n].size) * params[n].dtype.itemsize
                            for n in wnames))

    return pl.pallas_call(
        _make_kernel(n_heads, with_xa),
        grid=(B,),
        in_specs=specs,
        out_specs=pl.BlockSpec((1, S, D), lambda b: (b, 0, 0)),
        out_shape=jax.ShapeDtypeStruct((B, S, D), x.dtype),
        compiler_params=pltpu.CompilerParams(
            dimension_semantics=("parallel",),
            vmem_limit_bytes=32 * 1024 * 1024),
        cost_estimate=pl.CostEstimate(flops=int(flops),
                                      transcendentals=int(transc),
                                      bytes_accessed=int(bytes_accessed)),
    )(*args)


# ---------------------------------------------------------------------------
# Deterministic parameter init + pure-JAX reference
# ---------------------------------------------------------------------------
def init_params(key, D, H, with_xa):
    def wmat(k, shape):   # matmul operands stored in bf16 (MXU-native)
        return (0.02 * jax.random.normal(k, shape, dtype=jnp.float32)
                ).astype(jnp.bfloat16)

    def bvec(k, shape):   # biases / LN params stay f32
        return 0.02 * jax.random.normal(k, shape, dtype=jnp.float32)

    keys = jax.random.split(key, 16)
    p = {
        "ln1_g": jnp.ones((1, D), jnp.float32), "ln1_b": jnp.zeros((1, D), jnp.float32),
        "wqkv": wmat(keys[0], (D, 3 * D)), "bqkv": bvec(keys[1], (1, 3 * D)),
        "wo": wmat(keys[2], (D, D)), "bo": bvec(keys[3], (1, D)),
        "ln3_g": jnp.ones((1, D), jnp.float32), "ln3_b": jnp.zeros((1, D), jnp.float32),
        "w1": wmat(keys[4], (D, H)), "b1": bvec(keys[5], (1, H)),
        "w2": wmat(keys[6], (H, D)), "b2": bvec(keys[7], (1, D)),
    }
    if with_xa:
        p.update({
            "ln2_g": jnp.ones((1, D), jnp.float32), "ln2_b": jnp.zeros((1, D), jnp.float32),
            "wxq": wmat(keys[8], (D, D)), "bxq": bvec(keys[9], (1, D)),
            "wxkv": wmat(keys[10], (D, 2 * D)), "bxkv": bvec(keys[11], (1, 2 * D)),
            "wxo": wmat(keys[12], (D, D)), "bxo": bvec(keys[13], (1, D)),
        })
    return p


def reference(x, kv, p, *, n_heads, with_xa):
    bf = jnp.bfloat16

    def dot(a, b):
        return jnp.dot(a.astype(bf), b.astype(bf), preferred_element_type=jnp.float32)

    def ln(t, g, b):
        mu = jnp.mean(t, -1, keepdims=True)
        var = jnp.mean((t - mu) ** 2, -1, keepdims=True)
        return (t - mu) * jax.lax.rsqrt(var + LN_EPS) * g[0] + b[0]

    def mha(q, k, v):
        D = q.shape[-1]
        hd = D // n_heads
        outs = []
        for h in range(n_heads):
            qh, kh, vh = (t[:, h * hd:(h + 1) * hd] for t in (q, k, v))
            s = dot(qh, kh.T) / math.sqrt(hd)
            pz = jax.nn.softmax(s, axis=-1)
            outs.append(dot(pz, vh))
        return jnp.concatenate(outs, -1)

    def one(xb, kvb):
        D = xb.shape[-1]
        qkv = dot(ln(xb, p["ln1_g"], p["ln1_b"]), p["wqkv"]) + p["bqkv"][0]
        q, k, v = qkv[:, :D], qkv[:, D:2 * D], qkv[:, 2 * D:]
        xb = xb + dot(mha(q, k, v), p["wo"]) + p["bo"][0]
        if with_xa:
            qx = dot(ln(xb, p["ln2_g"], p["ln2_b"]), p["wxq"]) + p["bxq"][0]
            kvp = dot(kvb, p["wxkv"]) + p["bxkv"][0]
            xb = xb + dot(mha(qx, kvp[:, :D], kvp[:, D:]), p["wxo"]) + p["bxo"][0]
        h = dot(ln(xb, p["ln3_g"], p["ln3_b"]), p["w1"]) + p["b1"][0]
        c = math.sqrt(2.0 / math.pi)
        h = 0.5 * h * (1.0 + jnp.tanh(c * (h + 0.044715 * h ** 3)))
        return xb + dot(h, p["w2"]) + p["b2"][0]

    if with_xa:
        return jax.vmap(one)(x, kv)
    return jax.vmap(lambda xb: one(xb, None))(x)


if __name__ == "__main__":
    # Lane-dense shapes: D = 256, head_dim = 128 (multiples of 128 lanes),
    # S = 16 / Skv = 24 (multiples of 8 sublanes). Small but TPU-friendly.
    B, S, Skv = 2, 16, 24
    D, NH, H = 256, 2, 512
    with_xa = True

    key = jax.random.PRNGKey(0)
    kx, kkv, kp = jax.random.split(key, 3)
    x = jax.random.normal(kx, (B, S, D), dtype=jnp.float32)
    kv = jax.random.normal(kkv, (B, Skv, D), dtype=jnp.float32)
    params = init_params(kp, D, H, with_xa)

    out = decoder_block(x, kv, params, n_heads=NH, with_xa=with_xa)
    out = jax.block_until_ready(out)

    ref = reference(x, kv, params, n_heads=NH, with_xa=with_xa)
    assert out.shape == (B, S, D) and out.dtype == x.dtype
    max_err = float(jnp.max(jnp.abs(out - ref)))
    assert jnp.allclose(out, ref, rtol=2e-2, atol=2e-2), \
        f"mismatch vs JAX reference (max abs err {max_err})"

    print("KERNEL_OK")
</pallas_src>

<mosaic_0001>
module attributes {stable_mosaic.version = 11 : i64} {
  func.func @kernel(%arg0: i32, %arg1: memref<1x16x256xf32, #tpu.memory_space<vmem>>, %arg2: memref<1x24x256xf32, #tpu.memory_space<vmem>>, %arg3: memref<1x256xf32, #tpu.memory_space<vmem>>, %arg4: memref<1x256xf32, #tpu.memory_space<vmem>>, %arg5: memref<256x768xbf16, #tpu.memory_space<vmem>>, %arg6: memref<1x768xf32, #tpu.memory_space<vmem>>, %arg7: memref<256x256xbf16, #tpu.memory_space<vmem>>, %arg8: memref<1x256xf32, #tpu.memory_space<vmem>>, %arg9: memref<1x256xf32, #tpu.memory_space<vmem>>, %arg10: memref<1x256xf32, #tpu.memory_space<vmem>>, %arg11: memref<256x256xbf16, #tpu.memory_space<vmem>>, %arg12: memref<1x256xf32, #tpu.memory_space<vmem>>, %arg13: memref<256x512xbf16, #tpu.memory_space<vmem>>, %arg14: memref<1x512xf32, #tpu.memory_space<vmem>>, %arg15: memref<256x256xbf16, #tpu.memory_space<vmem>>, %arg16: memref<1x256xf32, #tpu.memory_space<vmem>>, %arg17: memref<1x256xf32, #tpu.memory_space<vmem>>, %arg18: memref<1x256xf32, #tpu.memory_space<vmem>>, %arg19: memref<256x512xbf16, #tpu.memory_space<vmem>>, %arg20: memref<1x512xf32, #tpu.memory_space<vmem>>, %arg21: memref<512x256xbf16, #tpu.memory_space<vmem>>, %arg22: memref<1x256xf32, #tpu.memory_space<vmem>>, %arg23: memref<1x16x256xf32, #tpu.memory_space<vmem>>) attributes {dimension_semantics = [#tpu.dimension_semantics<parallel>], iteration_bounds = array<i64: 2>, scalar_prefetch = 0 : i64, scratch_operands = 0 : i64, tpu.core_type = #tpu.core_type<tc>, window_params = [{transform_indices = @transform_0, window_bounds = array<i64: 1, 16, 256>}, {transform_indices = @transform_1, window_bounds = array<i64: 1, 24, 256>}, {pipeline_mode = #tpu.pipeline_mode<synchronous>, transform_indices = @transform_2, window_bounds = array<i64: 1, 256>}, {pipeline_mode = #tpu.pipeline_mode<synchronous>, transform_indices = @transform_3, window_bounds = array<i64: 1, 256>}, {pipeline_mode = #tpu.pipeline_mode<synchronous>, transform_indices = @transform_4, window_bounds = array<i64: 256, 768>}, {pipeline_mode = #tpu.pipeline_mode<synchronous>, transform_indices = @transform_5, window_bounds = array<i64: 1, 768>}, {pipeline_mode = #tpu.pipeline_mode<synchronous>, transform_indices = @transform_6, window_bounds = array<i64: 256, 256>}, {pipeline_mode = #tpu.pipeline_mode<synchronous>, transform_indices = @transform_7, window_bounds = array<i64: 1, 256>}, {pipeline_mode = #tpu.pipeline_mode<synchronous>, transform_indices = @transform_8, window_bounds = array<i64: 1, 256>}, {pipeline_mode = #tpu.pipeline_mode<synchronous>, transform_indices = @transform_9, window_bounds = array<i64: 1, 256>}, {pipeline_mode = #tpu.pipeline_mode<synchronous>, transform_indices = @transform_10, window_bounds = array<i64: 256, 256>}, {pipeline_mode = #tpu.pipeline_mode<synchronous>, transform_indices = @transform_11, window_bounds = array<i64: 1, 256>}, {pipeline_mode = #tpu.pipeline_mode<synchronous>, transform_indices = @transform_12, window_bounds = array<i64: 256, 512>}, {pipeline_mode = #tpu.pipeline_mode<synchronous>, transform_indices = @transform_13, window_bounds = array<i64: 1, 512>}, {pipeline_mode = #tpu.pipeline_mode<synchronous>, transform_indices = @transform_14, window_bounds = array<i64: 256, 256>}, {pipeline_mode = #tpu.pipeline_mode<synchronous>, transform_indices = @transform_15, window_bounds = array<i64: 1, 256>}, {pipeline_mode = #tpu.pipeline_mode<synchronous>, transform_indices = @transform_16, window_bounds = array<i64: 1, 256>}, {pipeline_mode = #tpu.pipeline_mode<synchronous>, transform_indices = @transform_17, window_bounds = array<i64: 1, 256>}, {pipeline_mode = #tpu.pipeline_mode<synchronous>, transform_indices = @transform_18, window_bounds = array<i64: 256, 512>}, {pipeline_mode = #tpu.pipeline_mode<synchronous>, transform_indices = @transform_19, window_bounds = array<i64: 1, 512>}, {pipeline_mode = #tpu.pipeline_mode<synchronous>, transform_indices = @transform_20, window_bounds = array<i64: 512, 256>}, {pipeline_mode = #tpu.pipeline_mode<synchronous>, transform_indices = @transform_21, window_bounds = array<i64: 1, 256>}, {transform_indices = @transform_22, window_bounds = array<i64: 1, 16, 256>}]} {
    %c0 = arith.constant 0 : index
    %c0_0 = arith.constant 0 : index
    %c0_1 = arith.constant 0 : index
    %0 = vector.load %arg1[%c0, %c0_0, %c0_1] : memref<1x16x256xf32, #tpu.memory_space<vmem>>, vector<1x16x256xf32>
    %1 = vector.shape_cast %0 : vector<1x16x256xf32> to vector<16x256xf32>
    %cst = arith.constant dense<0.000000e+00> : vector<16xf32>
    %2 = vector.multi_reduction <add>, %1, %cst [1] : vector<16x256xf32> to vector<16xf32>
    %3 = vector.shape_cast %2 : vector<16xf32> to vector<16x1xf32>
    %cst_2 = arith.constant 2.560000e+02 : f32
    %4 = vector.broadcast %cst_2 : f32 to vector<16x1xf32>
    %5 = arith.divf %3, %4 : vector<16x1xf32>
    %6 = vector.broadcast %5 : vector<16x1xf32> to vector<16x256xf32>
    %7 = arith.subf %1, %6 : vector<16x256xf32>
    %8 = arith.mulf %7, %7 : vector<16x256xf32>
    %cst_3 = arith.constant dense<0.000000e+00> : vector<16xf32>
    %9 = vector.multi_reduction <add>, %8, %cst_3 [1] : vector<16x256xf32> to vector<16xf32>
    %10 = vector.shape_cast %9 : vector<16xf32> to vector<16x1xf32>
    %cst_4 = arith.constant 2.560000e+02 : f32
    %11 = vector.broadcast %cst_4 : f32 to vector<16x1xf32>
    %12 = arith.divf %10, %11 : vector<16x1xf32>
    %13 = vector.broadcast %5 : vector<16x1xf32> to vector<16x256xf32>
    %14 = arith.subf %1, %13 : vector<16x256xf32>
    %cst_5 = arith.constant 9.99999974E-6 : f32
    %15 = vector.broadcast %cst_5 : f32 to vector<16x1xf32>
    %16 = arith.addf %12, %15 : vector<16x1xf32>
    %17 = math.rsqrt %16 : vector<16x1xf32>
    %18 = vector.broadcast %17 : vector<16x1xf32> to vector<16x256xf32>
    %19 = arith.mulf %14, %18 : vector<16x256xf32>
    %c0_6 = arith.constant 0 : index
    %c0_7 = arith.constant 0 : index
    %20 = vector.load %arg3[%c0_6, %c0_7] : memref<1x256xf32, #tpu.memory_space<vmem>>, vector<1x256xf32>
    %21 = vector.shape_cast %20 : vector<1x256xf32> to vector<256xf32>
    %22 = vector.shape_cast %21 : vector<256xf32> to vector<1x256xf32>
    %23 = vector.broadcast %22 : vector<1x256xf32> to vector<16x256xf32>
    %24 = arith.mulf %19, %23 : vector<16x256xf32>
    %c0_8 = arith.constant 0 : index
    %c0_9 = arith.constant 0 : index
    %25 = vector.load %arg4[%c0_8, %c0_9] : memref<1x256xf32, #tpu.memory_space<vmem>>, vector<1x256xf32>
    %26 = vector.shape_cast %25 : vector<1x256xf32> to vector<256xf32>
    %27 = vector.shape_cast %26 : vector<256xf32> to vector<1x256xf32>
    %28 = vector.broadcast %27 : vector<1x256xf32> to vector<16x256xf32>
    %29 = arith.addf %24, %28 : vector<16x256xf32>
    %30 = arith.truncf %29 : vector<16x256xf32> to vector<16x256xbf16>
    %c0_10 = arith.constant 0 : index
    %c0_11 = arith.constant 0 : index
    %31 = vector.load %arg5[%c0_10, %c0_11] : memref<256x768xbf16, #tpu.memory_space<vmem>>, vector<256x768xbf16>
    %cst_12 = arith.constant dense<0.000000e+00> : vector<16x768xf32>
    %32 = tpu.matmul %30, %31, %cst_12 {dimension_numbers = #tpu.dot_dimension_numbers<[1], [0], [0], [1], [0, 0, 1, 1], [], []>} : vector<16x256xbf16>, vector<256x768xbf16>, vector<16x768xf32> -> vector<16x768xf32>
    %c0_13 = arith.constant 0 : index
    %c0_14 = arith.constant 0 : index
    %33 = vector.load %arg6[%c0_13, %c0_14] : memref<1x768xf32, #tpu.memory_space<vmem>>, vector<1x768xf32>
    %34 = vector.shape_cast %33 : vector<1x768xf32> to vector<768xf32>
    %35 = vector.shape_cast %34 : vector<768xf32> to vector<1x768xf32>
    %36 = vector.broadcast %35 : vector<1x768xf32> to vector<16x768xf32>
    %37 = arith.addf %32, %36 : vector<16x768xf32>
    %38 = vector.extract_strided_slice %37 {offsets = [0, 0], sizes = [16, 256], strides = [1, 1]} : vector<16x768xf32> to vector<16x256xf32>
    %39 = vector.extract_strided_slice %37 {offsets = [0, 256], sizes = [16, 256], strides = [1, 1]} : vector<16x768xf32> to vector<16x256xf32>
    %40 = vector.extract_strided_slice %37 {offsets = [0, 512], sizes = [16, 256], strides = [1, 1]} : vector<16x768xf32> to vector<16x256xf32>
    %cst_15 = arith.constant 0.000000e+00 : f32
    %41 = vector.broadcast %cst_15 : f32 to vector<16x256xf32>
    %42 = vector.extract_strided_slice %38 {offsets = [0, 0], sizes = [16, 128], strides = [1, 1]} : vector<16x256xf32> to vector<16x128xf32>
    %43 = arith.truncf %42 : vector<16x128xf32> to vector<16x128xbf16>
    %44 = vector.extract_strided_slice %39 {offsets = [0, 0], sizes = [16, 128], strides = [1, 1]} : vector<16x256xf32> to vector<16x128xf32>
    %45 = arith.truncf %44 : vector<16x128xf32> to vector<16x128xbf16>
    %46 = vector.extract_strided_slice %40 {offsets = [0, 0], sizes = [16, 128], strides = [1, 1]} : vector<16x256xf32> to vector<16x128xf32>
    %47 = arith.truncf %46 : vector<16x128xf32> to vector<16x128xbf16>
    %cst_16 = arith.constant dense<0.000000e+00> : vector<16x16xf32>
    %48 = tpu.matmul %43, %45, %cst_16 {dimension_numbers = #tpu.dot_dimension_numbers<[1], [1], [0], [0], [0, 0, 1, 0], [], []>} : vector<16x128xbf16>, vector<16x128xbf16>, vector<16x16xf32> -> vector<16x16xf32>
    %cst_17 = arith.constant 0.0883883461 : f32
    %49 = vector.broadcast %cst_17 : f32 to vector<16x16xf32>
    %50 = arith.mulf %48, %49 : vector<16x16xf32>
    %cst_18 = arith.constant dense<0xFF800000> : vector<16xf32>
    %51 = vector.multi_reduction <maximumf>, %50, %cst_18 [1] : vector<16x16xf32> to vector<16xf32>
    %52 = vector.shape_cast %51 : vector<16xf32> to vector<16x1xf32>
    %53 = vector.broadcast %52 : vector<16x1xf32> to vector<16x16xf32>
    %54 = arith.subf %50, %53 : vector<16x16xf32>
    %55 = math.exp %54 : vector<16x16xf32>
    %cst_19 = arith.constant dense<0.000000e+00> : vector<16xf32>
    %56 = vector.multi_reduction <add>, %55, %cst_19 [1] : vector<16x16xf32> to vector<16xf32>
    %57 = vector.shape_cast %56 : vector<16xf32> to vector<16x1xf32>
    %58 = tpu.reciprocal %57 {approx = true} : vector<16x1xf32> -> vector<16x1xf32>
    %59 = vector.broadcast %58 : vector<16x1xf32> to vector<16x16xf32>
    %60 = arith.mulf %55, %59 : vector<16x16xf32>
    %61 = arith.truncf %60 : vector<16x16xf32> to vector<16x16xbf16>
    %cst_20 = arith.constant dense<0.000000e+00> : vector<16x128xf32>
    %62 = tpu.matmul %61, %47, %cst_20 {dimension_numbers = #tpu.dot_dimension_numbers<[1], [0], [0], [1], [0, 0, 1, 1], [], []>} : vector<16x16xbf16>, vector<16x128xbf16>, vector<16x128xf32> -> vector<16x128xf32>
    %63 = arith.truncf %62 : vector<16x128xf32> to vector<16x128xbf16>
    %c0_21 = arith.constant 0 : index
    %c0_22 = arith.constant 0 : index
    %64 = vector.load %arg7[%c0_21, %c0_22] : memref<256x256xbf16, #tpu.memory_space<vmem>>, vector<128x256xbf16>
    %cst_23 = arith.constant dense<0.000000e+00> : vector<16x256xf32>
    %65 = tpu.matmul %63, %64, %cst_23 {dimension_numbers = #tpu.dot_dimension_numbers<[1], [0], [0], [1], [0, 0, 1, 1], [], []>} : vector<16x128xbf16>, vector<128x256xbf16>, vector<16x256xf32> -> vector<16x256xf32>
    %66 = arith.addf %41, %65 : vector<16x256xf32>
    %67 = vector.extract_strided_slice %38 {offsets = [0, 128], sizes = [16, 128], strides = [1, 1]} : vector<16x256xf32> to vector<16x128xf32>
    %68 = arith.truncf %67 : vector<16x128xf32> to vector<16x128xbf16>
    %69 = vector.extract_strided_slice %39 {offsets = [0, 128], sizes = [16, 128], strides = [1, 1]} : vector<16x256xf32> to vector<16x128xf32>
    %70 = arith.truncf %69 : vector<16x128xf32> to vector<16x128xbf16>
    %71 = vector.extract_strided_slice %40 {offsets = [0, 128], sizes = [16, 128], strides = [1, 1]} : vector<16x256xf32> to vector<16x128xf32>
    %72 = arith.truncf %71 : vector<16x128xf32> to vector<16x128xbf16>
    %cst_24 = arith.constant dense<0.000000e+00> : vector<16x16xf32>
    %73 = tpu.matmul %68, %70, %cst_24 {dimension_numbers = #tpu.dot_dimension_numbers<[1], [1], [0], [0], [0, 0, 1, 0], [], []>} : vector<16x128xbf16>, vector<16x128xbf16>, vector<16x16xf32> -> vector<16x16xf32>
    %cst_25 = arith.constant 0.0883883461 : f32
    %74 = vector.broadcast %cst_25 : f32 to vector<16x16xf32>
    %75 = arith.mulf %73, %74 : vector<16x16xf32>
    %cst_26 = arith.constant dense<0xFF800000> : vector<16xf32>
    %76 = vector.multi_reduction <maximumf>, %75, %cst_26 [1] : vector<16x16xf32> to vector<16xf32>
    %77 = vector.shape_cast %76 : vector<16xf32> to vector<16x1xf32>
    %78 = vector.broadcast %77 : vector<16x1xf32> to vector<16x16xf32>
    %79 = arith.subf %75, %78 : vector<16x16xf32>
    %80 = math.exp %79 : vector<16x16xf32>
    %cst_27 = arith.constant dense<0.000000e+00> : vector<16xf32>
    %81 = vector.multi_reduction <add>, %80, %cst_27 [1] : vector<16x16xf32> to vector<16xf32>
    %82 = vector.shape_cast %81 : vector<16xf32> to vector<16x1xf32>
    %83 = tpu.reciprocal %82 {approx = true} : vector<16x1xf32> -> vector<16x1xf32>
    %84 = vector.broadcast %83 : vector<16x1xf32> to vector<16x16xf32>
    %85 = arith.mulf %80, %84 : vector<16x16xf32>
    %86 = arith.truncf %85 : vector<16x16xf32> to vector<16x16xbf16>
    %cst_28 = arith.constant dense<0.000000e+00> : vector<16x128xf32>
    %87 = tpu.matmul %86, %72, %cst_28 {dimension_numbers = #tpu.dot_dimension_numbers<[1], [0], [0], [1], [0, 0, 1, 1], [], []>} : vector<16x16xbf16>, vector<16x128xbf16>, vector<16x128xf32> -> vector<16x128xf32>
    %88 = arith.truncf %87 : vector<16x128xf32> to vector<16x128xbf16>
    %c128 = arith.constant 128 : index
    %c0_29 = arith.constant 0 : index
    %89 = vector.load %arg7[%c128, %c0_29] : memref<256x256xbf16, #tpu.memory_space<vmem>>, vector<128x256xbf16>
    %cst_30 = arith.constant dense<0.000000e+00> : vector<16x256xf32>
    %90 = tpu.matmul %88, %89, %cst_30 {dimension_numbers = #tpu.dot_dimension_numbers<[1], [0], [0], [1], [0, 0, 1, 1], [], []>} : vector<16x128xbf16>, vector<128x256xbf16>, vector<16x256xf32> -> vector<16x256xf32>
    %91 = arith.addf %66, %90 : vector<16x256xf32>
    %92 = arith.addf %1, %91 : vector<16x256xf32>
    %c0_31 = arith.constant 0 : index
    %c0_32 = arith.constant 0 : index
    %93 = vector.load %arg8[%c0_31, %c0_32] : memref<1x256xf32, #tpu.memory_space<vmem>>, vector<1x256xf32>
    %94 = vector.shape_cast %93 : vector<1x256xf32> to vector<256xf32>
    %95 = vector.shape_cast %94 : vector<256xf32> to vector<1x256xf32>
    %96 = vector.broadcast %95 : vector<1x256xf32> to vector<16x256xf32>
    %97 = arith.addf %92, %96 : vector<16x256xf32>
    %c0_33 = arith.constant 0 : index
    %c0_34 = arith.constant 0 : index
    %c0_35 = arith.constant 0 : index
    %98 = vector.load %arg2[%c0_33, %c0_34, %c0_35] : memref<1x24x256xf32, #tpu.memory_space<vmem>>, vector<1x24x256xf32>
    %99 = vector.shape_cast %98 : vector<1x24x256xf32> to vector<24x256xf32>
    %cst_36 = arith.constant dense<0.000000e+00> : vector<16xf32>
    %100 = vector.multi_reduction <add>, %97, %cst_36 [1] : vector<16x256xf32> to vector<16xf32>
    %101 = vector.shape_cast %100 : vector<16xf32> to vector<16x1xf32>
    %cst_37 = arith.constant 2.560000e+02 : f32
    %102 = vector.broadcast %cst_37 : f32 to vector<16x1xf32>
    %103 = arith.divf %101, %102 : vector<16x1xf32>
    %104 = vector.broadcast %103 : vector<16x1xf32> to vector<16x256xf32>
    %105 = arith.subf %97, %104 : vector<16x256xf32>
    %106 = arith.mulf %105, %105 : vector<16x256xf32>
    %cst_38 = arith.constant dense<0.000000e+00> : vector<16xf32>
    %107 = vector.multi_reduction <add>, %106, %cst_38 [1] : vector<16x256xf32> to vector<16xf32>
    %108 = vector.shape_cast %107 : vector<16xf32> to vector<16x1xf32>
    %cst_39 = arith.constant 2.560000e+02 : f32
    %109 = vector.broadcast %cst_39 : f32 to vector<16x1xf32>
    %110 = arith.divf %108, %109 : vector<16x1xf32>
    %111 = vector.broadcast %103 : vector<16x1xf32> to vector<16x256xf32>
    %112 = arith.subf %97, %111 : vector<16x256xf32>
    %cst_40 = arith.constant 9.99999974E-6 : f32
    %113 = vector.broadcast %cst_40 : f32 to vector<16x1xf32>
    %114 = arith.addf %110, %113 : vector<16x1xf32>
    %115 = math.rsqrt %114 : vector<16x1xf32>
    %116 = vector.broadcast %115 : vector<16x1xf32> to vector<16x256xf32>
    %117 = arith.mulf %112, %116 : vector<16x256xf32>
    %c0_41 = arith.constant 0 : index
    %c0_42 = arith.constant 0 : index
    %118 = vector.load %arg9[%c0_41, %c0_42] : memref<1x256xf32, #tpu.memory_space<vmem>>, vector<1x256xf32>
    %119 = vector.shape_cast %118 : vector<1x256xf32> to vector<256xf32>
    %120 = vector.shape_cast %119 : vector<256xf32> to vector<1x256xf32>
    %121 = vector.broadcast %120 : vector<1x256xf32> to vector<16x256xf32>
    %122 = arith.mulf %117, %121 : vector<16x256xf32>
    %c0_43 = arith.constant 0 : index
    %c0_44 = arith.constant 0 : index
    %123 = vector.load %arg10[%c0_43, %c0_44] : memref<1x256xf32, #tpu.memory_space<vmem>>, vector<1x256xf32>
    %124 = vector.shape_cast %123 : vector<1x256xf32> to vector<256xf32>
    %125 = vector.shape_cast %124 : vector<256xf32> to vector<1x256xf32>
    %126 = vector.broadcast %125 : vector<1x256xf32> to vector<16x256xf32>
    %127 = arith.addf %122, %126 : vector<16x256xf32>
    %128 = arith.truncf %127 : vector<16x256xf32> to vector<16x256xbf16>
    %c0_45 = arith.constant 0 : index
    %c0_46 = arith.constant 0 : index
    %129 = vector.load %arg11[%c0_45, %c0_46] : memref<256x256xbf16, #tpu.memory_space<vmem>>, vector<256x256xbf16>
    %cst_47 = arith.constant dense<0.000000e+00> : vector<16x256xf32>
    %130 = tpu.matmul %128, %129, %cst_47 {dimension_numbers = #tpu.dot_dimension_numbers<[1], [0], [0], [1], [0, 0, 1, 1], [], []>} : vector<16x256xbf16>, vector<256x256xbf16>, vector<16x256xf32> -> vector<16x256xf32>
    %c0_48 = arith.constant 0 : index
    %c0_49 = arith.constant 0 : index
    %131 = vector.load %arg12[%c0_48, %c0_49] : memref<1x256xf32, #tpu.memory_space<vmem>>, vector<1x256xf32>
    %132 = vector.shape_cast %131 : vector<1x256xf32> to vector<256xf32>
    %133 = vector.shape_cast %132 : vector<256xf32> to vector<1x256xf32>
    %134 = vector.broadcast %133 : vector<1x256xf32> to vector<16x256xf32>
    %135 = arith.addf %130, %134 : vector<16x256xf32>
    %136 = arith.truncf %99 : vector<24x256xf32> to vector<24x256xbf16>
    %c0_50 = arith.constant 0 : index
    %c0_51 = arith.constant 0 : index
    %137 = vector.load %arg13[%c0_50, %c0_51] : memref<256x512xbf16, #tpu.memory_space<vmem>>, vector<256x512xbf16>
    %cst_52 = arith.constant dense<0.000000e+00> : vector<24x512xf32>
    %138 = tpu.matmul %136, %137, %cst_52 {dimension_numbers = #tpu.dot_dimension_numbers<[1], [0], [0], [1], [0, 0, 1, 1], [], []>} : vector<24x256xbf16>, vector<256x512xbf16>, vector<24x512xf32> -> vector<24x512xf32>
    %c0_53 = arith.constant 0 : index
    %c0_54 = arith.constant 0 : index
    %139 = vector.load %arg14[%c0_53, %c0_54] : memref<1x512xf32, #tpu.memory_space<vmem>>, vector<1x512xf32>
    %140 = vector.shape_cast %139 : vector<1x512xf32> to vector<512xf32>
    %141 = vector.shape_cast %140 : vector<512xf32> to vector<1x512xf32>
    %142 = vector.broadcast %141 : vector<1x512xf32> to vector<24x512xf32>
    %143 = arith.addf %138, %142 : vector<24x512xf32>
    %144 = vector.extract_strided_slice %143 {offsets = [0, 0], sizes = [24, 256], strides = [1, 1]} : vector<24x512xf32> to vector<24x256xf32>
    %145 = vector.extract_strided_slice %143 {offsets = [0, 256], sizes = [24, 256], strides = [1, 1]} : vector<24x512xf32> to vector<24x256xf32>
    %cst_55 = arith.constant 0.000000e+00 : f32
    %146 = vector.broadcast %cst_55 : f32 to vector<16x256xf32>
    %147 = vector.extract_strided_slice %135 {offsets = [0, 0], sizes = [16, 128], strides = [1, 1]} : vector<16x256xf32> to vector<16x128xf32>
    %148 = arith.truncf %147 : vector<16x128xf32> to vector<16x128xbf16>
    %149 = vector.extract_strided_slice %144 {offsets = [0, 0], sizes = [24, 128], strides = [1, 1]} : vector<24x256xf32> to vector<24x128xf32>
    %150 = arith.truncf %149 : vector<24x128xf32> to vector<24x128xbf16>
    %151 = vector.extract_strided_slice %145 {offsets = [0, 0], sizes = [24, 128], strides = [1, 1]} : vector<24x256xf32> to vector<24x128xf32>
    %152 = arith.truncf %151 : vector<24x128xf32> to vector<24x128xbf16>
    %cst_56 = arith.constant dense<0.000000e+00> : vector<16x24xf32>
    %153 = tpu.matmul %148, %150, %cst_56 {dimension_numbers = #tpu.dot_dimension_numbers<[1], [1], [0], [0], [0, 0, 1, 0], [], []>} : vector<16x128xbf16>, vector<24x128xbf16>, vector<16x24xf32> -> vector<16x24xf32>
    %cst_57 = arith.constant 0.0883883461 : f32
    %154 = vector.broadcast %cst_57 : f32 to vector<16x24xf32>
    %155 = arith.mulf %153, %154 : vector<16x24xf32>
    %cst_58 = arith.constant dense<0xFF800000> : vector<16xf32>
    %156 = vector.multi_reduction <maximumf>, %155, %cst_58 [1] : vector<16x24xf32> to vector<16xf32>
    %157 = vector.shape_cast %156 : vector<16xf32> to vector<16x1xf32>
    %158 = vector.broadcast %157 : vector<16x1xf32> to vector<16x24xf32>
    %159 = arith.subf %155, %158 : vector<16x24xf32>
    %160 = math.exp %159 : vector<16x24xf32>
    %cst_59 = arith.constant dense<0.000000e+00> : vector<16xf32>
    %161 = vector.multi_reduction <add>, %160, %cst_59 [1] : vector<16x24xf32> to vector<16xf32>
    %162 = vector.shape_cast %161 : vector<16xf32> to vector<16x1xf32>
    %163 = tpu.reciprocal %162 {approx = true} : vector<16x1xf32> -> vector<16x1xf32>
    %164 = vector.broadcast %163 : vector<16x1xf32> to vector<16x24xf32>
    %165 = arith.mulf %160, %164 : vector<16x24xf32>
    %166 = arith.truncf %165 : vector<16x24xf32> to vector<16x24xbf16>
    %cst_60 = arith.constant dense<0.000000e+00> : vector<16x128xf32>
    %167 = tpu.matmul %166, %152, %cst_60 {dimension_numbers = #tpu.dot_dimension_numbers<[1], [0], [0], [1], [0, 0, 1, 1], [], []>} : vector<16x24xbf16>, vector<24x128xbf16>, vector<16x128xf32> -> vector<16x128xf32>
    %168 = arith.truncf %167 : vector<16x128xf32> to vector<16x128xbf16>
    %c0_61 = arith.constant 0 : index
    %c0_62 = arith.constant 0 : index
    %169 = vector.load %arg15[%c0_61, %c0_62] : memref<256x256xbf16, #tpu.memory_space<vmem>>, vector<128x256xbf16>
    %cst_63 = arith.constant dense<0.000000e+00> : vector<16x256xf32>
    %170 = tpu.matmul %168, %169, %cst_63 {dimension_numbers = #tpu.dot_dimension_numbers<[1], [0], [0], [1], [0, 0, 1, 1], [], []>} : vector<16x128xbf16>, vector<128x256xbf16>, vector<16x256xf32> -> vector<16x256xf32>
    %171 = arith.addf %146, %170 : vector<16x256xf32>
    %172 = vector.extract_strided_slice %135 {offsets = [0, 128], sizes = [16, 128], strides = [1, 1]} : vector<16x256xf32> to vector<16x128xf32>
    %173 = arith.truncf %172 : vector<16x128xf32> to vector<16x128xbf16>
    %174 = vector.extract_strided_slice %144 {offsets = [0, 128], sizes = [24, 128], strides = [1, 1]} : vector<24x256xf32> to vector<24x128xf32>
    %175 = arith.truncf %174 : vector<24x128xf32> to vector<24x128xbf16>
    %176 = vector.extract_strided_slice %145 {offsets = [0, 128], sizes = [24, 128], strides = [1, 1]} : vector<24x256xf32> to vector<24x128xf32>
    %177 = arith.truncf %176 : vector<24x128xf32> to vector<24x128xbf16>
    %cst_64 = arith.constant dense<0.000000e+00> : vector<16x24xf32>
    %178 = tpu.matmul %173, %175, %cst_64 {dimension_numbers = #tpu.dot_dimension_numbers<[1], [1], [0], [0], [0, 0, 1, 0], [], []>} : vector<16x128xbf16>, vector<24x128xbf16>, vector<16x24xf32> -> vector<16x24xf32>
    %cst_65 = arith.constant 0.0883883461 : f32
    %179 = vector.broadcast %cst_65 : f32 to vector<16x24xf32>
    %180 = arith.mulf %178, %179 : vector<16x24xf32>
    %cst_66 = arith.constant dense<0xFF800000> : vector<16xf32>
    %181 = vector.multi_reduction <maximumf>, %180, %cst_66 [1] : vector<16x24xf32> to vector<16xf32>
    %182 = vector.shape_cast %181 : vector<16xf32> to vector<16x1xf32>
    %183 = vector.broadcast %182 : vector<16x1xf32> to vector<16x24xf32>
    %184 = arith.subf %180, %183 : vector<16x24xf32>
    %185 = math.exp %184 : vector<16x24xf32>
    %cst_67 = arith.constant dense<0.000000e+00> : vector<16xf32>
    %186 = vector.multi_reduction <add>, %185, %cst_67 [1] : vector<16x24xf32> to vector<16xf32>
    %187 = vector.shape_cast %186 : vector<16xf32> to vector<16x1xf32>
    %188 = tpu.reciprocal %187 {approx = true} : vector<16x1xf32> -> vector<16x1xf32>
    %189 = vector.broadcast %188 : vector<16x1xf32> to vector<16x24xf32>
    %190 = arith.mulf %185, %189 : vector<16x24xf32>
    %191 = arith.truncf %190 : vector<16x24xf32> to vector<16x24xbf16>
    %cst_68 = arith.constant dense<0.000000e+00> : vector<16x128xf32>
    %192 = tpu.matmul %191, %177, %cst_68 {dimension_numbers = #tpu.dot_dimension_numbers<[1], [0], [0], [1], [0, 0, 1, 1], [], []>} : vector<16x24xbf16>, vector<24x128xbf16>, vector<16x128xf32> -> vector<16x128xf32>
    %193 = arith.truncf %192 : vector<16x128xf32> to vector<16x128xbf16>
    %c128_69 = arith.constant 128 : index
    %c0_70 = arith.constant 0 : index
    %194 = vector.load %arg15[%c128_69, %c0_70] : memref<256x256xbf16, #tpu.memory_space<vmem>>, vector<128x256xbf16>
    %cst_71 = arith.constant dense<0.000000e+00> : vector<16x256xf32>
    %195 = tpu.matmul %193, %194, %cst_71 {dimension_numbers = #tpu.dot_dimension_numbers<[1], [0], [0], [1], [0, 0, 1, 1], [], []>} : vector<16x128xbf16>, vector<128x256xbf16>, vector<16x256xf32> -> vector<16x256xf32>
    %196 = arith.addf %171, %195 : vector<16x256xf32>
    %197 = arith.addf %97, %196 : vector<16x256xf32>
    %c0_72 = arith.constant 0 : index
    %c0_73 = arith.constant 0 : index
    %198 = vector.load %arg16[%c0_72, %c0_73] : memref<1x256xf32, #tpu.memory_space<vmem>>, vector<1x256xf32>
    %199 = vector.shape_cast %198 : vector<1x256xf32> to vector<256xf32>
    %200 = vector.shape_cast %199 : vector<256xf32> to vector<1x256xf32>
    %201 = vector.broadcast %200 : vector<1x256xf32> to vector<16x256xf32>
    %202 = arith.addf %197, %201 : vector<16x256xf32>
    %cst_74 = arith.constant dense<0.000000e+00> : vector<16xf32>
    %203 = vector.multi_reduction <add>, %202, %cst_74 [1] : vector<16x256xf32> to vector<16xf32>
    %204 = vector.shape_cast %203 : vector<16xf32> to vector<16x1xf32>
    %cst_75 = arith.constant 2.560000e+02 : f32
    %205 = vector.broadcast %cst_75 : f32 to vector<16x1xf32>
    %206 = arith.divf %204, %205 : vector<16x1xf32>
    %207 = vector.broadcast %206 : vector<16x1xf32> to vector<16x256xf32>
    %208 = arith.subf %202, %207 : vector<16x256xf32>
    %209 = arith.mulf %208, %208 : vector<16x256xf32>
    %cst_76 = arith.constant dense<0.000000e+00> : vector<16xf32>
    %210 = vector.multi_reduction <add>, %209, %cst_76 [1] : vector<16x256xf32> to vector<16xf32>
    %211 = vector.shape_cast %210 : vector<16xf32> to vector<16x1xf32>
    %cst_77 = arith.constant 2.560000e+02 : f32
    %212 = vector.broadcast %cst_77 : f32 to vector<16x1xf32>
    %213 = arith.divf %211, %212 : vector<16x1xf32>
    %214 = vector.broadcast %206 : vector<16x1xf32> to vector<16x256xf32>
    %215 = arith.subf %202, %214 : vector<16x256xf32>
    %cst_78 = arith.constant 9.99999974E-6 : f32
    %216 = vector.broadcast %cst_78 : f32 to vector<16x1xf32>
    %217 = arith.addf %213, %216 : vector<16x1xf32>
    %218 = math.rsqrt %217 : vector<16x1xf32>
    %219 = vector.broadcast %218 : vector<16x1xf32> to vector<16x256xf32>
    %220 = arith.mulf %215, %219 : vector<16x256xf32>
    %c0_79 = arith.constant 0 : index
    %c0_80 = arith.constant 0 : index
    %221 = vector.load %arg17[%c0_79, %c0_80] : memref<1x256xf32, #tpu.memory_space<vmem>>, vector<1x256xf32>
    %222 = vector.shape_cast %221 : vector<1x256xf32> to vector<256xf32>
    %223 = vector.shape_cast %222 : vector<256xf32> to vector<1x256xf32>
    %224 = vector.broadcast %223 : vector<1x256xf32> to vector<16x256xf32>
    %225 = arith.mulf %220, %224 : vector<16x256xf32>
    %c0_81 = arith.constant 0 : index
    %c0_82 = arith.constant 0 : index
    %226 = vector.load %arg18[%c0_81, %c0_82] : memref<1x256xf32, #tpu.memory_space<vmem>>, vector<1x256xf32>
    %227 = vector.shape_cast %226 : vector<1x256xf32> to vector<256xf32>
    %228 = vector.shape_cast %227 : vector<256xf32> to vector<1x256xf32>
    %229 = vector.broadcast %228 : vector<1x256xf32> to vector<16x256xf32>
    %230 = arith.addf %225, %229 : vector<16x256xf32>
    %231 = arith.truncf %230 : vector<16x256xf32> to vector<16x256xbf16>
    %c0_83 = arith.constant 0 : index
    %c0_84 = arith.constant 0 : index
    %232 = vector.load %arg19[%c0_83, %c0_84] : memref<256x512xbf16, #tpu.memory_space<vmem>>, vector<256x512xbf16>
    %cst_85 = arith.constant dense<0.000000e+00> : vector<16x512xf32>
    %233 = tpu.matmul %231, %232, %cst_85 {dimension_numbers = #tpu.dot_dimension_numbers<[1], [0], [0], [1], [0, 0, 1, 1], [], []>} : vector<16x256xbf16>, vector<256x512xbf16>, vector<16x512xf32> -> vector<16x512xf32>
    %c0_86 = arith.constant 0 : index
    %c0_87 = arith.constant 0 : index
    %234 = vector.load %arg20[%c0_86, %c0_87] : memref<1x512xf32, #tpu.memory_space<vmem>>, vector<1x512xf32>
    %235 = vector.shape_cast %234 : vector<1x512xf32> to vector<512xf32>
    %236 = vector.shape_cast %235 : vector<512xf32> to vector<1x512xf32>
    %237 = vector.broadcast %236 : vector<1x512xf32> to vector<16x512xf32>
    %238 = arith.addf %233, %237 : vector<16x512xf32>
    %cst_88 = arith.constant 5.000000e-01 : f32
    %239 = vector.broadcast %cst_88 : f32 to vector<16x512xf32>
    %240 = arith.mulf %239, %238 : vector<16x512xf32>
    %cst_89 = arith.constant 4.471500e-02 : f32
    %241 = vector.broadcast %cst_89 : f32 to vector<16x512xf32>
    %242 = arith.mulf %241, %238 : vector<16x512xf32>
    %243 = arith.mulf %242, %238 : vector<16x512xf32>
    %244 = arith.mulf %243, %238 : vector<16x512xf32>
    %245 = arith.addf %238, %244 : vector<16x512xf32>
    %cst_90 = arith.constant 0.797884583 : f32
    %246 = vector.broadcast %cst_90 : f32 to vector<16x512xf32>
    %247 = arith.mulf %246, %245 : vector<16x512xf32>
    %248 = math.tanh %247 : vector<16x512xf32>
    %cst_91 = arith.constant 1.000000e+00 : f32
    %249 = vector.broadcast %cst_91 : f32 to vector<16x512xf32>
    %250 = arith.addf %249, %248 : vector<16x512xf32>
    %251 = arith.mulf %240, %250 : vector<16x512xf32>
    %252 = arith.truncf %251 : vector<16x512xf32> to vector<16x512xbf16>
    %c0_92 = arith.constant 0 : index
    %c0_93 = arith.constant 0 : index
    %253 = vector.load %arg21[%c0_92, %c0_93] : memref<512x256xbf16, #tpu.memory_space<vmem>>, vector<512x256xbf16>
    %cst_94 = arith.constant dense<0.000000e+00> : vector<16x256xf32>
    %254 = tpu.matmul %252, %253, %cst_94 {dimension_numbers = #tpu.dot_dimension_numbers<[1], [0], [0], [1], [0, 0, 1, 1], [], []>} : vector<16x512xbf16>, vector<512x256xbf16>, vector<16x256xf32> -> vector<16x256xf32>
    %c0_95 = arith.constant 0 : index
    %c0_96 = arith.constant 0 : index
    %255 = vector.load %arg22[%c0_95, %c0_96] : memref<1x256xf32, #tpu.memory_space<vmem>>, vector<1x256xf32>
    %256 = vector.shape_cast %255 : vector<1x256xf32> to vector<256xf32>
    %257 = vector.shape_cast %256 : vector<256xf32> to vector<1x256xf32>
    %258 = vector.broadcast %257 : vector<1x256xf32> to vector<16x256xf32>
    %259 = arith.addf %254, %258 : vector<16x256xf32>
    %260 = arith.addf %202, %259 : vector<16x256xf32>
    %c0_97 = arith.constant 0 : index
    %c0_98 = arith.constant 0 : index
    %c0_99 = arith.constant 0 : index
    %261 = vector.load %arg23[%c0_97, %c0_98, %c0_99] : memref<1x16x256xf32, #tpu.memory_space<vmem>>, vector<1x16x256xf32>
    %262 = vector.shape_cast %261 : vector<1x16x256xf32> to vector<16x256xf32>
    %263 = vector.shape_cast %260 : vector<16x256xf32> to vector<1x16x256xf32>
    tpu.vector_store %arg23[%c0_97, %c0_98, %c0_99], %263 {strides = array<i32>} : memref<1x16x256xf32, #tpu.memory_space<vmem>>, vector<1x16x256xf32>,
    return
  }
  func.func @transform_0(%arg0: i32) -> (i32, i32, i32) {
    %c0_i32 = arith.constant 0 : i32
    %c0_i32_0 = arith.constant 0 : i32
    %c0_i32_1 = arith.constant 0 : i32
    return %arg0, %c0_i32, %c0_i32_0 : i32, i32, i32
  }
  func.func @transform_1(%arg0: i32) -> (i32, i32, i32) {
    %c0_i32 = arith.constant 0 : i32
    %c0_i32_0 = arith.constant 0 : i32
    %c0_i32_1 = arith.constant 0 : i32
    return %arg0, %c0_i32, %c0_i32_0 : i32, i32, i32
  }
  func.func @transform_2(%arg0: i32) -> (i32, i32) {
    %c0_i32 = arith.constant 0 : i32
    %c0_i32_0 = arith.constant 0 : i32
    %c0_i32_1 = arith.constant 0 : i32
    return %c0_i32, %c0_i32_0 : i32, i32
  }
  func.func @transform_3(%arg0: i32) -> (i32, i32) {
    %c0_i32 = arith.constant 0 : i32
    %c0_i32_0 = arith.constant 0 : i32
    %c0_i32_1 = arith.constant 0 : i32
    return %c0_i32, %c0_i32_0 : i32, i32
  }
  func.func @transform_4(%arg0: i32) -> (i32, i32) {
    %c0_i32 = arith.constant 0 : i32
    %c0_i32_0 = arith.constant 0 : i32
    %c0_i32_1 = arith.constant 0 : i32
    return %c0_i32, %c0_i32_0 : i32, i32
  }
  func.func @transform_5(%arg0: i32) -> (i32, i32) {
    %c0_i32 = arith.constant 0 : i32
    %c0_i32_0 = arith.constant 0 : i32
    %c0_i32_1 = arith.constant 0 : i32
    return %c0_i32, %c0_i32_0 : i32, i32
  }
  func.func @transform_6(%arg0: i32) -> (i32, i32) {
    %c0_i32 = arith.constant 0 : i32
    %c0_i32_0 = arith.constant 0 : i32
    %c0_i32_1 = arith.constant 0 : i32
    return %c0_i32, %c0_i32_0 : i32, i32
  }
  func.func @transform_7(%arg0: i32) -> (i32, i32) {
    %c0_i32 = arith.constant 0 : i32
    %c0_i32_0 = arith.constant 0 : i32
    %c0_i32_1 = arith.constant 0 : i32
    return %c0_i32, %c0_i32_0 : i32, i32
  }
  func.func @transform_8(%arg0: i32) -> (i32, i32) {
    %c0_i32 = arith.constant 0 : i32
    %c0_i32_0 = arith.constant 0 : i32
    %c0_i32_1 = arith.constant 0 : i32
    return %c0_i32, %c0_i32_0 : i32, i32
  }
  func.func @transform_9(%arg0: i32) -> (i32, i32) {
    %c0_i32 = arith.constant 0 : i32
    %c0_i32_0 = arith.constant 0 : i32
    %c0_i32_1 = arith.constant 0 : i32
    return %c0_i32, %c0_i32_0 : i32, i32
  }
  func.func @transform_10(%arg0: i32) -> (i32, i32) {
    %c0_i32 = arith.constant 0 : i32
    %c0_i32_0 = arith.constant 0 : i32
    %c0_i32_1 = arith.constant 0 : i32
    return %c0_i32, %c0_i32_0 : i32, i32
  }
  func.func @transform_11(%arg0: i32) -> (i32, i32) {
    %c0_i32 = arith.constant 0 : i32
    %c0_i32_0 = arith.constant 0 : i32
    %c0_i32_1 = arith.constant 0 : i32
    return %c0_i32, %c0_i32_0 : i32, i32
  }
  func.func @transform_12(%arg0: i32) -> (i32, i32) {
    %c0_i32 = arith.constant 0 : i32
    %c0_i32_0 = arith.constant 0 : i32
    %c0_i32_1 = arith.constant 0 : i32
    return %c0_i32, %c0_i32_0 : i32, i32
  }
  func.func @transform_13(%arg0: i32) -> (i32, i32) {
    %c0_i32 = arith.constant 0 : i32
    %c0_i32_0 = arith.constant 0 : i32
    %c0_i32_1 = arith.constant 0 : i32
    return %c0_i32, %c0_i32_0 : i32, i32
  }
  func.func @transform_14(%arg0: i32) -> (i32, i32) {
    %c0_i32 = arith.constant 0 : i32
    %c0_i32_0 = arith.constant 0 : i32
    %c0_i32_1 = arith.constant 0 : i32
    return %c0_i32, %c0_i32_0 : i32, i32
  }
  func.func @transform_15(%arg0: i32) -> (i32, i32) {
    %c0_i32 = arith.constant 0 : i32
    %c0_i32_0 = arith.constant 0 : i32
    %c0_i32_1 = arith.constant 0 : i32
    return %c0_i32, %c0_i32_0 : i32, i32
  }
  func.func @transform_16(%arg0: i32) -> (i32, i32) {
    %c0_i32 = arith.constant 0 : i32
    %c0_i32_0 = arith.constant 0 : i32
    %c0_i32_1 = arith.constant 0 : i32
    return %c0_i32, %c0_i32_0 : i32, i32
  }
  func.func @transform_17(%arg0: i32) -> (i32, i32) {
    %c0_i32 = arith.constant 0 : i32
    %c0_i32_0 = arith.constant 0 : i32
    %c0_i32_1 = arith.constant 0 : i32
    return %c0_i32, %c0_i32_0 : i32, i32
  }
  func.func @transform_18(%arg0: i32) -> (i32, i32) {
    %c0_i32 = arith.constant 0 : i32
    %c0_i32_0 = arith.constant 0 : i32
    %c0_i32_1 = arith.constant 0 : i32
    return %c0_i32, %c0_i32_0 : i32, i32
  }
  func.func @transform_19(%arg0: i32) -> (i32, i32) {
    %c0_i32 = arith.constant 0 : i32
    %c0_i32_0 = arith.constant 0 : i32
    %c0_i32_1 = arith.constant 0 : i32
    return %c0_i32, %c0_i32_0 : i32, i32
  }
  func.func @transform_20(%arg0: i32) -> (i32, i32) {
    %c0_i32 = arith.constant 0 : i32
    %c0_i32_0 = arith.constant 0 : i32
    %c0_i32_1 = arith.constant 0 : i32
    return %c0_i32, %c0_i32_0 : i32, i32
  }
  func.func @transform_21(%arg0: i32) -> (i32, i32) {
    %c0_i32 = arith.constant 0 : i32
    %c0_i32_0 = arith.constant 0 : i32
    %c0_i32_1 = arith.constant 0 : i32
    return %c0_i32, %c0_i32_0 : i32, i32
  }
  func.func @transform_22(%arg0: i32) -> (i32, i32, i32) {
    %c0_i32 = arith.constant 0 : i32
    %c0_i32_0 = arith.constant 0 : i32
    %c0_i32_1 = arith.constant 0 : i32
    return %arg0, %c0_i32, %c0_i32_0 : i32, i32, i32
  }
}

</mosaic_0001>

<llo_original>
// kernel: tpu_custom_call.1
$region0: #{tpu_custom_call.1}
  #allocation0 [shape = 'u32[]', space=smem, size = 0x4, offset = 0x4, fixed_abs, tag = 'smem constant byte address 0x4 - core index']
  #allocation1 [shape = 'u32[144,128]{1,0:T(1,128)}', space=vmem, size = 0x12000, scoped, tag = 'internal scratch']
  %s0 = inlined_call_operand.hbm [shape: f32[2,16,256], index: 0, kind: input, shape index: {}]
  %s1 = inlined_call_operand.hbm [shape: f32[2,24,256], index: 1, kind: input, shape index: {}]
  %s2 = inlined_call_operand.hbm [shape: f32[1,256], index: 2, kind: input, shape index: {}]
  %s3 = inlined_call_operand.hbm [shape: f32[1,256], index: 3, kind: input, shape index: {}]
  %s4 = inlined_call_operand.hbm [shape: bf16[256,768], index: 4, kind: input, shape index: {}]
  %s5 = inlined_call_operand.vmem [shape: f32[1,768], index: 5, kind: input, shape index: {}]
  %s6 = inlined_call_operand.hbm [shape: bf16[256,256], index: 6, kind: input, shape index: {}]
  %s7 = inlined_call_operand.vmem [shape: f32[1,256], index: 7, kind: input, shape index: {}]
  %s8 = inlined_call_operand.vmem [shape: f32[1,256], index: 8, kind: input, shape index: {}]
  %s9 = inlined_call_operand.vmem [shape: f32[1,256], index: 9, kind: input, shape index: {}]
  %s10 = inlined_call_operand.hbm [shape: bf16[256,256], index: 10, kind: input, shape index: {}]
  %s11 = inlined_call_operand.vmem [shape: f32[1,256], index: 11, kind: input, shape index: {}]
  %s12 = inlined_call_operand.hbm [shape: bf16[256,512], index: 12, kind: input, shape index: {}]
  %s13 = inlined_call_operand.vmem [shape: f32[1,512], index: 13, kind: input, shape index: {}]
  %s14 = inlined_call_operand.hbm [shape: bf16[256,256], index: 14, kind: input, shape index: {}]
  %s15 = inlined_call_operand.vmem [shape: f32[1,256], index: 15, kind: input, shape index: {}]
  %s16 = inlined_call_operand.vmem [shape: f32[1,256], index: 16, kind: input, shape index: {}]
  %s17 = inlined_call_operand.vmem [shape: f32[1,256], index: 17, kind: input, shape index: {}]
  %s18 = inlined_call_operand.hbm [shape: bf16[256,512], index: 18, kind: input, shape index: {}]
  %s19 = inlined_call_operand.vmem [shape: f32[1,512], index: 19, kind: input, shape index: {}]
  %s20 = inlined_call_operand.hbm [shape: bf16[512,256], index: 20, kind: input, shape index: {}]
  %s21 = inlined_call_operand.vmem [shape: f32[1,256], index: 21, kind: input, shape index: {}]
  %s22 = inlined_call_operand.hbm [shape: f32[2,16,256], index: 22, kind: output, shape index: {}]
  %s23 = sld [smem:[#allocation0]]
  $region165: #{tpu_custom_call.1} parent=0
    _
  %s25 = ssub.s32 1, %s23
  %s26 = scalar_select 0, %s25, %s23
  $region1: #{tpu_custom_call.1} parent=0
    #allocation2 [shape = 'u8[32768]{0}', space=vmem, size = 0x8000, scoped, tag = 'input window, operand 0']
    #allocation3 [shape = 's32[2]{0}', space=sflag, size = 0x8, scoped, tag = 'scoped memory for tpu_custom_call.1']
    #allocation4 [shape = 's32[2]{0}', space=sflag, size = 0x8, scoped, tag = 'scoped memory for tpu_custom_call.1']
    #allocation5 [shape = 'u8[49152]{0}', space=vmem, size = 0xc000, scoped, tag = 'input window, operand 1']
    #allocation6 [shape = 's32[2]{0}', space=sflag, size = 0x8, scoped, tag = 'scoped memory for tpu_custom_call.1']
    #allocation7 [shape = 'u8[1024]{0}', space=vmem, size = 0x400, scoped, tag = 'input window, operand 2, single buffered']
    #allocation8 [shape = 'u8[1024]{0}', space=vmem, size = 0x400, scoped, tag = 'input window, operand 3, single buffered']
    #allocation9 [shape = 's32[1]{0}', space=sflag, size = 0x4, scoped, tag = 'scoped memory for tpu_custom_call.1']
    #allocation10 [shape = 'u8[393216]{0}', space=vmem, size = 0x60000, scoped, tag = 'input window, operand 4, single buffered']
    #allocation11 [shape = 'u8[131072]{0}', space=vmem, size = 0x20000, scoped, tag = 'input window, operand 6, single buffered']
    #allocation12 [shape = 's32[1]{0}', space=sflag, size = 0x4, scoped, tag = 'scoped memory for tpu_custom_call.1']
    #allocation13 [shape = 'u8[131072]{0}', space=vmem, size = 0x20000, scoped, tag = 'input window, operand 10, single buffered']
    #allocation14 [shape = 'u8[262144]{0}', space=vmem, size = 0x40000, scoped, tag = 'input window, operand 12, single buffered']
    #allocation15 [shape = 's32[1]{0}', space=sflag, size = 0x4, scoped, tag = 'scoped memory for tpu_custom_call.1']
    #allocation16 [shape = 'u8[131072]{0}', space=vmem, size = 0x20000, scoped, tag = 'input window, operand 14, single buffered']
    #allocation17 [shape = 'u8[262144]{0}', space=vmem, size = 0x40000, scoped, tag = 'input window, operand 18, single buffered']
    #allocation18 [shape = 's32[1]{0}', space=sflag, size = 0x4, scoped, tag = 'scoped memory for tpu_custom_call.1']
    #allocation19 [shape = 'u8[262144]{0}', space=vmem, size = 0x40000, scoped, tag = 'input window, operand 20, single buffered']
    #allocation20 [shape = 'u8[32768]{0}', space=vmem, size = 0x8000, scoped, tag = 'output window, operand 0']
    %27 = vsyncpa [#allocation3], 0
    %s28 = scalar_lea.sflag [#allocation3], 1
    %29 = vsyncpa %s28, 0
    %30 = vsyncpa [#allocation6], 0
    %s31 = scalar_lea.sflag [#allocation6], 1
    %32 = vsyncpa %s31, 0
    %33 = vsyncpa [#allocation9], 0
    %34 = vsyncpa [#allocation12], 0
    %35 = vsyncpa [#allocation15], 0
    %36 = vsyncpa [#allocation18], 0
    %37 = vsyncpa [#allocation4], 0
    %s38 = scalar_lea.sflag [#allocation4], 1
    %39 = vsyncpa %s38, 0
    loop: start=0, step=1, limit=4
    $region2: #{tpu_custom_call.1} parent=1 // loop_pre_header
      _
    $region3: #{tpu_custom_call.1} parent=1 // loop_header
      %s41 = sphi 0, %s45
      %p42 = scmp.ge.s32.totalorder %s41, 4
      %s51 = sphi 0, %s53
      %s54 = sphi 0, %s51
      %s55 = sphi 0, %s54
      %s71 = sphi 0, %s55
      %s77 = sphi 0, %s79
      %s80 = sphi 0, %s77
      %s81 = sphi 0, %s80
      %s97 = sphi 0, %s81
      %s101 = sphi 0, %s101
      %s103 = sphi 0, %s101
      %s104 = sphi 0, %s103
      %s118 = sphi 0, %s104
      %s122 = sphi 0, %s122
      %s124 = sphi 0, %s122
      %s125 = sphi 0, %s124
      %s139 = sphi 0, %s125
      %s143 = sphi 0, %s143
      %s145 = sphi 0, %s143
      %s146 = sphi 0, %s145
      %s160 = sphi 0, %s146
      %s164 = sphi 0, %s164
      %s166 = sphi 0, %s164
      %s167 = sphi 0, %s166
      %s181 = sphi 0, %s167
      %s185 = sphi 0, %s185
      %s187 = sphi 0, %s185
      %s188 = sphi 0, %s187
      %s202 = sphi 0, %s188
      %s206 = sphi 0, %s206
      %s208 = sphi 0, %s206
      %s209 = sphi 0, %s208
      %s223 = sphi 0, %s209
      %s227 = sphi 0, %s227
      %s229 = sphi 0, %s227
      %s230 = sphi 0, %s229
      %s244 = sphi 0, %s230
      %s248 = sphi 0, %s248
      %s250 = sphi 0, %s248
      %s251 = sphi 0, %s250
      %s265 = sphi 0, %s251
      %s269 = sphi 0, %s269
      %s271 = sphi 0, %s269
      %s272 = sphi 0, %s271
      %s286 = sphi 0, %s272
      %s290 = sphi 0, %s290
      %s292 = sphi 0, %s290
      %s293 = sphi 0, %s292
      %s307 = sphi 0, %s293
      %s311 = sphi 0, %s311
      %s313 = sphi 0, %s311
      %s314 = sphi 0, %s313
      %s328 = sphi 0, %s314
      %s332 = sphi 0, %s332
      %s334 = sphi 0, %s332
      %s335 = sphi 0, %s334
      %s349 = sphi 0, %s335
      %s353 = sphi 0, %s353
      %s355 = sphi 0, %s353
      %s356 = sphi 0, %s355
      %s370 = sphi 0, %s356
      %s374 = sphi 0, %s374
      %s376 = sphi 0, %s374
      %s377 = sphi 0, %s376
      %s391 = sphi 0, %s377
      %s395 = sphi 0, %s395
      %s397 = sphi 0, %s395
      %s398 = sphi 0, %s397
      %s412 = sphi 0, %s398
      %s416 = sphi 0, %s416
      %s418 = sphi 0, %s416
      %s419 = sphi 0, %s418
      %s433 = sphi 0, %s419
      %s437 = sphi 0, %s437
      %s439 = sphi 0, %s437
      %s440 = sphi 0, %s439
      %s454 = sphi 0, %s440
      %s458 = sphi 0, %s458
      %s460 = sphi 0, %s458
      %s461 = sphi 0, %s460
      %s475 = sphi 0, %s461
      %s479 = sphi 0, %s479
      %s481 = sphi 0, %s479
      %s482 = sphi 0, %s481
      %s496 = sphi 0, %s482
      %s500 = sphi 0, %s500
      %s502 = sphi 0, %s500
      %s503 = sphi 0, %s502
      %s517 = sphi 0, %s503
      %s523 = sphi 0, %s525
      %s526 = sphi 0, %s523
      %s527 = sphi 0, %s526
      %s543 = sphi 0, %s527
    $region4: #{tpu_custom_call.1} parent=1 // loop_header_branch
      %44 = sbr.rel (%p42) target = $region8
    $region5: #{tpu_custom_call.1} parent=1 // loop_body
      %s46 = ssub.s32 %s41, 1
      %s47 = ssub.s32 %s41, 2
      %s48 = sadd.s32 %s41, 1
      %s49 = ssub.s32 %s41, %s48
      %p50 = scmp.eq.s32.totalorder %s49, 0
      %s52 = sadd.s32 %s51, 1
      %s53 = scalar_select %p50, %s51, %s52
      %p56 = pneg %p50
      %p57 = scmp.eq.s32.totalorder %s41, 1
      %p58 = por %p56, %p57
      %p59 = scmp.ne.s32.totalorder %s51, %s54
      %p60 = scmp.eq.s32.totalorder %s41, 0
      %p61 = por %p59, %p60
      %p62 = scmp.ne.s32.totalorder %s51, %s54
      %p63 = scmp.eq.s32.totalorder %s46, 1
      %p64 = por %p62, %p63
      %p65 = scmp.ne.s32.totalorder %s54, %s55
      %p66 = scmp.eq.s32.totalorder %s46, 0
      %p67 = por %p65, %p66
      %p68 = scmp.ne.s32.totalorder %s54, %s55
      %p69 = scmp.eq.s32.totalorder %s47, 1
      %p70 = por %p68, %p69
      %p72 = scmp.ne.s32.totalorder %s55, %s71
      %p73 = scmp.eq.s32.totalorder %s47, 0
      %p74 = por %p72, %p73
      %s75 = ssub.s32 %s41, %s48
      %p76 = scmp.eq.s32.totalorder %s75, 0
      %s78 = sadd.s32 %s77, 1
      %s79 = scalar_select %p76, %s77, %s78
      %p82 = pneg %p76
      %p83 = scmp.eq.s32.totalorder %s41, 1
      %p84 = por %p82, %p83
      %p85 = scmp.ne.s32.totalorder %s77, %s80
      %p86 = scmp.eq.s32.totalorder %s41, 0
      %p87 = por %p85, %p86
      %p88 = scmp.ne.s32.totalorder %s77, %s80
      %p89 = scmp.eq.s32.totalorder %s46, 1
      %p90 = por %p88, %p89
      %p91 = scmp.ne.s32.totalorder %s80, %s81
      %p92 = scmp.eq.s32.totalorder %s46, 0
      %p93 = por %p91, %p92
      %p94 = scmp.ne.s32.totalorder %s80, %s81
      %p95 = scmp.eq.s32.totalorder %s47, 1
      %p96 = por %p94, %p95
      %p98 = scmp.ne.s32.totalorder %s81, %s97
      %p99 = scmp.eq.s32.totalorder %s47, 0
      %p100 = por %p98, %p99
      %s102 = sadd.s32 %s101, 1
      %p105 = scmp.eq.s32.totalorder %s41, 1
      %p106 = scmp.ne.s32.totalorder %s101, %s103
      %p107 = scmp.eq.s32.totalorder %s41, 0
      %p108 = por %p106, %p107
      %p109 = scmp.ne.s32.totalorder %s101, %s103
      %p110 = scmp.eq.s32.totalorder %s46, 1
      %p111 = por %p109, %p110
      %p112 = scmp.ne.s32.totalorder %s103, %s104
      %p113 = scmp.eq.s32.totalorder %s46, 0
      %p114 = por %p112, %p113
      %p115 = scmp.ne.s32.totalorder %s103, %s104
      %p116 = scmp.eq.s32.totalorder %s47, 1
      %p117 = por %p115, %p116
      %p119 = scmp.ne.s32.totalorder %s104, %s118
      %p120 = scmp.eq.s32.totalorder %s47, 0
      %p121 = por %p119, %p120
      %s123 = sadd.s32 %s122, 1
      %p126 = scmp.eq.s32.totalorder %s41, 1
      %p127 = scmp.ne.s32.totalorder %s122, %s124
      %p128 = scmp.eq.s32.totalorder %s41, 0
      %p129 = por %p127, %p128
      %p130 = scmp.ne.s32.totalorder %s122, %s124
      %p131 = scmp.eq.s32.totalorder %s46, 1
      %p132 = por %p130, %p131
      %p133 = scmp.ne.s32.totalorder %s124, %s125
      %p134 = scmp.eq.s32.totalorder %s46, 0
      %p135 = por %p133, %p134
      %p136 = scmp.ne.s32.totalorder %s124, %s125
      %p137 = scmp.eq.s32.totalorder %s47, 1
      %p138 = por %p136, %p137
      %p140 = scmp.ne.s32.totalorder %s125, %s139
      %p141 = scmp.eq.s32.totalorder %s47, 0
      %p142 = por %p140, %p141
      %s144 = sadd.s32 %s143, 1
      %p147 = scmp.eq.s32.totalorder %s41, 1
      %p148 = scmp.ne.s32.totalorder %s143, %s145
      %p149 = scmp.eq.s32.totalorder %s41, 0
      %p150 = por %p148, %p149
      %p151 = scmp.ne.s32.totalorder %s143, %s145
      %p152 = scmp.eq.s32.totalorder %s46, 1
      %p153 = por %p151, %p152
      %p154 = scmp.ne.s32.totalorder %s145, %s146
      %p155 = scmp.eq.s32.totalorder %s46, 0
      %p156 = por %p154, %p155
      %p157 = scmp.ne.s32.totalorder %s145, %s146
      %p158 = scmp.eq.s32.totalorder %s47, 1
      %p159 = por %p157, %p158
      %p161 = scmp.ne.s32.totalorder %s146, %s160
      %p162 = scmp.eq.s32.totalorder %s47, 0
      %p163 = por %p161, %p162
      %s165 = sadd.s32 %s164, 1
      %p168 = scmp.eq.s32.totalorder %s41, 1
      %p169 = scmp.ne.s32.totalorder %s164, %s166
      %p170 = scmp.eq.s32.totalorder %s41, 0
      %p171 = por %p169, %p170
      %p172 = scmp.ne.s32.totalorder %s164, %s166
      %p173 = scmp.eq.s32.totalorder %s46, 1
      %p174 = por %p172, %p173
      %p175 = scmp.ne.s32.totalorder %s166, %s167
      %p176 = scmp.eq.s32.totalorder %s46, 0
      %p177 = por %p175, %p176
      %p178 = scmp.ne.s32.totalorder %s166, %s167
      %p179 = scmp.eq.s32.totalorder %s47, 1
      %p180 = por %p178, %p179
      %p182 = scmp.ne.s32.totalorder %s167, %s181
      %p183 = scmp.eq.s32.totalorder %s47, 0
      %p184 = por %p182, %p183
      %s186 = sadd.s32 %s185, 1
      %p189 = scmp.eq.s32.totalorder %s41, 1
      %p190 = scmp.ne.s32.totalorder %s185, %s187
      %p191 = scmp.eq.s32.totalorder %s41, 0
      %p192 = por %p190, %p191
      %p193 = scmp.ne.s32.totalorder %s185, %s187
      %p194 = scmp.eq.s32.totalorder %s46, 1
      %p195 = por %p193, %p194
      %p196 = scmp.ne.s32.totalorder %s187, %s188
      %p197 = scmp.eq.s32.totalorder %s46, 0
      %p198 = por %p196, %p197
      %p199 = scmp.ne.s32.totalorder %s187, %s188
      %p200 = scmp.eq.s32.totalorder %s47, 1
      %p201 = por %p199, %p200
      %p203 = scmp.ne.s32.totalorder %s188, %s202
      %p204 = scmp.eq.s32.totalorder %s47, 0
      %p205 = por %p203, %p204
      %s207 = sadd.s32 %s206, 1
      %p210 = scmp.eq.s32.totalorder %s41, 1
      %p211 = scmp.ne.s32.totalorder %s206, %s208
      %p212 = scmp.eq.s32.totalorder %s41, 0
      %p213 = por %p211, %p212
      %p214 = scmp.ne.s32.totalorder %s206, %s208
      %p215 = scmp.eq.s32.totalorder %s46, 1
      %p216 = por %p214, %p215
      %p217 = scmp.ne.s32.totalorder %s208, %s209
      %p218 = scmp.eq.s32.totalorder %s46, 0
      %p219 = por %p217, %p218
      %p220 = scmp.ne.s32.totalorder %s208, %s209
      %p221 = scmp.eq.s32.totalorder %s47, 1
      %p222 = por %p220, %p221
      %p224 = scmp.ne.s32.totalorder %s209, %s223
      %p225 = scmp.eq.s32.totalorder %s47, 0
      %p226 = por %p224, %p225
      %s228 = sadd.s32 %s227, 1
      %p231 = scmp.eq.s32.totalorder %s41, 1
      %p232 = scmp.ne.s32.totalorder %s227, %s229
      %p233 = scmp.eq.s32.totalorder %s41, 0
      %p234 = por %p232, %p233
      %p235 = scmp.ne.s32.totalorder %s227, %s229
      %p236 = scmp.eq.s32.totalorder %s46, 1
      %p237 = por %p235, %p236
      %p238 = scmp.ne.s32.totalorder %s229, %s230
      %p239 = scmp.eq.s32.totalorder %s46, 0
      %p240 = por %p238, %p239
      %p241 = scmp.ne.s32.totalorder %s229, %s230
      %p242 = scmp.eq.s32.totalorder %s47, 1
      %p243 = por %p241, %p242
      %p245 = scmp.ne.s32.totalorder %s230, %s244
      %p246 = scmp.eq.s32.totalorder %s47, 0
      %p247 = por %p245, %p246
      %s249 = sadd.s32 %s248, 1
      %p252 = scmp.eq.s32.totalorder %s41, 1
      %p253 = scmp.ne.s32.totalorder %s248, %s250
      %p254 = scmp.eq.s32.totalorder %s41, 0
      %p255 = por %p253, %p254
      %p256 = scmp.ne.s32.totalorder %s248, %s250
      %p257 = scmp.eq.s32.totalorder %s46, 1
      %p258 = por %p256, %p257
      %p259 = scmp.ne.s32.totalorder %s250, %s251
      %p260 = scmp.eq.s32.totalorder %s46, 0
      %p261 = por %p259, %p260
      %p262 = scmp.ne.s32.totalorder %s250, %s251
      %p263 = scmp.eq.s32.totalorder %s47, 1
      %p264 = por %p262, %p263
      %p266 = scmp.ne.s32.totalorder %s251, %s265
      %p267 = scmp.eq.s32.totalorder %s47, 0
      %p268 = por %p266, %p267
      %s270 = sadd.s32 %s269, 1
      %p273 = scmp.eq.s32.totalorder %s41, 1
      %p274 = scmp.ne.s32.totalorder %s269, %s271
      %p275 = scmp.eq.s32.totalorder %s41, 0
      %p276 = por %p274, %p275
      %p277 = scmp.ne.s32.totalorder %s269, %s271
      %p278 = scmp.eq.s32.totalorder %s46, 1
      %p279 = por %p277, %p278
      %p280 = scmp.ne.s32.totalorder %s271, %s272
      %p281 = scmp.eq.s32.totalorder %s46, 0
      %p282 = por %p280, %p281
      %p283 = scmp.ne.s32.totalorder %s271, %s272
      %p284 = scmp.eq.s32.totalorder %s47, 1
      %p285 = por %p283, %p284
      %p287 = scmp.ne.s32.totalorder %s272, %s286
      %p288 = scmp.eq.s32.totalorder %s47, 0
      %p289 = por %p287, %p288
      %s291 = sadd.s32 %s290, 1
      %p294 = scmp.eq.s32.totalorder %s41, 1
      %p295 = scmp.ne.s32.totalorder %s290, %s292
      %p296 = scmp.eq.s32.totalorder %s41, 0
      %p297 = por %p295, %p296
      %p298 = scmp.ne.s32.totalorder %s290, %s292
      %p299 = scmp.eq.s32.totalorder %s46, 1
      %p300 = por %p298, %p299
      %p301 = scmp.ne.s32.totalorder %s292, %s293
      %p302 = scmp.eq.s32.totalorder %s46, 0
      %p303 = por %p301, %p302
      %p304 = scmp.ne.s32.totalorder %s292, %s293
      %p305 = scmp.eq.s32.totalorder %s47, 1
      %p306 = por %p304, %p305
      %p308 = scmp.ne.s32.totalorder %s293, %s307
      %p309 = scmp.eq.s32.totalorder %s47, 0
      %p310 = por %p308, %p309
      %s312 = sadd.s32 %s311, 1
      %p315 = scmp.eq.s32.totalorder %s41, 1
      %p316 = scmp.ne.s32.totalorder %s311, %s313
      %p317 = scmp.eq.s32.totalorder %s41, 0
      %p318 = por %p316, %p317
      %p319 = scmp.ne.s32.totalorder %s311, %s313
      %p320 = scmp.eq.s32.totalorder %s46, 1
      %p321 = por %p319, %p320
      %p322 = scmp.ne.s32.totalorder %s313, %s314
      %p323 = scmp.eq.s32.totalorder %s46, 0
      %p324 = por %p322, %p323
      %p325 = scmp.ne.s32.totalorder %s313, %s314
      %p326 = scmp.eq.s32.totalorder %s47, 1
      %p327 = por %p325, %p326
      %p329 = scmp.ne.s32.totalorder %s314, %s328
      %p330 = scmp.eq.s32.totalorder %s47, 0
      %p331 = por %p329, %p330
      %s333 = sadd.s32 %s332, 1
      %p336 = scmp.eq.s32.totalorder %s41, 1
      %p337 = scmp.ne.s32.totalorder %s332, %s334
      %p338 = scmp.eq.s32.totalorder %s41, 0
      %p339 = por %p337, %p338
      %p340 = scmp.ne.s32.totalorder %s332, %s334
      %p341 = scmp.eq.s32.totalorder %s46, 1
      %p342 = por %p340, %p341
      %p343 = scmp.ne.s32.totalorder %s334, %s335
      %p344 = scmp.eq.s32.totalorder %s46, 0
      %p345 = por %p343, %p344
      %p346 = scmp.ne.s32.totalorder %s334, %s335
      %p347 = scmp.eq.s32.totalorder %s47, 1
      %p348 = por %p346, %p347
      %p350 = scmp.ne.s32.totalorder %s335, %s349
      %p351 = scmp.eq.s32.totalorder %s47, 0
      %p352 = por %p350, %p351
      %s354 = sadd.s32 %s353, 1
      %p357 = scmp.eq.s32.totalorder %s41, 1
      %p358 = scmp.ne.s32.totalorder %s353, %s355
      %p359 = scmp.eq.s32.totalorder %s41, 0
      %p360 = por %p358, %p359
      %p361 = scmp.ne.s32.totalorder %s353, %s355
      %p362 = scmp.eq.s32.totalorder %s46, 1
      %p363 = por %p361, %p362
      %p364 = scmp.ne.s32.totalorder %s355, %s356
      %p365 = scmp.eq.s32.totalorder %s46, 0
      %p366 = por %p364, %p365
      %p367 = scmp.ne.s32.totalorder %s355, %s356
      %p368 = scmp.eq.s32.totalorder %s47, 1
      %p369 = por %p367, %p368
      %p371 = scmp.ne.s32.totalorder %s356, %s370
      %p372 = scmp.eq.s32.totalorder %s47, 0
      %p373 = por %p371, %p372
      %s375 = sadd.s32 %s374, 1
      %p378 = scmp.eq.s32.totalorder %s41, 1
      %p379 = scmp.ne.s32.totalorder %s374, %s376
      %p380 = scmp.eq.s32.totalorder %s41, 0
      %p381 = por %p379, %p380
      %p382 = scmp.ne.s32.totalorder %s374, %s376
      %p383 = scmp.eq.s32.totalorder %s46, 1
      %p384 = por %p382, %p383
      %p385 = scmp.ne.s32.totalorder %s376, %s377
      %p386 = scmp.eq.s32.totalorder %s46, 0
      %p387 = por %p385, %p386
      %p388 = scmp.ne.s32.totalorder %s376, %s377
      %p389 = scmp.eq.s32.totalorder %s47, 1
      %p390 = por %p388, %p389
      %p392 = scmp.ne.s32.totalorder %s377, %s391
      %p393 = scmp.eq.s32.totalorder %s47, 0
      %p394 = por %p392, %p393
      %s396 = sadd.s32 %s395, 1
      %p399 = scmp.eq.s32.totalorder %s41, 1
      %p400 = scmp.ne.s32.totalorder %s395, %s397
      %p401 = scmp.eq.s32.totalorder %s41, 0
      %p402 = por %p400, %p401
      %p403 = scmp.ne.s32.totalorder %s395, %s397
      %p404 = scmp.eq.s32.totalorder %s46, 1
      %p405 = por %p403, %p404
      %p406 = scmp.ne.s32.totalorder %s397, %s398
      %p407 = scmp.eq.s32.totalorder %s46, 0
      %p408 = por %p406, %p407
      %p409 = scmp.ne.s32.totalorder %s397, %s398
      %p410 = scmp.eq.s32.totalorder %s47, 1
      %p411 = por %p409, %p410
      %p413 = scmp.ne.s32.totalorder %s398, %s412
      %p414 = scmp.eq.s32.totalorder %s47, 0
      %p415 = por %p413, %p414
      %s417 = sadd.s32 %s416, 1
      %p420 = scmp.eq.s32.totalorder %s41, 1
      %p421 = scmp.ne.s32.totalorder %s416, %s418
      %p422 = scmp.eq.s32.totalorder %s41, 0
      %p423 = por %p421, %p422
      %p424 = scmp.ne.s32.totalorder %s416, %s418
      %p425 = scmp.eq.s32.totalorder %s46, 1
      %p426 = por %p424, %p425
      %p427 = scmp.ne.s32.totalorder %s418, %s419
      %p428 = scmp.eq.s32.totalorder %s46, 0
      %p429 = por %p427, %p428
      %p430 = scmp.ne.s32.totalorder %s418, %s419
      %p431 = scmp.eq.s32.totalorder %s47, 1
      %p432 = por %p430, %p431
      %p434 = scmp.ne.s32.totalorder %s419, %s433
      %p435 = scmp.eq.s32.totalorder %s47, 0
      %p436 = por %p434, %p435
      %s438 = sadd.s32 %s437, 1
      %p441 = scmp.eq.s32.totalorder %s41, 1
      %p442 = scmp.ne.s32.totalorder %s437, %s439
      %p443 = scmp.eq.s32.totalorder %s41, 0
      %p444 = por %p442, %p443
      %p445 = scmp.ne.s32.totalorder %s437, %s439
      %p446 = scmp.eq.s32.totalorder %s46, 1
      %p447 = por %p445, %p446
      %p448 = scmp.ne.s32.totalorder %s439, %s440
      %p449 = scmp.eq.s32.totalorder %s46, 0
      %p450 = por %p448, %p449
      %p451 = scmp.ne.s32.totalorder %s439, %s440
      %p452 = scmp.eq.s32.totalorder %s47, 1
      %p453 = por %p451, %p452
      %p455 = scmp.ne.s32.totalorder %s440, %s454
      %p456 = scmp.eq.s32.totalorder %s47, 0
      %p457 = por %p455, %p456
      %s459 = sadd.s32 %s458, 1
      %p462 = scmp.eq.s32.totalorder %s41, 1
      %p463 = scmp.ne.s32.totalorder %s458, %s460
      %p464 = scmp.eq.s32.totalorder %s41, 0
      %p465 = por %p463, %p464
      %p466 = scmp.ne.s32.totalorder %s458, %s460
      %p467 = scmp.eq.s32.totalorder %s46, 1
      %p468 = por %p466, %p467
      %p469 = scmp.ne.s32.totalorder %s460, %s461
      %p470 = scmp.eq.s32.totalorder %s46, 0
      %p471 = por %p469, %p470
      %p472 = scmp.ne.s32.totalorder %s460, %s461
      %p473 = scmp.eq.s32.totalorder %s47, 1
      %p474 = por %p472, %p473
      %p476 = scmp.ne.s32.totalorder %s461, %s475
      %p477 = scmp.eq.s32.totalorder %s47, 0
      %p478 = por %p476, %p477
      %s480 = sadd.s32 %s479, 1
      %p483 = scmp.eq.s32.totalorder %s41, 1
      %p484 = scmp.ne.s32.totalorder %s479, %s481
      %p485 = scmp.eq.s32.totalorder %s41, 0
      %p486 = por %p484, %p485
      %p487 = scmp.ne.s32.totalorder %s479, %s481
      %p488 = scmp.eq.s32.totalorder %s46, 1
      %p489 = por %p487, %p488
      %p490 = scmp.ne.s32.totalorder %s481, %s482
      %p491 = scmp.eq.s32.totalorder %s46, 0
      %p492 = por %p490, %p491
      %p493 = scmp.ne.s32.totalorder %s481, %s482
      %p494 = scmp.eq.s32.totalorder %s47, 1
      %p495 = por %p493, %p494
      %p497 = scmp.ne.s32.totalorder %s482, %s496
      %p498 = scmp.eq.s32.totalorder %s47, 0
      %p499 = por %p497, %p498
      %s501 = sadd.s32 %s500, 1
      %p504 = scmp.eq.s32.totalorder %s41, 1
      %p505 = scmp.ne.s32.totalorder %s500, %s502
      %p506 = scmp.eq.s32.totalorder %s41, 0
      %p507 = por %p505, %p506
      %p508 = scmp.ne.s32.totalorder %s500, %s502
      %p509 = scmp.eq.s32.totalorder %s46, 1
      %p510 = por %p508, %p509
      %p511 = scmp.ne.s32.totalorder %s502, %s503
      %p512 = scmp.eq.s32.totalorder %s46, 0
      %p513 = por %p511, %p512
      %p514 = scmp.ne.s32.totalorder %s502, %s503
      %p515 = scmp.eq.s32.totalorder %s47, 1
      %p516 = por %p514, %p515
      %p518 = scmp.ne.s32.totalorder %s503, %s517
      %p519 = scmp.eq.s32.totalorder %s47, 0
      %p520 = por %p518, %p519
      %s521 = ssub.s32 %s41, %s48
      %p522 = scmp.eq.s32.totalorder %s521, 0
      %s524 = sadd.s32 %s523, 1
      %s525 = scalar_select %p522, %s523, %s524
      %p528 = pneg %p522
      %p529 = scmp.eq.s32.totalorder %s41, 1
      %p530 = por %p528, %p529
      %p531 = scmp.ne.s32.totalorder %s523, %s526
      %p532 = scmp.eq.s32.totalorder %s41, 0
      %p533 = por %p531, %p532
      %p534 = scmp.ne.s32.totalorder %s523, %s526
      %p535 = scmp.eq.s32.totalorder %s46, 1
      %p536 = por %p534, %p535
      %p537 = scmp.ne.s32.totalorder %s526, %s527
      %p538 = scmp.eq.s32.totalorder %s46, 0
      %p539 = por %p537, %p538
      %p540 = scmp.ne.s32.totalorder %s526, %s527
      %p541 = scmp.eq.s32.totalorder %s47, 1
      %p542 = por %p540, %p541
      %p544 = scmp.ne.s32.totalorder %s527, %s543
      %p545 = scmp.eq.s32.totalorder %s47, 0
      %p546 = por %p544, %p545
      %p547 = scmp.le.s32.totalorder 1, %s41
      %p548 = scmp.lt.s32.totalorder %s41, 3
      %p549 = pnand %p547, %p548
      %p550 = pneg %p549
      // Predicated region
      $region9: #{tpu_custom_call.1} parent=5 // pred_check
        _
      $region10: #{tpu_custom_call.1} parent=5 // pred_check_branch
        %552 = sbr.rel (%p549) target = $region12
      $region11: #{tpu_custom_call.1} parent=5 // pred_region
        %s553 = ssub.s32 %s41, 1
        // Predicated region
        $region13: #{tpu_custom_call.1} parent=11 // pred_check
          %p554 = pneg %p114
        $region14: #{tpu_custom_call.1} parent=11 // pred_check_branch
          %556 = sbr.rel (%p554) target = $region16
        $region15: #{tpu_custom_call.1} parent=11 // pred_region
          %s558 = ssub.s32 32, 32
          %559 = vsyncadd [#allocation6], %s558
          %s561 = sshll.u32 [#allocation7], 4
          %s562 = int_to_ptr.vmem [resolvable:$true] %s561
          %564 = dma.hbm_to_vmem [thread:$0]  %s2, 32, %s562, [#allocation6]
        $region16: #{tpu_custom_call.1} parent=11 // pred_fallthru
          _
        // Predicated region
        $region17: #{tpu_custom_call.1} parent=11 // pred_check
          %p565 = pneg %p135
        $region18: #{tpu_custom_call.1} parent=11 // pred_check_branch
          %567 = sbr.rel (%p565) target = $region20
        $region19: #{tpu_custom_call.1} parent=11 // pred_region
          %s569 = ssub.s32 32, 32
          %570 = vsyncadd [#allocation9], %s569
          %s572 = sshll.u32 [#allocation8], 4
          %s573 = int_to_ptr.vmem [resolvable:$true] %s572
          %575 = dma.hbm_to_vmem [thread:$0]  %s3, 32, %s573, [#allocation9]
        $region20: #{tpu_custom_call.1} parent=11 // pred_fallthru
          _
        // Predicated region
        $region21: #{tpu_custom_call.1} parent=11 // pred_check
          %p576 = pneg %p156
        $region22: #{tpu_custom_call.1} parent=11 // pred_check_branch
          %578 = sbr.rel (%p576) target = $region24
        $region23: #{tpu_custom_call.1} parent=11 // pred_region
          %s580 = ssub.s32 12288, 12288
          %581 = vsyncadd [#allocation9], %s580
          %s582 = sshll.u32 [#allocation10], 4
          %s583 = int_to_ptr.vmem [resolvable:$true] %s582
          %588 = dma.hbm_to_vmem [thread:$0]  %s4, 12288, %s583, [#allocation9], 384, 384, 24
        $region24: #{tpu_custom_call.1} parent=11 // pred_fallthru
          _
        // Predicated region
        $region25: #{tpu_custom_call.1} parent=11 // pred_check
          %p589 = pneg %p177
        $region26: #{tpu_custom_call.1} parent=11 // pred_check_branch
          %591 = sbr.rel (%p589) target = $region28
        $region27: #{tpu_custom_call.1} parent=11 // pred_region
          _
        $region28: #{tpu_custom_call.1} parent=11 // pred_fallthru
          _
        // Predicated region
        $region29: #{tpu_custom_call.1} parent=11 // pred_check
          %p592 = pneg %p198
        $region30: #{tpu_custom_call.1} parent=11 // pred_check_branch
          %594 = sbr.rel (%p592) target = $region32
        $region31: #{tpu_custom_call.1} parent=11 // pred_region
          %s596 = ssub.s32 4096, 4096
          %597 = vsyncadd [#allocation12], %s596
          %s598 = sshll.u32 [#allocation11], 4
          %s599 = int_to_ptr.vmem [resolvable:$true] %s598
          %604 = dma.hbm_to_vmem [thread:$0]  %s6, 4096, %s599, [#allocation12], 128, 128, 8
        $region32: #{tpu_custom_call.1} parent=11 // pred_fallthru
          _
        // Predicated region
        $region33: #{tpu_custom_call.1} parent=11 // pred_check
          %p605 = pneg %p219
        $region34: #{tpu_custom_call.1} parent=11 // pred_check_branch
          %607 = sbr.rel (%p605) target = $region36
        $region35: #{tpu_custom_call.1} parent=11 // pred_region
          _
        $region36: #{tpu_custom_call.1} parent=11 // pred_fallthru
          _
        // Predicated region
        $region37: #{tpu_custom_call.1} parent=11 // pred_check
          %p608 = pneg %p240
        $region38: #{tpu_custom_call.1} parent=11 // pred_check_branch
          %610 = sbr.rel (%p608) target = $region40
        $region39: #{tpu_custom_call.1} parent=11 // pred_region
          _
        $region40: #{tpu_custom_call.1} parent=11 // pred_fallthru
          _
        // Predicated region
        $region41: #{tpu_custom_call.1} parent=11 // pred_check
          %p611 = pneg %p261
        $region42: #{tpu_custom_call.1} parent=11 // pred_check_branch
          %613 = sbr.rel (%p611) target = $region44
        $region43: #{tpu_custom_call.1} parent=11 // pred_region
          _
        $region44: #{tpu_custom_call.1} parent=11 // pred_fallthru
          _
        // Predicated region
        $region45: #{tpu_custom_call.1} parent=11 // pred_check
          %p614 = pneg %p282
        $region46: #{tpu_custom_call.1} parent=11 // pred_check_branch
          %616 = sbr.rel (%p614) target = $region48
        $region47: #{tpu_custom_call.1} parent=11 // pred_region
          %s618 = ssub.s32 4096, 4096
          %619 = vsyncadd [#allocation12], %s618
          %s620 = sshll.u32 [#allocation13], 4
          %s621 = int_to_ptr.vmem [resolvable:$true] %s620
          %626 = dma.hbm_to_vmem [thread:$0]  %s10, 4096, %s621, [#allocation12], 128, 128, 8
        $region48: #{tpu_custom_call.1} parent=11 // pred_fallthru
          _
        // Predicated region
        $region49: #{tpu_custom_call.1} parent=11 // pred_check
          %p627 = pneg %p303
        $region50: #{tpu_custom_call.1} parent=11 // pred_check_branch
          %629 = sbr.rel (%p627) target = $region52
        $region51: #{tpu_custom_call.1} parent=11 // pred_region
          _
        $region52: #{tpu_custom_call.1} parent=11 // pred_fallthru
          _
        // Predicated region
        $region53: #{tpu_custom_call.1} parent=11 // pred_check
          %p630 = pneg %p324
        $region54: #{tpu_custom_call.1} parent=11 // pred_check_branch
          %632 = sbr.rel (%p630) target = $region56
        $region55: #{tpu_custom_call.1} parent=11 // pred_region
          %s634 = ssub.s32 8192, 8192
          %635 = vsyncadd [#allocation15], %s634
          %s636 = sshll.u32 [#allocation14], 4
          %s637 = int_to_ptr.vmem [resolvable:$true] %s636
          %642 = dma.hbm_to_vmem [thread:$0]  %s12, 8192, %s637, [#allocation15], 256, 256, 16
        $region56: #{tpu_custom_call.1} parent=11 // pred_fallthru
          _
        // Predicated region
        $region57: #{tpu_custom_call.1} parent=11 // pred_check
          %p643 = pneg %p345
        $region58: #{tpu_custom_call.1} parent=11 // pred_check_branch
          %645 = sbr.rel (%p643) target = $region60
        $region59: #{tpu_custom_call.1} parent=11 // pred_region
          _
        $region60: #{tpu_custom_call.1} parent=11 // pred_fallthru
          _
        // Predicated region
        $region61: #{tpu_custom_call.1} parent=11 // pred_check
          %p646 = pneg %p366
        $region62: #{tpu_custom_call.1} parent=11 // pred_check_branch
          %648 = sbr.rel (%p646) target = $region64
        $region63: #{tpu_custom_call.1} parent=11 // pred_region
          %s650 = ssub.s32 4096, 4096
          %651 = vsyncadd [#allocation15], %s650
          %s652 = sshll.u32 [#allocation16], 4
          %s653 = int_to_ptr.vmem [resolvable:$true] %s652
          %658 = dma.hbm_to_vmem [thread:$0]  %s14, 4096, %s653, [#allocation15], 128, 128, 8
        $region64: #{tpu_custom_call.1} parent=11 // pred_fallthru
          _
        // Predicated region
        $region65: #{tpu_custom_call.1} parent=11 // pred_check
          %p659 = pneg %p387
        $region66: #{tpu_custom_call.1} parent=11 // pred_check_branch
          %661 = sbr.rel (%p659) target = $region68
        $region67: #{tpu_custom_call.1} parent=11 // pred_region
          _
        $region68: #{tpu_custom_call.1} parent=11 // pred_fallthru
          _
        // Predicated region
        $region69: #{tpu_custom_call.1} parent=11 // pred_check
          %p662 = pneg %p408
        $region70: #{tpu_custom_call.1} parent=11 // pred_check_branch
          %664 = sbr.rel (%p662) target = $region72
        $region71: #{tpu_custom_call.1} parent=11 // pred_region
          _
        $region72: #{tpu_custom_call.1} parent=11 // pred_fallthru
          _
        // Predicated region
        $region73: #{tpu_custom_call.1} parent=11 // pred_check
          %p665 = pneg %p429
        $region74: #{tpu_custom_call.1} parent=11 // pred_check_branch
          %667 = sbr.rel (%p665) target = $region76
        $region75: #{tpu_custom_call.1} parent=11 // pred_region
          _
        $region76: #{tpu_custom_call.1} parent=11 // pred_fallthru
          _
        // Predicated region
        $region77: #{tpu_custom_call.1} parent=11 // pred_check
          %p668 = pneg %p450
        $region78: #{tpu_custom_call.1} parent=11 // pred_check_branch
          %670 = sbr.rel (%p668) target = $region80
        $region79: #{tpu_custom_call.1} parent=11 // pred_region
          %s672 = ssub.s32 8192, 8192
          %673 = vsyncadd [#allocation18], %s672
          %s674 = sshll.u32 [#allocation17], 4
          %s675 = int_to_ptr.vmem [resolvable:$true] %s674
          %680 = dma.hbm_to_vmem [thread:$0]  %s18, 8192, %s675, [#allocation18], 256, 256, 16
        $region80: #{tpu_custom_call.1} parent=11 // pred_fallthru
          _
        // Predicated region
        $region81: #{tpu_custom_call.1} parent=11 // pred_check
          %p681 = pneg %p471
        $region82: #{tpu_custom_call.1} parent=11 // pred_check_branch
          %683 = sbr.rel (%p681) target = $region84
        $region83: #{tpu_custom_call.1} parent=11 // pred_region
          _
        $region84: #{tpu_custom_call.1} parent=11 // pred_fallthru
          _
        // Predicated region
        $region85: #{tpu_custom_call.1} parent=11 // pred_check
          %p684 = pneg %p492
        $region86: #{tpu_custom_call.1} parent=11 // pred_check_branch
          %686 = sbr.rel (%p684) target = $region88
        $region87: #{tpu_custom_call.1} parent=11 // pred_region
          %s688 = ssub.s32 8192, 8192
          %689 = vsyncadd [#allocation18], %s688
          %s690 = sshll.u32 [#allocation19], 4
          %s691 = int_to_ptr.vmem [resolvable:$true] %s690
          %696 = dma.hbm_to_vmem [thread:$0]  %s20, 8192, %s691, [#allocation18], 128, 128, 8
        $region88: #{tpu_custom_call.1} parent=11 // pred_fallthru
          _
        // Predicated region
        $region89: #{tpu_custom_call.1} parent=11 // pred_check
          %p697 = pneg %p513
        $region90: #{tpu_custom_call.1} parent=11 // pred_check_branch
          %699 = sbr.rel (%p697) target = $region92
        $region91: #{tpu_custom_call.1} parent=11 // pred_region
          _
        $region92: #{tpu_custom_call.1} parent=11 // pred_fallthru
          _
      $region12: #{tpu_custom_call.1} parent=5 // pred_fallthru
        _
      %p700 = scmp.lt.s32.totalorder %s41, 2
      // Predicated region
      $region93: #{tpu_custom_call.1} parent=5 // pred_check
        %p701 = pneg %p700
      $region94: #{tpu_custom_call.1} parent=5 // pred_check_branch
        %703 = sbr.rel (%p701) target = $region96
      $region95: #{tpu_custom_call.1} parent=5 // pred_region
        // Predicated region
        $region97: #{tpu_custom_call.1} parent=95 // pred_check
          %p704 = pneg %p61
        $region98: #{tpu_custom_call.1} parent=95 // pred_check_branch
          %706 = sbr.rel (%p704) target = $region100
        $region99: #{tpu_custom_call.1} parent=95 // pred_region
          %s707 = sand.u32 %s51, 1
          %s708 = scalar_lea.sflag [#allocation3], %s707
          %s709 = sand.u32 %s51, 1
          %s710 = smul.addr %s709, 32
          %s711 = scalar_lea.vmem [#allocation2], %s710
          %s713 = ssub.s32 512, 512
          %714 = vsyncadd %s708, %s713
          %s715 = smul.addr %s41, 4
          %s716 = smul.addr %s715, 128
          %s717 = scalar_lea.hbm %s0, %s716
          %s718 = sshll.u32 %s711, 4
          %s719 = int_to_ptr.vmem [resolvable:$true] %s718
          %724 = dma.hbm_to_vmem [thread:$0]  %s717, 512, %s719, %s708, 256, 256, 16
        $region100: #{tpu_custom_call.1} parent=95 // pred_fallthru
          _
        // Predicated region
        $region101: #{tpu_custom_call.1} parent=95 // pred_check
          %p725 = pneg %p87
        $region102: #{tpu_custom_call.1} parent=95 // pred_check_branch
          %727 = sbr.rel (%p725) target = $region104
        $region103: #{tpu_custom_call.1} parent=95 // pred_region
          %s728 = sand.u32 %s41, 1
          %s729 = scalar_lea.sflag [#allocation6], %s728
          %s730 = sand.u32 %s77, 1
          %s731 = smul.addr %s730, 48
          %s732 = scalar_lea.vmem [#allocation5], %s731
          %s734 = ssub.s32 768, 768
          %735 = vsyncadd %s729, %s734
          %s736 = smul.addr %s41, 6
          %s737 = smul.addr %s736, 128
          %s738 = scalar_lea.hbm %s1, %s737
          %s739 = sshll.u32 %s732, 4
          %s740 = int_to_ptr.vmem [resolvable:$true] %s739
          %745 = dma.hbm_to_vmem [thread:$0]  %s738, 768, %s740, %s729, 256, 256, 16
        $region104: #{tpu_custom_call.1} parent=95 // pred_fallthru
          _
      $region96: #{tpu_custom_call.1} parent=5 // pred_fallthru
        _
      %p746 = scmp.le.s32.totalorder 1, %s41
      %p747 = scmp.lt.s32.totalorder %s41, 3
      %p748 = pnand %p746, %p747
      %p749 = pneg %p748
      // Predicated region
      $region105: #{tpu_custom_call.1} parent=5 // pred_check
        _
      $region106: #{tpu_custom_call.1} parent=5 // pred_check_branch
        %751 = sbr.rel (%p748) target = $region108
      $region107: #{tpu_custom_call.1} parent=5 // pred_region
        %s752 = ssub.s32 %s41, 1
        %s753 = sand.u32 %s54, 1
        %s754 = scalar_lea.sflag [#allocation3], %s753
        %s755 = sand.u32 %s54, 1
        %s756 = smul.addr %s755, 32
        %s757 = scalar_lea.vmem [#allocation2], %s756
        // Predicated region
        $region109: #{tpu_custom_call.1} parent=107 // pred_check
          %p758 = pneg %p67
        $region110: #{tpu_custom_call.1} parent=107 // pred_check_branch
          %760 = sbr.rel (%p758) target = $region112
        $region111: #{tpu_custom_call.1} parent=107 // pred_region
          %761 = dma.done %s754, 512
        $region112: #{tpu_custom_call.1} parent=107 // pred_fallthru
          _
        %s762 = sand.u32 %s46, 1
        %s763 = scalar_lea.sflag [#allocation6], %s762
        %s764 = sand.u32 %s80, 1
        %s765 = smul.addr %s764, 48
        %s766 = scalar_lea.vmem [#allocation5], %s765
        // Predicated region
        $region113: #{tpu_custom_call.1} parent=107 // pred_check
          %p767 = pneg %p93
        $region114: #{tpu_custom_call.1} parent=107 // pred_check_branch
          %769 = sbr.rel (%p767) target = $region116
        $region115: #{tpu_custom_call.1} parent=107 // pred_region
          %770 = dma.done %s763, 768
        $region116: #{tpu_custom_call.1} parent=107 // pred_fallthru
          _
        // Predicated region
        $region117: #{tpu_custom_call.1} parent=107 // pred_check
          %p771 = pneg %p114
        $region118: #{tpu_custom_call.1} parent=107 // pred_check_branch
          %773 = sbr.rel (%p771) target = $region120
        $region119: #{tpu_custom_call.1} parent=107 // pred_region
          %774 = dma.done [#allocation6], 32
        $region120: #{tpu_custom_call.1} parent=107 // pred_fallthru
          _
        // Predicated region
        $region121: #{tpu_custom_call.1} parent=107 // pred_check
          %p775 = pneg %p135
        $region122: #{tpu_custom_call.1} parent=107 // pred_check_branch
          %777 = sbr.rel (%p775) target = $region124
        $region123: #{tpu_custom_call.1} parent=107 // pred_region
          %778 = dma.done [#allocation9], 32
        $region124: #{tpu_custom_call.1} parent=107 // pred_fallthru
          _
        // Predicated region
        $region125: #{tpu_custom_call.1} parent=107 // pred_check
          %p779 = pneg %p156
        $region126: #{tpu_custom_call.1} parent=107 // pred_check_branch
          %781 = sbr.rel (%p779) target = $region128
        $region127: #{tpu_custom_call.1} parent=107 // pred_region
          %782 = dma.done [#allocation9], 12288
        $region128: #{tpu_custom_call.1} parent=107 // pred_fallthru
          _
        // Predicated region
        $region129: #{tpu_custom_call.1} parent=107 // pred_check
          %p783 = pneg %p198
        $region130: #{tpu_custom_call.1} parent=107 // pred_check_branch
          %785 = sbr.rel (%p783) target = $region132
        $region131: #{tpu_custom_call.1} parent=107 // pred_region
          %786 = dma.done [#allocation12], 4096
        $region132: #{tpu_custom_call.1} parent=107 // pred_fallthru
          _
        // Predicated region
        $region133: #{tpu_custom_call.1} parent=107 // pred_check
          %p787 = pneg %p282
        $region134: #{tpu_custom_call.1} parent=107 // pred_check_branch
          %789 = sbr.rel (%p787) target = $region136
        $region135: #{tpu_custom_call.1} parent=107 // pred_region
          %790 = dma.done [#allocation12], 4096
        $region136: #{tpu_custom_call.1} parent=107 // pred_fallthru
          _
        // Predicated region
        $region137: #{tpu_custom_call.1} parent=107 // pred_check
          %p791 = pneg %p324
        $region138: #{tpu_custom_call.1} parent=107 // pred_check_branch
          %793 = sbr.rel (%p791) target = $region140
        $region139: #{tpu_custom_call.1} parent=107 // pred_region
          %794 = dma.done [#allocation15], 8192
        $region140: #{tpu_custom_call.1} parent=107 // pred_fallthru
          _
        // Predicated region
        $region141: #{tpu_custom_call.1} parent=107 // pred_check
          %p795 = pneg %p366
        $region142: #{tpu_custom_call.1} parent=107 // pred_check_branch
          %797 = sbr.rel (%p795) target = $region144
        $region143: #{tpu_custom_call.1} parent=107 // pred_region
          %798 = dma.done [#allocation15], 4096
        $region144: #{tpu_custom_call.1} parent=107 // pred_fallthru
          _
        // Predicated region
        $region145: #{tpu_custom_call.1} parent=107 // pred_check
          %p799 = pneg %p450
        $region146: #{tpu_custom_call.1} parent=107 // pred_check_branch
          %801 = sbr.rel (%p799) target = $region148
        $region147: #{tpu_custom_call.1} parent=107 // pred_region
          %802 = dma.done [#allocation18], 8192
        $region148: #{tpu_custom_call.1} parent=107 // pred_fallthru
          _
        // Predicated region
        $region149: #{tpu_custom_call.1} parent=107 // pred_check
          %p803 = pneg %p492
        $region150: #{tpu_custom_call.1} parent=107 // pred_check_branch
          %805 = sbr.rel (%p803) target = $region152
        $region151: #{tpu_custom_call.1} parent=107 // pred_region
          %806 = dma.done [#allocation18], 8192
        $region152: #{tpu_custom_call.1} parent=107 // pred_fallthru
          _
        %s807 = sand.u32 %s54, 1
        %s808 = scalar_lea.sflag [#allocation3], %s807
        %s809 = sand.u32 %s54, 1
        %s810 = smul.addr %s809, 32
        %s811 = scalar_lea.vmem [#allocation2], %s810
        %p812 = pneg %p67
        %p813 = pneg %p64
        %s814 = sand.u32 %s46, 1
        %s815 = scalar_lea.sflag [#allocation6], %s814
        %s816 = sand.u32 %s80, 1
        %s817 = smul.addr %s816, 48
        %s818 = scalar_lea.vmem [#allocation5], %s817
        %p819 = pneg %p93
        %p820 = pneg %p90
        %p821 = pneg %p114
        %p822 = pneg %p111
        %p823 = pneg %p135
        %p824 = pneg %p132
        %p825 = pneg %p156
        %p826 = pneg %p153
        %p827 = pneg %p177
        %p828 = pneg %p174
        %p829 = pneg %p198
        %p830 = pneg %p195
        %p831 = pneg %p219
        %p832 = pneg %p216
        %p833 = pneg %p240
        %p834 = pneg %p237
        %p835 = pneg %p261
        %p836 = pneg %p258
        %p837 = pneg %p282
        %p838 = pneg %p279
        %p839 = pneg %p303
        %p840 = pneg %p300
        %p841 = pneg %p324
        %p842 = pneg %p321
        %p843 = pneg %p345
        %p844 = pneg %p342
        %p845 = pneg %p366
        %p846 = pneg %p363
        %p847 = pneg %p387
        %p848 = pneg %p384
        %p849 = pneg %p408
        %p850 = pneg %p405
        %p851 = pneg %p429
        %p852 = pneg %p426
        %p853 = pneg %p450
        %p854 = pneg %p447
        %p855 = pneg %p471
        %p856 = pneg %p468
        %p857 = pneg %p492
        %p858 = pneg %p489
        %p859 = pneg %p513
        %p860 = pneg %p510
        %p861 = pneg %p539
        %p862 = pneg %p536
        %s863 = sand.u32 %s526, 1
        %s864 = scalar_lea.sflag [#allocation4], %s863
        %s865 = sand.u32 %s526, 1
        %s866 = smul.addr %s865, 32
        %s867 = scalar_lea.vmem [#allocation20], %s866
        %v869 = vld [vmem:[%s757] sm:$0xff]
        %v870 = vld [vmem:[%s757 + $0x8] sm:$0xff]
        %v871 = vld [vmem:[%s757 + $0x10] sm:$0xff]
        %v872 = vld [vmem:[%s757 + $0x18] sm:$0xff]
        %v873 = vadd.f32 %v869, %v870
        %874 = vadd.xlane.f32.xlu0 %v873
        %v875 = vpop.xlane.xlu0 %874
        %v876 = vadd.f32 %v871, %v872
        %877 = vadd.xlane.f32.xlu0 %v876
        %v878 = vpop.xlane.xlu0 %877
        %v879 = vrcp.pop 256.0
        %v880 = vmul.f32 %v875, %v879
        %v881 = vmul.f32 %v878, %v879
        %v882 = vsub.f32 %v869, %v880
        %v883 = vsub.f32 %v870, %v880
        %v884 = vsub.f32 %v871, %v881
        %v885 = vsub.f32 %v872, %v881
        %v886 = vmul.f32 %v882, %v882
        %v887 = vmul.f32 %v883, %v883
        %v888 = vmul.f32 %v884, %v884
        %v889 = vmul.f32 %v885, %v885
        %v890 = vadd.f32 %v886, %v887
        %891 = vadd.xlane.f32.xlu0 %v890
        %v892 = vpop.xlane.xlu0 %891
        %v893 = vadd.f32 %v888, %v889
        %894 = vadd.xlane.f32.xlu0 %v893
        %v895 = vpop.xlane.xlu0 %894
        %v896 = vmul.f32 %v892, %v879
        %v897 = vmul.f32 %v895, %v879
        %v898 = vadd.f32 %v896, 1e-05
        %v899 = vadd.f32 %v897, 1e-05
        %v900 = vrsqrt.pop %v898
        %v901 = vrsqrt.pop %v899
        %v902 = vmul.f32 %v882, %v900
        %v903 = vmul.f32 %v883, %v900
        %v904 = vmul.f32 %v884, %v901
        %v905 = vmul.f32 %v885, %v901
        %v906 = vld [vmem:[#allocation7] sm:$0x3]
        %v908 = vlaneseq
        %v909 = vshrl.u32 %v908, 7
        %v910 = vsub.s32 0, %v909
        %v911 = vrot.slane %v906, %v910
        %v912 = vlaneseq
        %v913 = vshrl.u32 %v912, 7
        %v914 = vsub.s32 1, %v913
        %v915 = vrot.slane %v906, %v914
        %v918 = vmul.f32 %v902, %v911
        %v919 = vmul.f32 %v903, %v915
        %v920 = vmul.f32 %v904, %v911
        %v921 = vmul.f32 %v905, %v915
        %v922 = vld [vmem:[#allocation8] sm:$0x3]
        %v924 = vlaneseq
        %v925 = vshrl.u32 %v924, 7
        %v926 = vsub.s32 0, %v925
        %v927 = vrot.slane %v922, %v926
        %v928 = vlaneseq
        %v929 = vshrl.u32 %v928, 7
        %v930 = vsub.s32 1, %v929
        %v931 = vrot.slane %v922, %v930
        %v934 = vadd.f32 %v918, %v927
        %v935 = vadd.f32 %v919, %v931
        %v936 = vadd.f32 %v920, %v927
        %v937 = vadd.f32 %v921, %v931
        %v938 = vpack.c.bf16 %v936, %v934
        %v939 = vpack.c.bf16 %v937, %v935
        %v940 = vld [vmem:[#allocation10] sm:$0xff]
        %v941 = vld [vmem:[#allocation10 + $0x8] sm:$0xff]
        %v942 = vld [vmem:[#allocation10 + $0x10] sm:$0xff]
        %v943 = vld [vmem:[#allocation10 + $0x18] sm:$0xff]
        %v944 = vld [vmem:[#allocation10 + $0x20] sm:$0xff]
        %v945 = vld [vmem:[#allocation10 + $0x28] sm:$0xff]
        %v946 = vld [vmem:[#allocation10 + $0x30] sm:$0xff]
        %v947 = vld [vmem:[#allocation10 + $0x38] sm:$0xff]
        %v948 = vld [vmem:[#allocation10 + $0x40] sm:$0xff]
        %v949 = vld [vmem:[#allocation10 + $0x48] sm:$0xff]
        %v950 = vld [vmem:[#allocation10 + $0x50] sm:$0xff]
        %v951 = vld [vmem:[#allocation10 + $0x58] sm:$0xff]
        %v952 = vld [vmem:[#allocation10 + $0x60] sm:$0xff]
        %v953 = vld [vmem:[#allocation10 + $0x68] sm:$0xff]
        %v954 = vld [vmem:[#allocation10 + $0x70] sm:$0xff]
        %v955 = vld [vmem:[#allocation10 + $0x78] sm:$0xff]
        %v956 = vld [vmem:[#allocation10 + $0x80] sm:$0xff]
        %v957 = vld [vmem:[#allocation10 + $0x88] sm:$0xff]
        %v958 = vld [vmem:[#allocation10 + $0x90] sm:$0xff]
        %v959 = vld [vmem:[#allocation10 + $0x98] sm:$0xff]
        %v960 = vld [vmem:[#allocation10 + $0xa0] sm:$0xff]
        %v961 = vld [vmem:[#allocation10 + $0xa8] sm:$0xff]
        %v962 = vld [vmem:[#allocation10 + $0xb0] sm:$0xff]
        %v963 = vld [vmem:[#allocation10 + $0xb8] sm:$0xff]
        %v964 = vld [vmem:[#allocation10 + $0xc0] sm:$0xff]
        %v965 = vld [vmem:[#allocation10 + $0xc8] sm:$0xff]
        %v966 = vld [vmem:[#allocation10 + $0xd0] sm:$0xff]
        %v967 = vld [vmem:[#allocation10 + $0xd8] sm:$0xff]
        %v968 = vld [vmem:[#allocation10 + $0xe0] sm:$0xff]
        %v969 = vld [vmem:[#allocation10 + $0xe8] sm:$0xff]
        %v970 = vld [vmem:[#allocation10 + $0xf0] sm:$0xff]
        %v971 = vld [vmem:[#allocation10 + $0xf8] sm:$0xff]
        %v972 = vld [vmem:[#allocation10 + $0x100] sm:$0xff]
        %v973 = vld [vmem:[#allocation10 + $0x108] sm:$0xff]
        %v974 = vld [vmem:[#allocation10 + $0x110] sm:$0xff]
        %v975 = vld [vmem:[#allocation10 + $0x118] sm:$0xff]
        %v976 = vld [vmem:[#allocation10 + $0x120] sm:$0xff]
        %v977 = vld [vmem:[#allocation10 + $0x128] sm:$0xff]
        %v978 = vld [vmem:[#allocation10 + $0x130] sm:$0xff]
        %v979 = vld [vmem:[#allocation10 + $0x138] sm:$0xff]
        %v980 = vld [vmem:[#allocation10 + $0x140] sm:$0xff]
        %v981 = vld [vmem:[#allocation10 + $0x148] sm:$0xff]
        %v982 = vld [vmem:[#allocation10 + $0x150] sm:$0xff]
        %v983 = vld [vmem:[#allocation10 + $0x158] sm:$0xff]
        %v984 = vld [vmem:[#allocation10 + $0x160] sm:$0xff]
        %v985 = vld [vmem:[#allocation10 + $0x168] sm:$0xff]
        %v986 = vld [vmem:[#allocation10 + $0x170] sm:$0xff]
        %v987 = vld [vmem:[#allocation10 + $0x178] sm:$0xff]
        %v988 = vld [vmem:[#allocation10 + $0x180] sm:$0xff]
        %v989 = vld [vmem:[#allocation10 + $0x188] sm:$0xff]
        %v990 = vld [vmem:[#allocation10 + $0x190] sm:$0xff]
        %v991 = vld [vmem:[#allocation10 + $0x198] sm:$0xff]
        %v992 = vld [vmem:[#allocation10 + $0x1a0] sm:$0xff]
        %v993 = vld [vmem:[#allocation10 + $0x1a8] sm:$0xff]
        %v994 = vld [vmem:[#allocation10 + $0x1b0] sm:$0xff]
        %v995 = vld [vmem:[#allocation10 + $0x1b8] sm:$0xff]
        %v996 = vld [vmem:[#allocation10 + $0x1c0] sm:$0xff]
        %v997 = vld [vmem:[#allocation10 + $0x1c8] sm:$0xff]
        %v998 = vld [vmem:[#allocation10 + $0x1d0] sm:$0xff]
        %v999 = vld [vmem:[#allocation10 + $0x1d8] sm:$0xff]
        %v1000 = vld [vmem:[#allocation10 + $0x1e0] sm:$0xff]
        %v1001 = vld [vmem:[#allocation10 + $0x1e8] sm:$0xff]
        %v1002 = vld [vmem:[#allocation10 + $0x1f0] sm:$0xff]
        %v1003 = vld [vmem:[#allocation10 + $0x1f8] sm:$0xff]
        %v1004 = vld [vmem:[#allocation10 + $0x200] sm:$0xff]
        %v1005 = vld [vmem:[#allocation10 + $0x208] sm:$0xff]
        %v1006 = vld [vmem:[#allocation10 + $0x210] sm:$0xff]
        %v1007 = vld [vmem:[#allocation10 + $0x218] sm:$0xff]
        %v1008 = vld [vmem:[#allocation10 + $0x220] sm:$0xff]
        %v1009 = vld [vmem:[#allocation10 + $0x228] sm:$0xff]
        %v1010 = vld [vmem:[#allocation10 + $0x230] sm:$0xff]
        %v1011 = vld [vmem:[#allocation10 + $0x238] sm:$0xff]
        %v1012 = vld [vmem:[#allocation10 + $0x240] sm:$0xff]
        %v1013 = vld [vmem:[#allocation10 + $0x248] sm:$0xff]
        %v1014 = vld [vmem:[#allocation10 + $0x250] sm:$0xff]
        %v1015 = vld [vmem:[#allocation10 + $0x258] sm:$0xff]
        %v1016 = vld [vmem:[#allocation10 + $0x260] sm:$0xff]
        %v1017 = vld [vmem:[#allocation10 + $0x268] sm:$0xff]
        %v1018 = vld [vmem:[#allocation10 + $0x270] sm:$0xff]
        %v1019 = vld [vmem:[#allocation10 + $0x278] sm:$0xff]
        %v1020 = vld [vmem:[#allocation10 + $0x280] sm:$0xff]
        %v1021 = vld [vmem:[#allocation10 + $0x288] sm:$0xff]
        %v1022 = vld [vmem:[#allocation10 + $0x290] sm:$0xff]
        %v1023 = vld [vmem:[#allocation10 + $0x298] sm:$0xff]
        %v1024 = vld [vmem:[#allocation10 + $0x2a0] sm:$0xff]
        %v1025 = vld [vmem:[#allocation10 + $0x2a8] sm:$0xff]
        %v1026 = vld [vmem:[#allocation10 + $0x2b0] sm:$0xff]
        %v1027 = vld [vmem:[#allocation10 + $0x2b8] sm:$0xff]
        %v1028 = vld [vmem:[#allocation10 + $0x2c0] sm:$0xff]
        %v1029 = vld [vmem:[#allocation10 + $0x2c8] sm:$0xff]
        %v1030 = vld [vmem:[#allocation10 + $0x2d0] sm:$0xff]
        %v1031 = vld [vmem:[#allocation10 + $0x2d8] sm:$0xff]
        %v1032 = vld [vmem:[#allocation10 + $0x2e0] sm:$0xff]
        %v1033 = vld [vmem:[#allocation10 + $0x2e8] sm:$0xff]
        %v1034 = vld [vmem:[#allocation10 + $0x2f0] sm:$0xff]
        %v1035 = vld [vmem:[#allocation10 + $0x2f8] sm:$0xff]
        %v1036 = vld [vmem:[%s5] sm:$0x3f]
        %v1038 = vlaneseq
        %v1039 = vshrl.u32 %v1038, 7
        %v1040 = vsub.s32 0, %v1039
        %v1041 = vrot.slane %v1036, %v1040
        %v1042 = vlaneseq
        %v1043 = vshrl.u32 %v1042, 7
        %v1044 = vsub.s32 1, %v1043
        %v1045 = vrot.slane %v1036, %v1044
        %v1046 = vlaneseq
        %v1047 = vshrl.u32 %v1046, 7
        %v1048 = vsub.s32 2, %v1047
        %v1049 = vrot.slane %v1036, %v1048
        %v1050 = vlaneseq
        %v1051 = vshrl.u32 %v1050, 7
        %v1052 = vsub.s32 3, %v1051
        %v1053 = vrot.slane %v1036, %v1052
        %v1054 = vlaneseq
        %v1055 = vshrl.u32 %v1054, 7
        %v1056 = vsub.s32 4, %v1055
        %v1057 = vrot.slane %v1036, %v1056
        %v1058 = vlaneseq
        %v1059 = vshrl.u32 %v1058, 7
        %v1060 = vsub.s32 5, %v1059
        %v1061 = vrot.slane %v1036, %v1060
        %v1164 = vunpack.c.l.b16 %v940
        %v1165 = vunpack.c.h.b16 %v940
        %v1166 = vunpack.c.l.b16 %v941
        %v1167 = vunpack.c.h.b16 %v941
        %v1168 = vunpack.c.l.b16 %v942
        %v1169 = vunpack.c.h.b16 %v942
        %v1170 = vunpack.c.l.b16 %v943
        %v1171 = vunpack.c.h.b16 %v943
        %v1172 = vunpack.c.l.b16 %v944
        %v1173 = vunpack.c.h.b16 %v944
        %v1174 = vunpack.c.l.b16 %v945
        %v1175 = vunpack.c.h.b16 %v945
        %v1176 = vunpack.c.l.b16 %v946
        %v1177 = vunpack.c.h.b16 %v946
        %v1178 = vunpack.c.l.b16 %v947
        %v1179 = vunpack.c.h.b16 %v947
        %v1180 = vunpack.c.l.b16 %v948
        %v1181 = vunpack.c.h.b16 %v948
        %v1182 = vunpack.c.l.b16 %v949
        %v1183 = vunpack.c.h.b16 %v949
        %v1184 = vunpack.c.l.b16 %v950
        %v1185 = vunpack.c.h.b16 %v950
        %v1186 = vunpack.c.l.b16 %v951
        %v1187 = vunpack.c.h.b16 %v951
        %v1188 = vunpack.c.l.b16 %v952
        %v1189 = vunpack.c.h.b16 %v952
        %v1190 = vunpack.c.l.b16 %v953
        %v1191 = vunpack.c.h.b16 %v953
        %v1192 = vunpack.c.l.b16 %v954
        %v1193 = vunpack.c.h.b16 %v954
        %v1194 = vunpack.c.l.b16 %v955
        %v1195 = vunpack.c.h.b16 %v955
        %v1196 = vunpack.c.l.b16 %v956
        %v1197 = vunpack.c.h.b16 %v956
        %v1198 = vunpack.c.l.b16 %v957
        %v1199 = vunpack.c.h.b16 %v957
        %v1200 = vunpack.c.l.b16 %v958
        %v1201 = vunpack.c.h.b16 %v958
        %v1202 = vunpack.c.l.b16 %v959
        %v1203 = vunpack.c.h.b16 %v959
        %v1204 = vunpack.c.l.b16 %v960
        %v1205 = vunpack.c.h.b16 %v960
        %v1206 = vunpack.c.l.b16 %v961
        %v1207 = vunpack.c.h.b16 %v961
        %v1208 = vunpack.c.l.b16 %v962
        %v1209 = vunpack.c.h.b16 %v962
        %v1210 = vunpack.c.l.b16 %v963
        %v1211 = vunpack.c.h.b16 %v963
        %v1212 = vunpack.c.l.b16 %v964
        %v1213 = vunpack.c.h.b16 %v964
        %v1214 = vunpack.c.l.b16 %v965
        %v1215 = vunpack.c.h.b16 %v965
        %v1216 = vunpack.c.l.b16 %v966
        %v1217 = vunpack.c.h.b16 %v966
        %v1218 = vunpack.c.l.b16 %v967
        %v1219 = vunpack.c.h.b16 %v967
        %v1220 = vunpack.c.l.b16 %v968
        %v1221 = vunpack.c.h.b16 %v968
        %v1222 = vunpack.c.l.b16 %v969
        %v1223 = vunpack.c.h.b16 %v969
        %v1224 = vunpack.c.l.b16 %v970
        %v1225 = vunpack.c.h.b16 %v970
        %v1226 = vunpack.c.l.b16 %v971
        %v1227 = vunpack.c.h.b16 %v971
        %v1228 = vunpack.c.l.b16 %v972
        %v1229 = vunpack.c.h.b16 %v972
        %v1230 = vunpack.c.l.b16 %v973
        %v1231 = vunpack.c.h.b16 %v973
        %v1232 = vunpack.c.l.b16 %v974
        %v1233 = vunpack.c.h.b16 %v974
        %v1234 = vunpack.c.l.b16 %v975
        %v1235 = vunpack.c.h.b16 %v975
        %v1236 = vunpack.c.l.b16 %v976
        %v1237 = vunpack.c.h.b16 %v976
        %v1238 = vunpack.c.l.b16 %v977
        %v1239 = vunpack.c.h.b16 %v977
        %v1240 = vunpack.c.l.b16 %v978
        %v1241 = vunpack.c.h.b16 %v978
        %v1242 = vunpack.c.l.b16 %v979
        %v1243 = vunpack.c.h.b16 %v979
        %v1244 = vunpack.c.l.b16 %v980
        %v1245 = vunpack.c.h.b16 %v980
        %v1246 = vunpack.c.l.b16 %v981
        %v1247 = vunpack.c.h.b16 %v981
        %v1248 = vunpack.c.l.b16 %v982
        %v1249 = vunpack.c.h.b16 %v982
        %v1250 = vunpack.c.l.b16 %v983
        %v1251 = vunpack.c.h.b16 %v983
        %v1252 = vunpack.c.l.b16 %v984
        %v1253 = vunpack.c.h.b16 %v984
        %v1254 = vunpack.c.l.b16 %v985
        %v1255 = vunpack.c.h.b16 %v985
        %v1256 = vunpack.c.l.b16 %v986
        %v1257 = vunpack.c.h.b16 %v986
        %v1258 = vunpack.c.l.b16 %v987
        %v1259 = vunpack.c.h.b16 %v987
        %v1260 = vunpack.c.l.b16 %v988
        %v1261 = vunpack.c.h.b16 %v988
        %v1262 = vunpack.c.l.b16 %v989
        %v1263 = vunpack.c.h.b16 %v989
        %v1264 = vunpack.c.l.b16 %v990
        %v1265 = vunpack.c.h.b16 %v990
        %v1266 = vunpack.c.l.b16 %v991
        %v1267 = vunpack.c.h.b16 %v991
        %v1268 = vunpack.c.l.b16 %v992
        %v1269 = vunpack.c.h.b16 %v992
        %v1270 = vunpack.c.l.b16 %v993
        %v1271 = vunpack.c.h.b16 %v993
        %v1272 = vunpack.c.l.b16 %v994
        %v1273 = vunpack.c.h.b16 %v994
        %v1274 = vunpack.c.l.b16 %v995
        %v1275 = vunpack.c.h.b16 %v995
        %v1276 = vunpack.c.l.b16 %v996
        %v1277 = vunpack.c.h.b16 %v996
        %v1278 = vunpack.c.l.b16 %v997
        %v1279 = vunpack.c.h.b16 %v997
        %v1280 = vunpack.c.l.b16 %v998
        %v1281 = vunpack.c.h.b16 %v998
        %v1282 = vunpack.c.l.b16 %v999
        %v1283 = vunpack.c.h.b16 %v999
        %v1284 = vunpack.c.l.b16 %v1000
        %v1285 = vunpack.c.h.b16 %v1000
        %v1286 = vunpack.c.l.b16 %v1001
        %v1287 = vunpack.c.h.b16 %v1001
        %v1288 = vunpack.c.l.b16 %v1002
        %v1289 = vunpack.c.h.b16 %v1002
        %v1290 = vunpack.c.l.b16 %v1003
        %v1291 = vunpack.c.h.b16 %v1003
        %v1292 = vunpack.c.l.b16 %v1004
        %v1293 = vunpack.c.h.b16 %v1004
        %v1294 = vunpack.c.l.b16 %v1005
        %v1295 = vunpack.c.h.b16 %v1005
        %v1296 = vunpack.c.l.b16 %v1006
        %v1297 = vunpack.c.h.b16 %v1006
        %v1298 = vunpack.c.l.b16 %v1007
        %v1299 = vunpack.c.h.b16 %v1007
        %v1300 = vunpack.c.l.b16 %v1008
        %v1301 = vunpack.c.h.b16 %v1008
        %v1302 = vunpack.c.l.b16 %v1009
        %v1303 = vunpack.c.h.b16 %v1009
        %v1304 = vunpack.c.l.b16 %v1010
        %v1305 = vunpack.c.h.b16 %v1010
        %v1306 = vunpack.c.l.b16 %v1011
        %v1307 = vunpack.c.h.b16 %v1011
        %v1308 = vunpack.c.l.b16 %v1012
        %v1309 = vunpack.c.h.b16 %v1012
        %v1310 = vunpack.c.l.b16 %v1013
        %v1311 = vunpack.c.h.b16 %v1013
        %v1312 = vunpack.c.l.b16 %v1014
        %v1313 = vunpack.c.h.b16 %v1014
        %v1314 = vunpack.c.l.b16 %v1015
        %v1315 = vunpack.c.h.b16 %v1015
        %v1316 = vunpack.c.l.b16 %v1016
        %v1317 = vunpack.c.h.b16 %v1016
        %v1318 = vunpack.c.l.b16 %v1017
        %v1319 = vunpack.c.h.b16 %v1017
        %v1320 = vunpack.c.l.b16 %v1018
        %v1321 = vunpack.c.h.b16 %v1018
        %v1322 = vunpack.c.l.b16 %v1019
        %v1323 = vunpack.c.h.b16 %v1019
        %v1324 = vunpack.c.l.b16 %v1020
        %v1325 = vunpack.c.h.b16 %v1020
        %v1326 = vunpack.c.l.b16 %v1021
        %v1327 = vunpack.c.h.b16 %v1021
        %v1328 = vunpack.c.l.b16 %v1022
        %v1329 = vunpack.c.h.b16 %v1022
        %v1330 = vunpack.c.l.b16 %v1023
        %v1331 = vunpack.c.h.b16 %v1023
        %v1332 = vunpack.c.l.b16 %v1024
        %v1333 = vunpack.c.h.b16 %v1024
        %v1334 = vunpack.c.l.b16 %v1025
        %v1335 = vunpack.c.h.b16 %v1025
        %v1336 = vunpack.c.l.b16 %v1026
        %v1337 = vunpack.c.h.b16 %v1026
        %v1338 = vunpack.c.l.b16 %v1027
        %v1339 = vunpack.c.h.b16 %v1027
        %v1340 = vunpack.c.l.b16 %v1028
        %v1341 = vunpack.c.h.b16 %v1028
        %v1342 = vunpack.c.l.b16 %v1029
        %v1343 = vunpack.c.h.b16 %v1029
        %v1344 = vunpack.c.l.b16 %v1030
        %v1345 = vunpack.c.h.b16 %v1030
        %v1346 = vunpack.c.l.b16 %v1031
        %v1347 = vunpack.c.h.b16 %v1031
        %v1348 = vunpack.c.l.b16 %v1032
        %v1349 = vunpack.c.h.b16 %v1032
        %v1350 = vunpack.c.l.b16 %v1033
        %v1351 = vunpack.c.h.b16 %v1033
        %v1352 = vunpack.c.l.b16 %v1034
        %v1353 = vunpack.c.h.b16 %v1034
        %v1354 = vunpack.c.l.b16 %v1035
        %v1355 = vunpack.c.h.b16 %v1035
        %v1356 = vpack.c.b16 %v1170, %v1164
        %v1357 = vpack.c.b16 %v1171, %v1165
        %v1358 = vpack.c.b16 %v1172, %v1166
        %v1359 = vpack.c.b16 %v1173, %v1167
        %v1360 = vpack.c.b16 %v1174, %v1168
        %v1361 = vpack.c.b16 %v1175, %v1169
        %v1362 = vpack.c.b16 %v1182, %v1176
        %v1363 = vpack.c.b16 %v1183, %v1177
        %v1364 = vpack.c.b16 %v1184, %v1178
        %v1365 = vpack.c.b16 %v1185, %v1179
        %v1366 = vpack.c.b16 %v1186, %v1180
        %v1367 = vpack.c.b16 %v1187, %v1181
        %v1368 = vpack.c.b16 %v1194, %v1188
        %v1369 = vpack.c.b16 %v1195, %v1189
        %v1370 = vpack.c.b16 %v1196, %v1190
        %v1371 = vpack.c.b16 %v1197, %v1191
        %v1372 = vpack.c.b16 %v1198, %v1192
        %v1373 = vpack.c.b16 %v1199, %v1193
        %v1374 = vpack.c.b16 %v1206, %v1200
        %v1375 = vpack.c.b16 %v1207, %v1201
        %v1376 = vpack.c.b16 %v1208, %v1202
        %v1377 = vpack.c.b16 %v1209, %v1203
        %v1378 = vpack.c.b16 %v1210, %v1204
        %v1379 = vpack.c.b16 %v1211, %v1205
        %v1380 = vpack.c.b16 %v1218, %v1212
        %v1381 = vpack.c.b16 %v1219, %v1213
        %v1382 = vpack.c.b16 %v1220, %v1214
        %v1383 = vpack.c.b16 %v1221, %v1215
        %v1384 = vpack.c.b16 %v1222, %v1216
        %v1385 = vpack.c.b16 %v1223, %v1217
        %v1386 = vpack.c.b16 %v1230, %v1224
        %v1387 = vpack.c.b16 %v1231, %v1225
        %v1388 = vpack.c.b16 %v1232, %v1226
        %v1389 = vpack.c.b16 %v1233, %v1227
        %v1390 = vpack.c.b16 %v1234, %v1228
        %v1391 = vpack.c.b16 %v1235, %v1229
        %v1392 = vpack.c.b16 %v1242, %v1236
        %v1393 = vpack.c.b16 %v1243, %v1237
        %v1394 = vpack.c.b16 %v1244, %v1238
        %v1395 = vpack.c.b16 %v1245, %v1239
        %v1396 = vpack.c.b16 %v1246, %v1240
        %v1397 = vpack.c.b16 %v1247, %v1241
        %v1398 = vpack.c.b16 %v1254, %v1248
        %v1399 = vpack.c.b16 %v1255, %v1249
        %v1400 = vpack.c.b16 %v1256, %v1250
        %v1401 = vpack.c.b16 %v1257, %v1251
        %v1402 = vpack.c.b16 %v1258, %v1252
        %v1403 = vpack.c.b16 %v1259, %v1253
        %v1404 = vpack.c.b16 %v1266, %v1260
        %v1405 = vpack.c.b16 %v1267, %v1261
        %v1406 = vpack.c.b16 %v1268, %v1262
        %v1407 = vpack.c.b16 %v1269, %v1263
        %v1408 = vpack.c.b16 %v1270, %v1264
        %v1409 = vpack.c.b16 %v1271, %v1265
        %v1410 = vpack.c.b16 %v1278, %v1272
        %v1411 = vpack.c.b16 %v1279, %v1273
        %v1412 = vpack.c.b16 %v1280, %v1274
        %v1413 = vpack.c.b16 %v1281, %v1275
        %v1414 = vpack.c.b16 %v1282, %v1276
        %v1415 = vpack.c.b16 %v1283, %v1277
        %v1416 = vpack.c.b16 %v1290, %v1284
        %v1417 = vpack.c.b16 %v1291, %v1285
        %v1418 = vpack.c.b16 %v1292, %v1286
        %v1419 = vpack.c.b16 %v1293, %v1287
        %v1420 = vpack.c.b16 %v1294, %v1288
        %v1421 = vpack.c.b16 %v1295, %v1289
        %v1422 = vpack.c.b16 %v1302, %v1296
        %v1423 = vpack.c.b16 %v1303, %v1297
        %v1424 = vpack.c.b16 %v1304, %v1298
        %v1425 = vpack.c.b16 %v1305, %v1299
        %v1426 = vpack.c.b16 %v1306, %v1300
        %v1427 = vpack.c.b16 %v1307, %v1301
        %v1428 = vpack.c.b16 %v1314, %v1308
        %v1429 = vpack.c.b16 %v1315, %v1309
        %v1430 = vpack.c.b16 %v1316, %v1310
        %v1431 = vpack.c.b16 %v1317, %v1311
        %v1432 = vpack.c.b16 %v1318, %v1312
        %v1433 = vpack.c.b16 %v1319, %v1313
        %v1434 = vpack.c.b16 %v1326, %v1320
        %v1435 = vpack.c.b16 %v1327, %v1321
        %v1436 = vpack.c.b16 %v1328, %v1322
        %v1437 = vpack.c.b16 %v1329, %v1323
        %v1438 = vpack.c.b16 %v1330, %v1324
        %v1439 = vpack.c.b16 %v1331, %v1325
        %v1440 = vpack.c.b16 %v1338, %v1332
        %v1441 = vpack.c.b16 %v1339, %v1333
        %v1442 = vpack.c.b16 %v1340, %v1334
        %v1443 = vpack.c.b16 %v1341, %v1335
        %v1444 = vpack.c.b16 %v1342, %v1336
        %v1445 = vpack.c.b16 %v1343, %v1337
        %v1446 = vpack.c.b16 %v1350, %v1344
        %v1447 = vpack.c.b16 %v1351, %v1345
        %v1448 = vpack.c.b16 %v1352, %v1346
        %v1449 = vpack.c.b16 %v1353, %v1347
        %v1450 = vpack.c.b16 %v1354, %v1348
        %v1451 = vpack.c.b16 %v1355, %v1349
        %1548 = vmatprep.subr.bf16.mxu0 %v1357
        %1549 = vmatpush1.bf16.msra.mxu0 %v1356
        %1550 = vmatprep.subr.bf16.mxu0 %v1363
        %1551 = vmatpush1.bf16.msra.mxu0 %v1362
        %1552 = vmatprep.subr.bf16.mxu0 %v1369
        %1553 = vmatpush1.bf16.msra.mxu0 %v1368
        %1554 = vmatprep.subr.bf16.mxu0 %v1375
        %1555 = vmatpush1.bf16.msra.mxu0 %v1374
        %1556 = vmatprep.subr.bf16.mxu0 %v1381
        %1557 = vmatpush1.bf16.msra.mxu0 %v1380
        %1558 = vmatprep.subr.bf16.mxu0 %v1387
        %1559 = vmatpush1.bf16.msra.mxu0 %v1386
        %1560 = vmatprep.subr.bf16.mxu0 %v1393
        %1561 = vmatpush1.bf16.msra.mxu0 %v1392
        %1562 = vmatprep.subr.bf16.mxu0 %v1399
        %1563 = vmatpush1.bf16.msra.mxu0 %v1398
        %1564 = vmatprep.subr.bf16.mxu0 %v1405
        %1565 = vmatpush1.bf16.msra.mxu0 %v1404
        %1566 = vmatprep.subr.bf16.mxu0 %v1411
        %1567 = vmatpush1.bf16.msra.mxu0 %v1410
        %1568 = vmatprep.subr.bf16.mxu0 %v1417
        %1569 = vmatpush1.bf16.msra.mxu0 %v1416
        %1570 = vmatprep.subr.bf16.mxu0 %v1423
        %1571 = vmatpush1.bf16.msra.mxu0 %v1422
        %1572 = vmatprep.subr.bf16.mxu0 %v1429
        %1573 = vmatpush1.bf16.msra.mxu0 %v1428
        %1574 = vmatprep.subr.bf16.mxu0 %v1435
        %1575 = vmatpush1.bf16.msra.mxu0 %v1434
        %1576 = vmatprep.subr.bf16.mxu0 %v1441
        %1577 = vmatpush1.bf16.msra.mxu0 %v1440
        %1578 = vmatprep.subr.bf16.mxu0 %v1447
        %1579 = vmatpush1.bf16.msra.mxu0 %v1446
        %1580 = vmatprep.mubr.bf16.mxu0 %v939
        %1581 = vmatmul.mubr.bf16.gmra.mrb[0].mxu0 %v938
        %v1582 = vpop.f32.mrb[0].mxu0
        %v1583 = vadd.f32 %v1041, %v1582
        %v1584 = vpop.f32.mrb[0].mxu0
        %v1585 = vadd.f32 %v1045, %v1584
        %v1586 = vpop.f32.mrb[0].mxu0
        %v1587 = vadd.f32 %v1041, %v1586
        %v1588 = vpop.f32.mrb[0].mxu0
        %v1589 = vadd.f32 %v1045, %v1588
        %1590 = vdwg.mxu0
        %1591 = vmatprep.subr.bf16.mxu0 %v1359
        %1592 = vmatpush1.bf16.msra.mxu0 %v1358
        %1593 = vmatprep.subr.bf16.mxu0 %v1365
        %1594 = vmatpush1.bf16.msra.mxu0 %v1364
        %1595 = vmatprep.subr.bf16.mxu0 %v1371
        %1596 = vmatpush1.bf16.msra.mxu0 %v1370
        %1597 = vmatprep.subr.bf16.mxu0 %v1377
        %1598 = vmatpush1.bf16.msra.mxu0 %v1376
        %1599 = vmatprep.subr.bf16.mxu0 %v1383
        %1600 = vmatpush1.bf16.msra.mxu0 %v1382
        %1601 = vmatprep.subr.bf16.mxu0 %v1389
        %1602 = vmatpush1.bf16.msra.mxu0 %v1388
        %1603 = vmatprep.subr.bf16.mxu0 %v1395
        %1604 = vmatpush1.bf16.msra.mxu0 %v1394
        %1605 = vmatprep.subr.bf16.mxu0 %v1401
        %1606 = vmatpush1.bf16.msra.mxu0 %v1400
        %1607 = vmatprep.subr.bf16.mxu0 %v1407
        %1608 = vmatpush1.bf16.msra.mxu0 %v1406
        %1609 = vmatprep.subr.bf16.mxu0 %v1413
        %1610 = vmatpush1.bf16.msra.mxu0 %v1412
        %1611 = vmatprep.subr.bf16.mxu0 %v1419
        %1612 = vmatpush1.bf16.msra.mxu0 %v1418
        %1613 = vmatprep.subr.bf16.mxu0 %v1425
        %1614 = vmatpush1.bf16.msra.mxu0 %v1424
        %1615 = vmatprep.subr.bf16.mxu0 %v1431
        %1616 = vmatpush1.bf16.msra.mxu0 %v1430
        %1617 = vmatprep.subr.bf16.mxu0 %v1437
        %1618 = vmatpush1.bf16.msra.mxu0 %v1436
        %1619 = vmatprep.subr.bf16.mxu0 %v1443
        %1620 = vmatpush1.bf16.msra.mxu0 %v1442
        %1621 = vmatprep.subr.bf16.mxu0 %v1449
        %1622 = vmatpush1.bf16.msra.mxu0 %v1448
        %1623 = vmatprep.mubr.bf16.mxu0 %v939
        %1624 = vmatmul.mubr.bf16.gmra.mrb[0].mxu0 %v938
        %v1625 = vpop.f32.mrb[0].mxu0
        %v1626 = vadd.f32 %v1049, %v1625
        %v1627 = vpop.f32.mrb[0].mxu0
        %v1628 = vadd.f32 %v1053, %v1627
        %v1629 = vpop.f32.mrb[0].mxu0
        %v1630 = vadd.f32 %v1049, %v1629
        %v1631 = vpop.f32.mrb[0].mxu0
        %v1632 = vadd.f32 %v1053, %v1631
        %1633 = vdwg.mxu0
        %1634 = vmatprep.subr.bf16.mxu0 %v1361
        %1635 = vmatpush1.bf16.msra.mxu0 %v1360
        %1636 = vmatprep.subr.bf16.mxu0 %v1367
        %1637 = vmatpush1.bf16.msra.mxu0 %v1366
        %1638 = vmatprep.subr.bf16.mxu0 %v1373
        %1639 = vmatpush1.bf16.msra.mxu0 %v1372
        %1640 = vmatprep.subr.bf16.mxu0 %v1379
        %1641 = vmatpush1.bf16.msra.mxu0 %v1378
        %1642 = vmatprep.subr.bf16.mxu0 %v1385
        %1643 = vmatpush1.bf16.msra.mxu0 %v1384
        %1644 = vmatprep.subr.bf16.mxu0 %v1391
        %1645 = vmatpush1.bf16.msra.mxu0 %v1390
        %1646 = vmatprep.subr.bf16.mxu0 %v1397
        %1647 = vmatpush1.bf16.msra.mxu0 %v1396
        %1648 = vmatprep.subr.bf16.mxu0 %v1403
        %1649 = vmatpush1.bf16.msra.mxu0 %v1402
        %1650 = vmatprep.subr.bf16.mxu0 %v1409
        %1651 = vmatpush1.bf16.msra.mxu0 %v1408
        %1652 = vmatprep.subr.bf16.mxu0 %v1415
        %1653 = vmatpush1.bf16.msra.mxu0 %v1414
        %1654 = vmatprep.subr.bf16.mxu0 %v1421
        %1655 = vmatpush1.bf16.msra.mxu0 %v1420
        %1656 = vmatprep.subr.bf16.mxu0 %v1427
        %1657 = vmatpush1.bf16.msra.mxu0 %v1426
        %1658 = vmatprep.subr.bf16.mxu0 %v1433
        %1659 = vmatpush1.bf16.msra.mxu0 %v1432
        %1660 = vmatprep.subr.bf16.mxu0 %v1439
        %1661 = vmatpush1.bf16.msra.mxu0 %v1438
        %1662 = vmatprep.subr.bf16.mxu0 %v1445
        %1663 = vmatpush1.bf16.msra.mxu0 %v1444
        %1664 = vmatprep.subr.bf16.mxu0 %v1451
        %1665 = vmatpush1.bf16.msra.mxu0 %v1450
        %1666 = vmatprep.mubr.bf16.mxu0 %v939
        %1667 = vmatmul.mubr.bf16.gmra.mrb[0].mxu0 %v938
        %v1668 = vpop.f32.mrb[0].mxu0
        %v1669 = vadd.f32 %v1057, %v1668
        %v1670 = vpop.f32.mrb[0].mxu0
        %v1671 = vadd.f32 %v1061, %v1670
        %v1672 = vpop.f32.mrb[0].mxu0
        %v1673 = vadd.f32 %v1057, %v1672
        %v1674 = vpop.f32.mrb[0].mxu0
        %v1675 = vadd.f32 %v1061, %v1674
        %1676 = vdwg.mxu0
        %v1677 = vpack.c.bf16 %v1587, %v1583
        %v1678 = vpack.c.bf16 %v1630, %v1626
        %v1679 = vpack.c.bf16 %v1673, %v1669
        %1680 = vmatprep.subr.bf16.mxu0 0
        %1681 = vmatpush1.bf16.xpose.msra.mxu0 %v1678
        %1682 = vmatprep.subr.bf16.mxu0 0
        %1683 = vmatpush1.bf16.xpose.msra.mxu0 0
        %1684 = vmatprep.subr.bf16.mxu0 0
        %1685 = vmatpush1.bf16.xpose.msra.mxu0 0
        %1686 = vmatprep.subr.bf16.mxu0 0
        %1687 = vmatpush1.bf16.xpose.msra.mxu0 0
        %1688 = vmatprep.subr.bf16.mxu0 0
        %1689 = vmatpush1.bf16.xpose.msra.mxu0 0
        %1690 = vmatprep.subr.bf16.mxu0 0
        %1691 = vmatpush1.bf16.xpose.msra.mxu0 0
        %1692 = vmatprep.subr.bf16.mxu0 0
        %1693 = vmatpush1.bf16.xpose.msra.mxu0 0
        %1694 = vmatprep.subr.bf16.mxu0 0
        %1695 = vmatpush1.bf16.xpose.msra.mxu0 0
        %1696 = vmatprep.subr.bf16.mxu0 0
        %1697 = vmatpush1.bf16.xpose.msra.mxu0 0
        %1698 = vmatprep.subr.bf16.mxu0 0
        %1699 = vmatpush1.bf16.xpose.msra.mxu0 0
        %1700 = vmatprep.subr.bf16.mxu0 0
        %1701 = vmatpush1.bf16.xpose.msra.mxu0 0
        %1702 = vmatprep.subr.bf16.mxu0 0
        %1703 = vmatpush1.bf16.xpose.msra.mxu0 0
        %1704 = vmatprep.subr.bf16.mxu0 0
        %1705 = vmatpush1.bf16.xpose.msra.mxu0 0
        %1706 = vmatprep.subr.bf16.mxu0 0
        %1707 = vmatpush1.bf16.xpose.msra.mxu0 0
        %1708 = vmatprep.subr.bf16.mxu0 0
        %1709 = vmatpush1.bf16.xpose.msra.mxu0 0
        %1710 = vmatprep.subr.bf16.mxu0 0
        %1711 = vmatpush1.bf16.xpose.msra.mxu0 0
        %1712 = vmatprep.mubr.bf16.mxu0 0
        %1713 = vmatmul.mubr.bf16.gmra.mrb[0].mxu0 %v1677
        %v1714 = vpop.f32.mrb[0].mxu0
        %v1715 = vadd.f32 0.0, %v1714
        %v1716 = vpop.f32.mrb[0].mxu0
        %v1717 = vpop.f32.mrb[0].mxu0
        %v1718 = vadd.f32 0.0, %v1717
        %v1719 = vpop.f32.mrb[0].mxu0
        %1720 = vdwg.mxu0
        %v1721 = vmul.f32 %v1715, 0.088388346
        %v1722 = vmul.f32 %v1718, 0.088388346
        %vm1723 = vcmask 130048
        %v1724 = vsel %vm1723, %v1721, -inf
        %1725 = vmax.xlane.f32.xlu0 %v1724
        %v1726 = vpop.xlane.xlu0 %1725
        %v1727 = vsel %vm1723, %v1722, -inf
        %1728 = vmax.xlane.f32.xlu0 %v1727
        %v1729 = vpop.xlane.xlu0 %1728
        %v1730 = vsub.f32 %v1721, %v1726
        %v1731 = vsub.f32 %v1722, %v1729
        %v1732 = vmul.f32 %v1730, 1.442695
        %v1733 = vpow.pop %v1732
        %v1734 = vmul.f32 %v1731, 1.442695
        %v1735 = vpow.pop %v1734
        %v1736 = vsel %vm1723, %v1733, 0.0
        %1737 = vadd.xlane.f32.xlu0 %v1736
        %v1738 = vpop.xlane.xlu0 %1737
        %v1739 = vsel %vm1723, %v1735, 0.0
        %1740 = vadd.xlane.f32.xlu0 %v1739
        %v1741 = vpop.xlane.xlu0 %1740
        %v1742 = vrcp.pop %v1738
        %v1743 = vrcp.pop %v1741
        %v1744 = vmul.f32 %v1733, %v1742
        %v1745 = vmul.f32 %v1735, %v1743
        %v1746 = vpack.c.bf16 %v1745, %v1744
        %v1748 = vsel %vm1723, %v1746, 0
        %1750 = vmatprep.subr.bf16.mxu0 0
        %1751 = vmatpush1.bf16.msra.mxu0 %v1679
        %1752 = vmatprep.subr.bf16.mxu0 0
        %1753 = vmatpush1.bf16.msra.mxu0 0
        %1754 = vmatprep.subr.bf16.mxu0 0
        %1755 = vmatpush1.bf16.msra.mxu0 0
        %1756 = vmatprep.subr.bf16.mxu0 0
        %1757 = vmatpush1.bf16.msra.mxu0 0
        %1758 = vmatprep.subr.bf16.mxu0 0
        %1759 = vmatpush1.bf16.msra.mxu0 0
        %1760 = vmatprep.subr.bf16.mxu0 0
        %1761 = vmatpush1.bf16.msra.mxu0 0
        %1762 = vmatprep.subr.bf16.mxu0 0
        %1763 = vmatpush1.bf16.msra.mxu0 0
        %1764 = vmatprep.subr.bf16.mxu0 0
        %1765 = vmatpush1.bf16.msra.mxu0 0
        %1766 = vmatprep.subr.bf16.mxu0 0
        %1767 = vmatpush1.bf16.msra.mxu0 0
        %1768 = vmatprep.subr.bf16.mxu0 0
        %1769 = vmatpush1.bf16.msra.mxu0 0
        %1770 = vmatprep.subr.bf16.mxu0 0
        %1771 = vmatpush1.bf16.msra.mxu0 0
        %1772 = vmatprep.subr.bf16.mxu0 0
        %1773 = vmatpush1.bf16.msra.mxu0 0
        %1774 = vmatprep.subr.bf16.mxu0 0
        %1775 = vmatpush1.bf16.msra.mxu0 0
        %1776 = vmatprep.subr.bf16.mxu0 0
        %1777 = vmatpush1.bf16.msra.mxu0 0
        %1778 = vmatprep.subr.bf16.mxu0 0
        %1779 = vmatpush1.bf16.msra.mxu0 0
        %1780 = vmatprep.subr.bf16.mxu0 0
        %1781 = vmatpush1.bf16.msra.mxu0 0
        %1782 = vmatprep.mubr.bf16.mxu0 0
        %1783 = vmatmul.mubr.bf16.gmra.mrb[0].mxu0 %v1748
        %v1784 = vpop.f32.mrb[0].mxu0
        %v1785 = vadd.f32 0.0, %v1784
        %v1786 = vpop.f32.mrb[0].mxu0
        %v1787 = vpop.f32.mrb[0].mxu0
        %v1788 = vadd.f32 0.0, %v1787
        %v1789 = vpop.f32.mrb[0].mxu0
        %1790 = vdwg.mxu0
        %v1791 = vpack.c.bf16 %v1788, %v1785
        %v1792 = vld [vmem:[#allocation11] sm:$0xff]
        %v1793 = vld [vmem:[#allocation11 + $0x8] sm:$0xff]
        %v1794 = vld [vmem:[#allocation11 + $0x10] sm:$0xff]
        %v1795 = vld [vmem:[#allocation11 + $0x18] sm:$0xff]
        %v1796 = vld [vmem:[#allocation11 + $0x20] sm:$0xff]
        %v1797 = vld [vmem:[#allocation11 + $0x28] sm:$0xff]
        %v1798 = vld [vmem:[#allocation11 + $0x30] sm:$0xff]
        %v1799 = vld [vmem:[#allocation11 + $0x38] sm:$0xff]
        %v1800 = vld [vmem:[#allocation11 + $0x40] sm:$0xff]
        %v1801 = vld [vmem:[#allocation11 + $0x48] sm:$0xff]
        %v1802 = vld [vmem:[#allocation11 + $0x50] sm:$0xff]
        %v1803 = vld [vmem:[#allocation11 + $0x58] sm:$0xff]
        %v1804 = vld [vmem:[#allocation11 + $0x60] sm:$0xff]
        %v1805 = vld [vmem:[#allocation11 + $0x68] sm:$0xff]
        %v1806 = vld [vmem:[#allocation11 + $0x70] sm:$0xff]
        %v1807 = vld [vmem:[#allocation11 + $0x78] sm:$0xff]
        %v1808 = vpack.c.bf16 %v1589, %v1585
        %v1809 = vpack.c.bf16 %v1632, %v1628
        %v1810 = vpack.c.bf16 %v1675, %v1671
        %1811 = vmatprep.subr.bf16.mxu0 0
        %1812 = vmatpush1.bf16.xpose.msra.mxu0 %v1809
        %1813 = vmatprep.subr.bf16.mxu0 0
        %1814 = vmatpush1.bf16.xpose.msra.mxu0 0
        %1815 = vmatprep.subr.bf16.mxu0 0
        %1816 = vmatpush1.bf16.xpose.msra.mxu0 0
        %1817 = vmatprep.subr.bf16.mxu0 0
        %1818 = vmatpush1.bf16.xpose.msra.mxu0 0
        %1819 = vmatprep.subr.bf16.mxu0 0
        %1820 = vmatpush1.bf16.xpose.msra.mxu0 0
        %1821 = vmatprep.subr.bf16.mxu0 0
        %1822 = vmatpush1.bf16.xpose.msra.mxu0 0
        %1823 = vmatprep.subr.bf16.mxu0 0
        %1824 = vmatpush1.bf16.xpose.msra.mxu0 0
        %1825 = vmatprep.subr.bf16.mxu0 0
        %1826 = vmatpush1.bf16.xpose.msra.mxu0 0
        %1827 = vmatprep.subr.bf16.mxu0 0
        %1828 = vmatpush1.bf16.xpose.msra.mxu0 0
        %1829 = vmatprep.subr.bf16.mxu0 0
        %1830 = vmatpush1.bf16.xpose.msra.mxu0 0
        %1831 = vmatprep.subr.bf16.mxu0 0
        %1832 = vmatpush1.bf16.xpose.msra.mxu0 0
        %1833 = vmatprep.subr.bf16.mxu0 0
        %1834 = vmatpush1.bf16.xpose.msra.mxu0 0
        %1835 = vmatprep.subr.bf16.mxu0 0
        %1836 = vmatpush1.bf16.xpose.msra.mxu0 0
        %1837 = vmatprep.subr.bf16.mxu0 0
        %1838 = vmatpush1.bf16.xpose.msra.mxu0 0
        %1839 = vmatprep.subr.bf16.mxu0 0
        %1840 = vmatpush1.bf16.xpose.msra.mxu0 0
        %1841 = vmatprep.subr.bf16.mxu0 0
        %1842 = vmatpush1.bf16.xpose.msra.mxu0 0
        %1843 = vmatprep.mubr.bf16.mxu0 0
        %1844 = vmatmul.mubr.bf16.gmra.mrb[0].mxu0 %v1808
        %v1845 = vpop.f32.mrb[0].mxu0
        %v1846 = vadd.f32 0.0, %v1845
        %v1847 = vpop.f32.mrb[0].mxu0
        %v1848 = vpop.f32.mrb[0].mxu0
        %v1849 = vadd.f32 0.0, %v1848
        %v1850 = vpop.f32.mrb[0].mxu0
        %1851 = vdwg.mxu0
        %v1852 = vmul.f32 %v1846, 0.088388346
        %v1853 = vmul.f32 %v1849, 0.088388346
        %v1854 = vsel %vm1723, %v1852, -inf
        %1855 = vmax.xlane.f32.xlu0 %v1854
        %v1856 = vpop.xlane.xlu0 %1855
        %v1857 = vsel %vm1723, %v1853, -inf
        %1858 = vmax.xlane.f32.xlu0 %v1857
        %v1859 = vpop.xlane.xlu0 %1858
        %v1860 = vsub.f32 %v1852, %v1856
        %v1861 = vsub.f32 %v1853, %v1859
        %v1862 = vmul.f32 %v1860, 1.442695
        %v1863 = vpow.pop %v1862
        %v1864 = vmul.f32 %v1861, 1.442695
        %v1865 = vpow.pop %v1864
        %v1866 = vsel %vm1723, %v1863, 0.0
        %1867 = vadd.xlane.f32.xlu0 %v1866
        %v1868 = vpop.xlane.xlu0 %1867
        %v1869 = vsel %vm1723, %v1865, 0.0
        %1870 = vadd.xlane.f32.xlu0 %v1869
        %v1871 = vpop.xlane.xlu0 %1870
        %v1872 = vrcp.pop %v1868
        %v1873 = vrcp.pop %v1871
        %v1874 = vmul.f32 %v1863, %v1872
        %v1875 = vmul.f32 %v1865, %v1873
        %v1876 = vpack.c.bf16 %v1875, %v1874
        %v1878 = vsel %vm1723, %v1876, 0
        %1880 = vmatprep.subr.bf16.mxu0 0
        %1881 = vmatpush1.bf16.msra.mxu0 %v1810
        %1882 = vmatprep.subr.bf16.mxu0 0
        %1883 = vmatpush1.bf16.msra.mxu0 0
        %1884 = vmatprep.subr.bf16.mxu0 0
        %1885 = vmatpush1.bf16.msra.mxu0 0
        %1886 = vmatprep.subr.bf16.mxu0 0
        %1887 = vmatpush1.bf16.msra.mxu0 0
        %1888 = vmatprep.subr.bf16.mxu0 0
        %1889 = vmatpush1.bf16.msra.mxu0 0
        %1890 = vmatprep.subr.bf16.mxu0 0
        %1891 = vmatpush1.bf16.msra.mxu0 0
        %1892 = vmatprep.subr.bf16.mxu0 0
        %1893 = vmatpush1.bf16.msra.mxu0 0
        %1894 = vmatprep.subr.bf16.mxu0 0
        %1895 = vmatpush1.bf16.msra.mxu0 0
        %1896 = vmatprep.subr.bf16.mxu0 0
        %1897 = vmatpush1.bf16.msra.mxu0 0
        %1898 = vmatprep.subr.bf16.mxu0 0
        %1899 = vmatpush1.bf16.msra.mxu0 0
        %1900 = vmatprep.subr.bf16.mxu0 0
        %1901 = vmatpush1.bf16.msra.mxu0 0
        %1902 = vmatprep.subr.bf16.mxu0 0
        %1903 = vmatpush1.bf16.msra.mxu0 0
        %1904 = vmatprep.subr.bf16.mxu0 0
        %1905 = vmatpush1.bf16.msra.mxu0 0
        %1906 = vmatprep.subr.bf16.mxu0 0
        %1907 = vmatpush1.bf16.msra.mxu0 0
        %1908 = vmatprep.subr.bf16.mxu0 0
        %1909 = vmatpush1.bf16.msra.mxu0 0
        %1910 = vmatprep.subr.bf16.mxu0 0
        %1911 = vmatpush1.bf16.msra.mxu0 0
        %1912 = vmatprep.mubr.bf16.mxu0 0
        %1913 = vmatmul.mubr.bf16.gmra.mrb[0].mxu0 %v1878
        %v1914 = vpop.f32.mrb[0].mxu0
        %v1915 = vadd.f32 0.0, %v1914
        %v1916 = vpop.f32.mrb[0].mxu0
        %v1917 = vpop.f32.mrb[0].mxu0
        %v1918 = vadd.f32 0.0, %v1917
        %v1919 = vpop.f32.mrb[0].mxu0
        %1920 = vdwg.mxu0
        %v1921 = vpack.c.bf16 %v1918, %v1915
        %v1922 = vld [vmem:[#allocation11 + $0x80] sm:$0xff]
        %v1923 = vld [vmem:[#allocation11 + $0x88] sm:$0xff]
        %v1924 = vld [vmem:[#allocation11 + $0x90] sm:$0xff]
        %v1925 = vld [vmem:[#allocation11 + $0x98] sm:$0xff]
        %v1926 = vld [vmem:[#allocation11 + $0xa0] sm:$0xff]
        %v1927 = vld [vmem:[#allocation11 + $0xa8] sm:$0xff]
        %v1928 = vld [vmem:[#allocation11 + $0xb0] sm:$0xff]
        %v1929 = vld [vmem:[#allocation11 + $0xb8] sm:$0xff]
        %v1930 = vld [vmem:[#allocation11 + $0xc0] sm:$0xff]
        %v1931 = vld [vmem:[#allocation11 + $0xc8] sm:$0xff]
        %v1932 = vld [vmem:[#allocation11 + $0xd0] sm:$0xff]
        %v1933 = vld [vmem:[#allocation11 + $0xd8] sm:$0xff]
        %v1934 = vld [vmem:[#allocation11 + $0xe0] sm:$0xff]
        %v1935 = vld [vmem:[#allocation11 + $0xe8] sm:$0xff]
        %v1936 = vld [vmem:[#allocation11 + $0xf0] sm:$0xff]
        %v1937 = vld [vmem:[#allocation11 + $0xf8] sm:$0xff]
        %v1954 = vunpack.c.l.b16 %v1922
        %v1955 = vunpack.c.h.b16 %v1922
        %v1956 = vunpack.c.l.b16 %v1923
        %v1957 = vunpack.c.h.b16 %v1923
        %v1958 = vunpack.c.l.b16 %v1924
        %v1959 = vunpack.c.h.b16 %v1924
        %v1960 = vunpack.c.l.b16 %v1925
        %v1961 = vunpack.c.h.b16 %v1925
        %v1962 = vunpack.c.l.b16 %v1926
        %v1963 = vunpack.c.h.b16 %v1926
        %v1964 = vunpack.c.l.b16 %v1927
        %v1965 = vunpack.c.h.b16 %v1927
        %v1966 = vunpack.c.l.b16 %v1928
        %v1967 = vunpack.c.h.b16 %v1928
        %v1968 = vunpack.c.l.b16 %v1929
        %v1969 = vunpack.c.h.b16 %v1929
        %v1970 = vunpack.c.l.b16 %v1930
        %v1971 = vunpack.c.h.b16 %v1930
        %v1972 = vunpack.c.l.b16 %v1931
        %v1973 = vunpack.c.h.b16 %v1931
        %v1974 = vunpack.c.l.b16 %v1932
        %v1975 = vunpack.c.h.b16 %v1932
        %v1976 = vunpack.c.l.b16 %v1933
        %v1977 = vunpack.c.h.b16 %v1933
        %v1978 = vunpack.c.l.b16 %v1934
        %v1979 = vunpack.c.h.b16 %v1934
        %v1980 = vunpack.c.l.b16 %v1935
        %v1981 = vunpack.c.h.b16 %v1935
        %v1982 = vunpack.c.l.b16 %v1936
        %v1983 = vunpack.c.h.b16 %v1936
        %v1984 = vunpack.c.l.b16 %v1937
        %v1985 = vunpack.c.h.b16 %v1937
        %v1986 = vpack.c.b16 %v1956, %v1954
        %v1987 = vpack.c.b16 %v1957, %v1955
        %v1988 = vpack.c.b16 %v1960, %v1958
        %v1989 = vpack.c.b16 %v1961, %v1959
        %v1990 = vpack.c.b16 %v1964, %v1962
        %v1991 = vpack.c.b16 %v1965, %v1963
        %v1992 = vpack.c.b16 %v1968, %v1966
        %v1993 = vpack.c.b16 %v1969, %v1967
        %v1994 = vpack.c.b16 %v1972, %v1970
        %v1995 = vpack.c.b16 %v1973, %v1971
        %v1996 = vpack.c.b16 %v1976, %v1974
        %v1997 = vpack.c.b16 %v1977, %v1975
        %v1998 = vpack.c.b16 %v1980, %v1978
        %v1999 = vpack.c.b16 %v1981, %v1979
        %v2000 = vpack.c.b16 %v1984, %v1982
        %v2001 = vpack.c.b16 %v1985, %v1983
        %2018 = vmatprep.subr.bf16.mxu0 %v1987
        %2019 = vmatpush1.bf16.msra.mxu0 %v1986
        %2020 = vmatprep.subr.bf16.mxu0 %v1989
        %2021 = vmatpush1.bf16.msra.mxu0 %v1988
        %2022 = vmatprep.subr.bf16.mxu0 %v1991
        %2023 = vmatpush1.bf16.msra.mxu0 %v1990
        %2024 = vmatprep.subr.bf16.mxu0 %v1993
        %2025 = vmatpush1.bf16.msra.mxu0 %v1992
        %2026 = vmatprep.subr.bf16.mxu0 %v1995
        %2027 = vmatpush1.bf16.msra.mxu0 %v1994
        %2028 = vmatprep.subr.bf16.mxu0 %v1997
        %2029 = vmatpush1.bf16.msra.mxu0 %v1996
        %2030 = vmatprep.subr.bf16.mxu0 %v1999
        %2031 = vmatpush1.bf16.msra.mxu0 %v1998
        %2032 = vmatprep.subr.bf16.mxu0 %v2001
        %2033 = vmatpush1.bf16.msra.mxu0 %v2000
        %2034 = vmatprep.subr.bf16.mxu0 0
        %2035 = vmatpush1.bf16.msra.mxu0 0
        %2036 = vmatprep.subr.bf16.mxu0 0
        %2037 = vmatpush1.bf16.msra.mxu0 0
        %2038 = vmatprep.subr.bf16.mxu0 0
        %2039 = vmatpush1.bf16.msra.mxu0 0
        %2040 = vmatprep.subr.bf16.mxu0 0
        %2041 = vmatpush1.bf16.msra.mxu0 0
        %2042 = vmatprep.subr.bf16.mxu0 0
        %2043 = vmatpush1.bf16.msra.mxu0 0
        %2044 = vmatprep.subr.bf16.mxu0 0
        %2045 = vmatpush1.bf16.msra.mxu0 0
        %2046 = vmatprep.subr.bf16.mxu0 0
        %2047 = vmatpush1.bf16.msra.mxu0 0
        %2048 = vmatprep.subr.bf16.mxu0 0
        %2049 = vmatpush1.bf16.msra.mxu0 0
        %2050 = vmatprep.mubr.bf16.mxu0 0
        %2051 = vmatmul.mubr.bf16.gmra.mrb[0].mxu0 %v1921
        %v2052 = vpop.f32.mrb[0].mxu0
        %v2053 = vadd.f32 0.0, %v2052
        %v2054 = vpop.f32.mrb[0].mxu0
        %v2055 = vadd.f32 0.0, %v2054
        %v2056 = vpop.f32.mrb[0].mxu0
        %v2057 = vadd.f32 0.0, %v2056
        %v2058 = vpop.f32.mrb[0].mxu0
        %v2059 = vadd.f32 0.0, %v2058
        %2060 = vdwg.mxu0
        %v2077 = vunpack.c.l.b16 %v1792
        %v2078 = vunpack.c.h.b16 %v1792
        %v2079 = vunpack.c.l.b16 %v1793
        %v2080 = vunpack.c.h.b16 %v1793
        %v2081 = vunpack.c.l.b16 %v1794
        %v2082 = vunpack.c.h.b16 %v1794
        %v2083 = vunpack.c.l.b16 %v1795
        %v2084 = vunpack.c.h.b16 %v1795
        %v2085 = vunpack.c.l.b16 %v1796
        %v2086 = vunpack.c.h.b16 %v1796
        %v2087 = vunpack.c.l.b16 %v1797
        %v2088 = vunpack.c.h.b16 %v1797
        %v2089 = vunpack.c.l.b16 %v1798
        %v2090 = vunpack.c.h.b16 %v1798
        %v2091 = vunpack.c.l.b16 %v1799
        %v2092 = vunpack.c.h.b16 %v1799
        %v2093 = vunpack.c.l.b16 %v1800
        %v2094 = vunpack.c.h.b16 %v1800
        %v2095 = vunpack.c.l.b16 %v1801
        %v2096 = vunpack.c.h.b16 %v1801
        %v2097 = vunpack.c.l.b16 %v1802
        %v2098 = vunpack.c.h.b16 %v1802
        %v2099 = vunpack.c.l.b16 %v1803
        %v2100 = vunpack.c.h.b16 %v1803
        %v2101 = vunpack.c.l.b16 %v1804
        %v2102 = vunpack.c.h.b16 %v1804
        %v2103 = vunpack.c.l.b16 %v1805
        %v2104 = vunpack.c.h.b16 %v1805
        %v2105 = vunpack.c.l.b16 %v1806
        %v2106 = vunpack.c.h.b16 %v1806
        %v2107 = vunpack.c.l.b16 %v1807
        %v2108 = vunpack.c.h.b16 %v1807
        %v2109 = vpack.c.b16 %v2079, %v2077
        %v2110 = vpack.c.b16 %v2080, %v2078
        %v2111 = vpack.c.b16 %v2083, %v2081
        %v2112 = vpack.c.b16 %v2084, %v2082
        %v2113 = vpack.c.b16 %v2087, %v2085
        %v2114 = vpack.c.b16 %v2088, %v2086
        %v2115 = vpack.c.b16 %v2091, %v2089
        %v2116 = vpack.c.b16 %v2092, %v2090
        %v2117 = vpack.c.b16 %v2095, %v2093
        %v2118 = vpack.c.b16 %v2096, %v2094
        %v2119 = vpack.c.b16 %v2099, %v2097
        %v2120 = vpack.c.b16 %v2100, %v2098
        %v2121 = vpack.c.b16 %v2103, %v2101
        %v2122 = vpack.c.b16 %v2104, %v2102
        %v2123 = vpack.c.b16 %v2107, %v2105
        %v2124 = vpack.c.b16 %v2108, %v2106
        %2141 = vmatprep.subr.bf16.mxu0 %v2110
        %2142 = vmatpush1.bf16.msra.mxu0 %v2109
        %2143 = vmatprep.subr.bf16.mxu0 %v2112
        %2144 = vmatpush1.bf16.msra.mxu0 %v2111
        %2145 = vmatprep.subr.bf16.mxu0 %v2114
        %2146 = vmatpush1.bf16.msra.mxu0 %v2113
        %2147 = vmatprep.subr.bf16.mxu0 %v2116
        %2148 = vmatpush1.bf16.msra.mxu0 %v2115
        %2149 = vmatprep.subr.bf16.mxu0 %v2118
        %2150 = vmatpush1.bf16.msra.mxu0 %v2117
        %2151 = vmatprep.subr.bf16.mxu0 %v2120
        %2152 = vmatpush1.bf16.msra.mxu0 %v2119
        %2153 = vmatprep.subr.bf16.mxu0 %v2122
        %2154 = vmatpush1.bf16.msra.mxu0 %v2121
        %2155 = vmatprep.subr.bf16.mxu0 %v2124
        %2156 = vmatpush1.bf16.msra.mxu0 %v2123
        %2157 = vmatprep.subr.bf16.mxu0 0
        %2158 = vmatpush1.bf16.msra.mxu0 0
        %2159 = vmatprep.subr.bf16.mxu0 0
        %2160 = vmatpush1.bf16.msra.mxu0 0
        %2161 = vmatprep.subr.bf16.mxu0 0
        %2162 = vmatpush1.bf16.msra.mxu0 0
        %2163 = vmatprep.subr.bf16.mxu0 0
        %2164 = vmatpush1.bf16.msra.mxu0 0
        %2165 = vmatprep.subr.bf16.mxu0 0
        %2166 = vmatpush1.bf16.msra.mxu0 0
        %2167 = vmatprep.subr.bf16.mxu0 0
        %2168 = vmatpush1.bf16.msra.mxu0 0
        %2169 = vmatprep.subr.bf16.mxu0 0
        %2170 = vmatpush1.bf16.msra.mxu0 0
        %2171 = vmatprep.subr.bf16.mxu0 0
        %2172 = vmatpush1.bf16.msra.mxu0 0
        %2173 = vmatprep.mubr.bf16.mxu0 0
        %2174 = vmatmul.mubr.bf16.gmra.mrb[0].mxu0 %v1791
        %v2175 = vpop.f32.mrb[0].mxu0
        %v2176 = vadd.f32 %v2053, %v2175
        %v2177 = vpop.f32.mrb[0].mxu0
        %v2178 = vadd.f32 %v2055, %v2177
        %v2179 = vpop.f32.mrb[0].mxu0
        %v2180 = vadd.f32 %v2057, %v2179
        %v2181 = vpop.f32.mrb[0].mxu0
        %v2182 = vadd.f32 %v2059, %v2181
        %2183 = vdwg.mxu0
        %v2184 = vadd.f32 %v869, %v2176
        %v2185 = vadd.f32 %v870, %v2178
        %v2186 = vadd.f32 %v871, %v2180
        %v2187 = vadd.f32 %v872, %v2182
        %v2188 = vld [vmem:[%s7] sm:$0x3]
        %v2190 = vlaneseq
        %v2191 = vshrl.u32 %v2190, 7
        %v2192 = vsub.s32 0, %v2191
        %v2193 = vrot.slane %v2188, %v2192
        %v2194 = vlaneseq
        %v2195 = vshrl.u32 %v2194, 7
        %v2196 = vsub.s32 1, %v2195
        %v2197 = vrot.slane %v2188, %v2196
        %v2200 = vadd.f32 %v2184, %v2193
        %v2201 = vadd.f32 %v2185, %v2197
        %v2202 = vadd.f32 %v2186, %v2193
        %v2203 = vadd.f32 %v2187, %v2197
        %v2204 = vld [vmem:[%s766] sm:$0xff]
        %v2205 = vld [vmem:[%s766 + $0x8] sm:$0xff]
        %v2206 = vld [vmem:[%s766 + $0x10] sm:$0xff]
        %v2207 = vld [vmem:[%s766 + $0x18] sm:$0xff]
        %v2208 = vld [vmem:[%s766 + $0x20] sm:$0xff]
        %v2209 = vld [vmem:[%s766 + $0x28] sm:$0xff]
        %v2210 = vadd.f32 %v2200, %v2201
        %2211 = vadd.xlane.f32.xlu0 %v2210
        %v2212 = vpop.xlane.xlu0 %2211
        %v2213 = vadd.f32 %v2202, %v2203
        %2214 = vadd.xlane.f32.xlu0 %v2213
        %v2215 = vpop.xlane.xlu0 %2214
        %v2216 = vmul.f32 %v2212, %v879
        %v2217 = vmul.f32 %v2215, %v879
        %v2218 = vsub.f32 %v2200, %v2216
        %v2219 = vsub.f32 %v2201, %v2216
        %v2220 = vsub.f32 %v2202, %v2217
        %v2221 = vsub.f32 %v2203, %v2217
        %v2222 = vmul.f32 %v2218, %v2218
        %v2223 = vmul.f32 %v2219, %v2219
        %v2224 = vmul.f32 %v2220, %v2220
        %v2225 = vmul.f32 %v2221, %v2221
        %v2226 = vadd.f32 %v2222, %v2223
        %2227 = vadd.xlane.f32.xlu0 %v2226
        %v2228 = vpop.xlane.xlu0 %2227
        %v2229 = vadd.f32 %v2224, %v2225
        %2230 = vadd.xlane.f32.xlu0 %v2229
        %v2231 = vpop.xlane.xlu0 %2230
        %v2232 = vmul.f32 %v2228, %v879
        %v2233 = vmul.f32 %v2231, %v879
        %v2234 = vadd.f32 %v2232, 1e-05
        %v2235 = vadd.f32 %v2233, 1e-05
        %v2236 = vrsqrt.pop %v2234
        %v2237 = vrsqrt.pop %v2235
        %v2238 = vmul.f32 %v2218, %v2236
        %v2239 = vmul.f32 %v2219, %v2236
        %v2240 = vmul.f32 %v2220, %v2237
        %v2241 = vmul.f32 %v2221, %v2237
        %v2242 = vld [vmem:[%s8] sm:$0x3]
        %v2244 = vlaneseq
        %v2245 = vshrl.u32 %v2244, 7
        %v2246 = vsub.s32 0, %v2245
        %v2247 = vrot.slane %v2242, %v2246
        %v2248 = vlaneseq
        %v2249 = vshrl.u32 %v2248, 7
        %v2250 = vsub.s32 1, %v2249
        %v2251 = vrot.slane %v2242, %v2250
        %v2254 = vmul.f32 %v2238, %v2247
        %v2255 = vmul.f32 %v2239, %v2251
        %v2256 = vmul.f32 %v2240, %v2247
        %v2257 = vmul.f32 %v2241, %v2251
        %v2258 = vld [vmem:[%s9] sm:$0x3]
        %v2260 = vlaneseq
        %v2261 = vshrl.u32 %v2260, 7
        %v2262 = vsub.s32 0, %v2261
        %v2263 = vrot.slane %v2258, %v2262
        %v2264 = vlaneseq
        %v2265 = vshrl.u32 %v2264, 7
        %v2266 = vsub.s32 1, %v2265
        %v2267 = vrot.slane %v2258, %v2266
        %v2270 = vadd.f32 %v2254, %v2263
        %v2271 = vadd.f32 %v2255, %v2267
        %v2272 = vadd.f32 %v2256, %v2263
        %v2273 = vadd.f32 %v2257, %v2267
        %v2274 = vpack.c.bf16 %v2272, %v2270
        %v2275 = vpack.c.bf16 %v2273, %v2271
        %v2276 = vld [vmem:[#allocation13] sm:$0xff]
        %v2277 = vld [vmem:[#allocation13 + $0x8] sm:$0xff]
        %v2278 = vld [vmem:[#allocation13 + $0x10] sm:$0xff]
        %v2279 = vld [vmem:[#allocation13 + $0x18] sm:$0xff]
        %v2280 = vld [vmem:[#allocation13 + $0x20] sm:$0xff]
        %v2281 = vld [vmem:[#allocation13 + $0x28] sm:$0xff]
        %v2282 = vld [vmem:[#allocation13 + $0x30] sm:$0xff]
        %v2283 = vld [vmem:[#allocation13 + $0x38] sm:$0xff]
        %v2284 = vld [vmem:[#allocation13 + $0x40] sm:$0xff]
        %v2285 = vld [vmem:[#allocation13 + $0x48] sm:$0xff]
        %v2286 = vld [vmem:[#allocation13 + $0x50] sm:$0xff]
        %v2287 = vld [vmem:[#allocation13 + $0x58] sm:$0xff]
        %v2288 = vld [vmem:[#allocation13 + $0x60] sm:$0xff]
        %v2289 = vld [vmem:[#allocation13 + $0x68] sm:$0xff]
        %v2290 = vld [vmem:[#allocation13 + $0x70] sm:$0xff]
        %v2291 = vld [vmem:[#allocation13 + $0x78] sm:$0xff]
        %v2292 = vld [vmem:[#allocation13 + $0x80] sm:$0xff]
        %v2293 = vld [vmem:[#allocation13 + $0x88] sm:$0xff]
        %v2294 = vld [vmem:[#allocation13 + $0x90] sm:$0xff]
        %v2295 = vld [vmem:[#allocation13 + $0x98] sm:$0xff]
        %v2296 = vld [vmem:[#allocation13 + $0xa0] sm:$0xff]
        %v2297 = vld [vmem:[#allocation13 + $0xa8] sm:$0xff]
        %v2298 = vld [vmem:[#allocation13 + $0xb0] sm:$0xff]
        %v2299 = vld [vmem:[#allocation13 + $0xb8] sm:$0xff]
        %v2300 = vld [vmem:[#allocation13 + $0xc0] sm:$0xff]
        %v2301 = vld [vmem:[#allocation13 + $0xc8] sm:$0xff]
        %v2302 = vld [vmem:[#allocation13 + $0xd0] sm:$0xff]
        %v2303 = vld [vmem:[#allocation13 + $0xd8] sm:$0xff]
        %v2304 = vld [vmem:[#allocation13 + $0xe0] sm:$0xff]
        %v2305 = vld [vmem:[#allocation13 + $0xe8] sm:$0xff]
        %v2306 = vld [vmem:[#allocation13 + $0xf0] sm:$0xff]
        %v2307 = vld [vmem:[#allocation13 + $0xf8] sm:$0xff]
        %v2308 = vld [vmem:[%s11] sm:$0x3]
        %v2310 = vlaneseq
        %v2311 = vshrl.u32 %v2310, 7
        %v2312 = vsub.s32 0, %v2311
        %v2313 = vrot.slane %v2308, %v2312
        %v2314 = vlaneseq
        %v2315 = vshrl.u32 %v2314, 7
        %v2316 = vsub.s32 1, %v2315
        %v2317 = vrot.slane %v2308, %v2316
        %v2352 = vunpack.c.l.b16 %v2276
        %v2353 = vunpack.c.h.b16 %v2276
        %v2354 = vunpack.c.l.b16 %v2277
        %v2355 = vunpack.c.h.b16 %v2277
        %v2356 = vunpack.c.l.b16 %v2278
        %v2357 = vunpack.c.h.b16 %v2278
        %v2358 = vunpack.c.l.b16 %v2279
        %v2359 = vunpack.c.h.b16 %v2279
        %v2360 = vunpack.c.l.b16 %v2280
        %v2361 = vunpack.c.h.b16 %v2280
        %v2362 = vunpack.c.l.b16 %v2281
        %v2363 = vunpack.c.h.b16 %v2281
        %v2364 = vunpack.c.l.b16 %v2282
        %v2365 = vunpack.c.h.b16 %v2282
        %v2366 = vunpack.c.l.b16 %v2283
        %v2367 = vunpack.c.h.b16 %v2283
        %v2368 = vunpack.c.l.b16 %v2284
        %v2369 = vunpack.c.h.b16 %v2284
        %v2370 = vunpack.c.l.b16 %v2285
        %v2371 = vunpack.c.h.b16 %v2285
        %v2372 = vunpack.c.l.b16 %v2286
        %v2373 = vunpack.c.h.b16 %v2286
        %v2374 = vunpack.c.l.b16 %v2287
        %v2375 = vunpack.c.h.b16 %v2287
        %v2376 = vunpack.c.l.b16 %v2288
        %v2377 = vunpack.c.h.b16 %v2288
        %v2378 = vunpack.c.l.b16 %v2289
        %v2379 = vunpack.c.h.b16 %v2289
        %v2380 = vunpack.c.l.b16 %v2290
        %v2381 = vunpack.c.h.b16 %v2290
        %v2382 = vunpack.c.l.b16 %v2291
        %v2383 = vunpack.c.h.b16 %v2291
        %v2384 = vunpack.c.l.b16 %v2292
        %v2385 = vunpack.c.h.b16 %v2292
        %v2386 = vunpack.c.l.b16 %v2293
        %v2387 = vunpack.c.h.b16 %v2293
        %v2388 = vunpack.c.l.b16 %v2294
        %v2389 = vunpack.c.h.b16 %v2294
        %v2390 = vunpack.c.l.b16 %v2295
        %v2391 = vunpack.c.h.b16 %v2295
        %v2392 = vunpack.c.l.b16 %v2296
        %v2393 = vunpack.c.h.b16 %v2296
        %v2394 = vunpack.c.l.b16 %v2297
        %v2395 = vunpack.c.h.b16 %v2297
        %v2396 = vunpack.c.l.b16 %v2298
        %v2397 = vunpack.c.h.b16 %v2298
        %v2398 = vunpack.c.l.b16 %v2299
        %v2399 = vunpack.c.h.b16 %v2299
        %v2400 = vunpack.c.l.b16 %v2300
        %v2401 = vunpack.c.h.b16 %v2300
        %v2402 = vunpack.c.l.b16 %v2301
        %v2403 = vunpack.c.h.b16 %v2301
        %v2404 = vunpack.c.l.b16 %v2302
        %v2405 = vunpack.c.h.b16 %v2302
        %v2406 = vunpack.c.l.b16 %v2303
        %v2407 = vunpack.c.h.b16 %v2303
        %v2408 = vunpack.c.l.b16 %v2304
        %v2409 = vunpack.c.h.b16 %v2304
        %v2410 = vunpack.c.l.b16 %v2305
        %v2411 = vunpack.c.h.b16 %v2305
        %v2412 = vunpack.c.l.b16 %v2306
        %v2413 = vunpack.c.h.b16 %v2306
        %v2414 = vunpack.c.l.b16 %v2307
        %v2415 = vunpack.c.h.b16 %v2307
        %v2416 = vpack.c.b16 %v2354, %v2352
        %v2417 = vpack.c.b16 %v2355, %v2353
        %v2418 = vpack.c.b16 %v2358, %v2356
        %v2419 = vpack.c.b16 %v2359, %v2357
        %v2420 = vpack.c.b16 %v2362, %v2360
        %v2421 = vpack.c.b16 %v2363, %v2361
        %v2422 = vpack.c.b16 %v2366, %v2364
        %v2423 = vpack.c.b16 %v2367, %v2365
        %v2424 = vpack.c.b16 %v2370, %v2368
        %v2425 = vpack.c.b16 %v2371, %v2369
        %v2426 = vpack.c.b16 %v2374, %v2372
        %v2427 = vpack.c.b16 %v2375, %v2373
        %v2428 = vpack.c.b16 %v2378, %v2376
        %v2429 = vpack.c.b16 %v2379, %v2377
        %v2430 = vpack.c.b16 %v2382, %v2380
        %v2431 = vpack.c.b16 %v2383, %v2381
        %v2432 = vpack.c.b16 %v2386, %v2384
        %v2433 = vpack.c.b16 %v2387, %v2385
        %v2434 = vpack.c.b16 %v2390, %v2388
        %v2435 = vpack.c.b16 %v2391, %v2389
        %v2436 = vpack.c.b16 %v2394, %v2392
        %v2437 = vpack.c.b16 %v2395, %v2393
        %v2438 = vpack.c.b16 %v2398, %v2396
        %v2439 = vpack.c.b16 %v2399, %v2397
        %v2440 = vpack.c.b16 %v2402, %v2400
        %v2441 = vpack.c.b16 %v2403, %v2401
        %v2442 = vpack.c.b16 %v2406, %v2404
        %v2443 = vpack.c.b16 %v2407, %v2405
        %v2444 = vpack.c.b16 %v2410, %v2408
        %v2445 = vpack.c.b16 %v2411, %v2409
        %v2446 = vpack.c.b16 %v2414, %v2412
        %v2447 = vpack.c.b16 %v2415, %v2413
        %2480 = vmatprep.subr.bf16.mxu0 %v2417
        %2481 = vmatpush1.bf16.msra.mxu0 %v2416
        %2482 = vmatprep.subr.bf16.mxu0 %v2419
        %2483 = vmatpush1.bf16.msra.mxu0 %v2418
        %2484 = vmatprep.subr.bf16.mxu0 %v2421
        %2485 = vmatpush1.bf16.msra.mxu0 %v2420
        %2486 = vmatprep.subr.bf16.mxu0 %v2423
        %2487 = vmatpush1.bf16.msra.mxu0 %v2422
        %2488 = vmatprep.subr.bf16.mxu0 %v2425
        %2489 = vmatpush1.bf16.msra.mxu0 %v2424
        %2490 = vmatprep.subr.bf16.mxu0 %v2427
        %2491 = vmatpush1.bf16.msra.mxu0 %v2426
        %2492 = vmatprep.subr.bf16.mxu0 %v2429
        %2493 = vmatpush1.bf16.msra.mxu0 %v2428
        %2494 = vmatprep.subr.bf16.mxu0 %v2431
        %2495 = vmatpush1.bf16.msra.mxu0 %v2430
        %2496 = vmatprep.subr.bf16.mxu0 %v2433
        %2497 = vmatpush1.bf16.msra.mxu0 %v2432
        %2498 = vmatprep.subr.bf16.mxu0 %v2435
        %2499 = vmatpush1.bf16.msra.mxu0 %v2434
        %2500 = vmatprep.subr.bf16.mxu0 %v2437
        %2501 = vmatpush1.bf16.msra.mxu0 %v2436
        %2502 = vmatprep.subr.bf16.mxu0 %v2439
        %2503 = vmatpush1.bf16.msra.mxu0 %v2438
        %2504 = vmatprep.subr.bf16.mxu0 %v2441
        %2505 = vmatpush1.bf16.msra.mxu0 %v2440
        %2506 = vmatprep.subr.bf16.mxu0 %v2443
        %2507 = vmatpush1.bf16.msra.mxu0 %v2442
        %2508 = vmatprep.subr.bf16.mxu0 %v2445
        %2509 = vmatpush1.bf16.msra.mxu0 %v2444
        %2510 = vmatprep.subr.bf16.mxu0 %v2447
        %2511 = vmatpush1.bf16.msra.mxu0 %v2446
        %2512 = vmatprep.mubr.bf16.mxu0 %v2275
        %2513 = vmatmul.mubr.bf16.gmra.mrb[0].mxu0 %v2274
        %v2514 = vpop.f32.mrb[0].mxu0
        %v2515 = vadd.f32 %v2313, %v2514
        %v2516 = vpop.f32.mrb[0].mxu0
        %v2517 = vadd.f32 %v2317, %v2516
        %v2518 = vpop.f32.mrb[0].mxu0
        %v2519 = vadd.f32 %v2313, %v2518
        %v2520 = vpop.f32.mrb[0].mxu0
        %v2521 = vadd.f32 %v2317, %v2520
        %2522 = vdwg.mxu0
        %v2523 = vpack.c.bf16 %v2206, %v2204
        %v2524 = vpack.c.bf16 %v2207, %v2205
        %v2525 = vpack.c.bf16 %v2208, %v2208
        %v2526 = vpack.c.bf16 %v2209, %v2209
        %v2527 = vld [vmem:[#allocation14] sm:$0xff]
        %v2528 = vld [vmem:[#allocation14 + $0x8] sm:$0xff]
        %v2529 = vld [vmem:[#allocation14 + $0x10] sm:$0xff]
        %v2530 = vld [vmem:[#allocation14 + $0x18] sm:$0xff]
        %v2531 = vld [vmem:[#allocation14 + $0x20] sm:$0xff]
        %v2532 = vld [vmem:[#allocation14 + $0x28] sm:$0xff]
        %v2533 = vld [vmem:[#allocation14 + $0x30] sm:$0xff]
        %v2534 = vld [vmem:[#allocation14 + $0x38] sm:$0xff]
        %v2535 = vld [vmem:[#allocation14 + $0x40] sm:$0xff]
        %v2536 = vld [vmem:[#allocation14 + $0x48] sm:$0xff]
        %v2537 = vld [vmem:[#allocation14 + $0x50] sm:$0xff]
        %v2538 = vld [vmem:[#allocation14 + $0x58] sm:$0xff]
        %v2539 = vld [vmem:[#allocation14 + $0x60] sm:$0xff]
        %v2540 = vld [vmem:[#allocation14 + $0x68] sm:$0xff]
        %v2541 = vld [vmem:[#allocation14 + $0x70] sm:$0xff]
        %v2542 = vld [vmem:[#allocation14 + $0x78] sm:$0xff]
        %v2543 = vld [vmem:[#allocation14 + $0x80] sm:$0xff]
        %v2544 = vld [vmem:[#allocation14 + $0x88] sm:$0xff]
        %v2545 = vld [vmem:[#allocation14 + $0x90] sm:$0xff]
        %v2546 = vld [vmem:[#allocation14 + $0x98] sm:$0xff]
        %v2547 = vld [vmem:[#allocation14 + $0xa0] sm:$0xff]
        %v2548 = vld [vmem:[#allocation14 + $0xa8] sm:$0xff]
        %v2549 = vld [vmem:[#allocation14 + $0xb0] sm:$0xff]
        %v2550 = vld [vmem:[#allocation14 + $0xb8] sm:$0xff]
        %v2551 = vld [vmem:[#allocation14 + $0xc0] sm:$0xff]
        %v2552 = vld [vmem:[#allocation14 + $0xc8] sm:$0xff]
        %v2553 = vld [vmem:[#allocation14 + $0xd0] sm:$0xff]
        %v2554 = vld [vmem:[#allocation14 + $0xd8] sm:$0xff]
        %v2555 = vld [vmem:[#allocation14 + $0xe0] sm:$0xff]
        %v2556 = vld [vmem:[#allocation14 + $0xe8] sm:$0xff]
        %v2557 = vld [vmem:[#allocation14 + $0xf0] sm:$0xff]
        %v2558 = vld [vmem:[#allocation14 + $0xf8] sm:$0xff]
        %v2559 = vld [vmem:[#allocation14 + $0x100] sm:$0xff]
        %v2560 = vld [vmem:[#allocation14 + $0x108] sm:$0xff]
        %v2561 = vld [vmem:[#allocation14 + $0x110] sm:$0xff]
        %v2562 = vld [vmem:[#allocation14 + $0x118] sm:$0xff]
        %v2563 = vld [vmem:[#allocation14 + $0x120] sm:$0xff]
        %v2564 = vld [vmem:[#allocation14 + $0x128] sm:$0xff]
        %v2565 = vld [vmem:[#allocation14 + $0x130] sm:$0xff]
        %v2566 = vld [vmem:[#allocation14 + $0x138] sm:$0xff]
        %v2567 = vld [vmem:[#allocation14 + $0x140] sm:$0xff]
        %v2568 = vld [vmem:[#allocation14 + $0x148] sm:$0xff]
        %v2569 = vld [vmem:[#allocation14 + $0x150] sm:$0xff]
        %v2570 = vld [vmem:[#allocation14 + $0x158] sm:$0xff]
        %v2571 = vld [vmem:[#allocation14 + $0x160] sm:$0xff]
        %v2572 = vld [vmem:[#allocation14 + $0x168] sm:$0xff]
        %v2573 = vld [vmem:[#allocation14 + $0x170] sm:$0xff]
        %v2574 = vld [vmem:[#allocation14 + $0x178] sm:$0xff]
        %v2575 = vld [vmem:[#allocation14 + $0x180] sm:$0xff]
        %v2576 = vld [vmem:[#allocation14 + $0x188] sm:$0xff]
        %v2577 = vld [vmem:[#allocation14 + $0x190] sm:$0xff]
        %v2578 = vld [vmem:[#allocation14 + $0x198] sm:$0xff]
        %v2579 = vld [vmem:[#allocation14 + $0x1a0] sm:$0xff]
        %v2580 = vld [vmem:[#allocation14 + $0x1a8] sm:$0xff]
        %v2581 = vld [vmem:[#allocation14 + $0x1b0] sm:$0xff]
        %v2582 = vld [vmem:[#allocation14 + $0x1b8] sm:$0xff]
        %v2583 = vld [vmem:[#allocation14 + $0x1c0] sm:$0xff]
        %v2584 = vld [vmem:[#allocation14 + $0x1c8] sm:$0xff]
        %v2585 = vld [vmem:[#allocation14 + $0x1d0] sm:$0xff]
        %v2586 = vld [vmem:[#allocation14 + $0x1d8] sm:$0xff]
        %v2587 = vld [vmem:[#allocation14 + $0x1e0] sm:$0xff]
        %v2588 = vld [vmem:[#allocation14 + $0x1e8] sm:$0xff]
        %v2589 = vld [vmem:[#allocation14 + $0x1f0] sm:$0xff]
        %v2590 = vld [vmem:[#allocation14 + $0x1f8] sm:$0xff]
        %v2591 = vld [vmem:[%s13] sm:$0xf]
        %v2593 = vlaneseq
        %v2594 = vshrl.u32 %v2593, 7
        %v2595 = vsub.s32 0, %v2594
        %v2596 = vrot.slane %v2591, %v2595
        %v2597 = vlaneseq
        %v2598 = vshrl.u32 %v2597, 7
        %v2599 = vsub.s32 1, %v2598
        %v2600 = vrot.slane %v2591, %v2599
        %v2601 = vlaneseq
        %v2602 = vshrl.u32 %v2601, 7
        %v2603 = vsub.s32 2, %v2602
        %v2604 = vrot.slane %v2591, %v2603
        %v2605 = vlaneseq
        %v2606 = vshrl.u32 %v2605, 7
        %v2607 = vsub.s32 3, %v2606
        %v2608 = vrot.slane %v2591, %v2607
        %v2677 = vunpack.c.l.b16 %v2527
        %v2678 = vunpack.c.h.b16 %v2527
        %v2679 = vunpack.c.l.b16 %v2528
        %v2680 = vunpack.c.h.b16 %v2528
        %v2681 = vunpack.c.l.b16 %v2529
        %v2682 = vunpack.c.h.b16 %v2529
        %v2683 = vunpack.c.l.b16 %v2530
        %v2684 = vunpack.c.h.b16 %v2530
        %v2685 = vunpack.c.l.b16 %v2531
        %v2686 = vunpack.c.h.b16 %v2531
        %v2687 = vunpack.c.l.b16 %v2532
        %v2688 = vunpack.c.h.b16 %v2532
        %v2689 = vunpack.c.l.b16 %v2533
        %v2690 = vunpack.c.h.b16 %v2533
        %v2691 = vunpack.c.l.b16 %v2534
        %v2692 = vunpack.c.h.b16 %v2534
        %v2693 = vunpack.c.l.b16 %v2535
        %v2694 = vunpack.c.h.b16 %v2535
        %v2695 = vunpack.c.l.b16 %v2536
        %v2696 = vunpack.c.h.b16 %v2536
        %v2697 = vunpack.c.l.b16 %v2537
        %v2698 = vunpack.c.h.b16 %v2537
        %v2699 = vunpack.c.l.b16 %v2538
        %v2700 = vunpack.c.h.b16 %v2538
        %v2701 = vunpack.c.l.b16 %v2539
        %v2702 = vunpack.c.h.b16 %v2539
        %v2703 = vunpack.c.l.b16 %v2540
        %v2704 = vunpack.c.h.b16 %v2540
        %v2705 = vunpack.c.l.b16 %v2541
        %v2706 = vunpack.c.h.b16 %v2541
        %v2707 = vunpack.c.l.b16 %v2542
        %v2708 = vunpack.c.h.b16 %v2542
        %v2709 = vunpack.c.l.b16 %v2543
        %v2710 = vunpack.c.h.b16 %v2543
        %v2711 = vunpack.c.l.b16 %v2544
        %v2712 = vunpack.c.h.b16 %v2544
        %v2713 = vunpack.c.l.b16 %v2545
        %v2714 = vunpack.c.h.b16 %v2545
        %v2715 = vunpack.c.l.b16 %v2546
        %v2716 = vunpack.c.h.b16 %v2546
        %v2717 = vunpack.c.l.b16 %v2547
        %v2718 = vunpack.c.h.b16 %v2547
        %v2719 = vunpack.c.l.b16 %v2548
        %v2720 = vunpack.c.h.b16 %v2548
        %v2721 = vunpack.c.l.b16 %v2549
        %v2722 = vunpack.c.h.b16 %v2549
        %v2723 = vunpack.c.l.b16 %v2550
        %v2724 = vunpack.c.h.b16 %v2550
        %v2725 = vunpack.c.l.b16 %v2551
        %v2726 = vunpack.c.h.b16 %v2551
        %v2727 = vunpack.c.l.b16 %v2552
        %v2728 = vunpack.c.h.b16 %v2552
        %v2729 = vunpack.c.l.b16 %v2553
        %v2730 = vunpack.c.h.b16 %v2553
        %v2731 = vunpack.c.l.b16 %v2554
        %v2732 = vunpack.c.h.b16 %v2554
        %v2733 = vunpack.c.l.b16 %v2555
        %v2734 = vunpack.c.h.b16 %v2555
        %v2735 = vunpack.c.l.b16 %v2556
        %v2736 = vunpack.c.h.b16 %v2556
        %v2737 = vunpack.c.l.b16 %v2557
        %v2738 = vunpack.c.h.b16 %v2557
        %v2739 = vunpack.c.l.b16 %v2558
        %v2740 = vunpack.c.h.b16 %v2558
        %v2741 = vunpack.c.l.b16 %v2559
        %v2742 = vunpack.c.h.b16 %v2559
        %v2743 = vunpack.c.l.b16 %v2560
        %v2744 = vunpack.c.h.b16 %v2560
        %v2745 = vunpack.c.l.b16 %v2561
        %v2746 = vunpack.c.h.b16 %v2561
        %v2747 = vunpack.c.l.b16 %v2562
        %v2748 = vunpack.c.h.b16 %v2562
        %v2749 = vunpack.c.l.b16 %v2563
        %v2750 = vunpack.c.h.b16 %v2563
        %v2751 = vunpack.c.l.b16 %v2564
        %v2752 = vunpack.c.h.b16 %v2564
        %v2753 = vunpack.c.l.b16 %v2565
        %v2754 = vunpack.c.h.b16 %v2565
        %v2755 = vunpack.c.l.b16 %v2566
        %v2756 = vunpack.c.h.b16 %v2566
        %v2757 = vunpack.c.l.b16 %v2567
        %v2758 = vunpack.c.h.b16 %v2567
        %v2759 = vunpack.c.l.b16 %v2568
        %v2760 = vunpack.c.h.b16 %v2568
        %v2761 = vunpack.c.l.b16 %v2569
        %v2762 = vunpack.c.h.b16 %v2569
        %v2763 = vunpack.c.l.b16 %v2570
        %v2764 = vunpack.c.h.b16 %v2570
        %v2765 = vunpack.c.l.b16 %v2571
        %v2766 = vunpack.c.h.b16 %v2571
        %v2767 = vunpack.c.l.b16 %v2572
        %v2768 = vunpack.c.h.b16 %v2572
        %v2769 = vunpack.c.l.b16 %v2573
        %v2770 = vunpack.c.h.b16 %v2573
        %v2771 = vunpack.c.l.b16 %v2574
        %v2772 = vunpack.c.h.b16 %v2574
        %v2773 = vunpack.c.l.b16 %v2575
        %v2774 = vunpack.c.h.b16 %v2575
        %v2775 = vunpack.c.l.b16 %v2576
        %v2776 = vunpack.c.h.b16 %v2576
        %v2777 = vunpack.c.l.b16 %v2577
        %v2778 = vunpack.c.h.b16 %v2577
        %v2779 = vunpack.c.l.b16 %v2578
        %v2780 = vunpack.c.h.b16 %v2578
        %v2781 = vunpack.c.l.b16 %v2579
        %v2782 = vunpack.c.h.b16 %v2579
        %v2783 = vunpack.c.l.b16 %v2580
        %v2784 = vunpack.c.h.b16 %v2580
        %v2785 = vunpack.c.l.b16 %v2581
        %v2786 = vunpack.c.h.b16 %v2581
        %v2787 = vunpack.c.l.b16 %v2582
        %v2788 = vunpack.c.h.b16 %v2582
        %v2789 = vunpack.c.l.b16 %v2583
        %v2790 = vunpack.c.h.b16 %v2583
        %v2791 = vunpack.c.l.b16 %v2584
        %v2792 = vunpack.c.h.b16 %v2584
        %v2793 = vunpack.c.l.b16 %v2585
        %v2794 = vunpack.c.h.b16 %v2585
        %v2795 = vunpack.c.l.b16 %v2586
        %v2796 = vunpack.c.h.b16 %v2586
        %v2797 = vunpack.c.l.b16 %v2587
        %v2798 = vunpack.c.h.b16 %v2587
        %v2799 = vunpack.c.l.b16 %v2588
        %v2800 = vunpack.c.h.b16 %v2588
        %v2801 = vunpack.c.l.b16 %v2589
        %v2802 = vunpack.c.h.b16 %v2589
        %v2803 = vunpack.c.l.b16 %v2590
        %v2804 = vunpack.c.h.b16 %v2590
        %v2805 = vpack.c.b16 %v2681, %v2677
        %v2806 = vpack.c.b16 %v2682, %v2678
        %v2807 = vpack.c.b16 %v2683, %v2679
        %v2808 = vpack.c.b16 %v2684, %v2680
        %v2809 = vpack.c.b16 %v2689, %v2685
        %v2810 = vpack.c.b16 %v2690, %v2686
        %v2811 = vpack.c.b16 %v2691, %v2687
        %v2812 = vpack.c.b16 %v2692, %v2688
        %v2813 = vpack.c.b16 %v2697, %v2693
        %v2814 = vpack.c.b16 %v2698, %v2694
        %v2815 = vpack.c.b16 %v2699, %v2695
        %v2816 = vpack.c.b16 %v2700, %v2696
        %v2817 = vpack.c.b16 %v2705, %v2701
        %v2818 = vpack.c.b16 %v2706, %v2702
        %v2819 = vpack.c.b16 %v2707, %v2703
        %v2820 = vpack.c.b16 %v2708, %v2704
        %v2821 = vpack.c.b16 %v2713, %v2709
        %v2822 = vpack.c.b16 %v2714, %v2710
        %v2823 = vpack.c.b16 %v2715, %v2711
        %v2824 = vpack.c.b16 %v2716, %v2712
        %v2825 = vpack.c.b16 %v2721, %v2717
        %v2826 = vpack.c.b16 %v2722, %v2718
        %v2827 = vpack.c.b16 %v2723, %v2719
        %v2828 = vpack.c.b16 %v2724, %v2720
        %v2829 = vpack.c.b16 %v2729, %v2725
        %v2830 = vpack.c.b16 %v2730, %v2726
        %v2831 = vpack.c.b16 %v2731, %v2727
        %v2832 = vpack.c.b16 %v2732, %v2728
        %v2833 = vpack.c.b16 %v2737, %v2733
        %v2834 = vpack.c.b16 %v2738, %v2734
        %v2835 = vpack.c.b16 %v2739, %v2735
        %v2836 = vpack.c.b16 %v2740, %v2736
        %v2837 = vpack.c.b16 %v2745, %v2741
        %v2838 = vpack.c.b16 %v2746, %v2742
        %v2839 = vpack.c.b16 %v2747, %v2743
        %v2840 = vpack.c.b16 %v2748, %v2744
        %v2841 = vpack.c.b16 %v2753, %v2749
        %v2842 = vpack.c.b16 %v2754, %v2750
        %v2843 = vpack.c.b16 %v2755, %v2751
        %v2844 = vpack.c.b16 %v2756, %v2752
        %v2845 = vpack.c.b16 %v2761, %v2757
        %v2846 = vpack.c.b16 %v2762, %v2758
        %v2847 = vpack.c.b16 %v2763, %v2759
        %v2848 = vpack.c.b16 %v2764, %v2760
        %v2849 = vpack.c.b16 %v2769, %v2765
        %v2850 = vpack.c.b16 %v2770, %v2766
        %v2851 = vpack.c.b16 %v2771, %v2767
        %v2852 = vpack.c.b16 %v2772, %v2768
        %v2853 = vpack.c.b16 %v2777, %v2773
        %v2854 = vpack.c.b16 %v2778, %v2774
        %v2855 = vpack.c.b16 %v2779, %v2775
        %v2856 = vpack.c.b16 %v2780, %v2776
        %v2857 = vpack.c.b16 %v2785, %v2781
        %v2858 = vpack.c.b16 %v2786, %v2782
        %v2859 = vpack.c.b16 %v2787, %v2783
        %v2860 = vpack.c.b16 %v2788, %v2784
        %v2861 = vpack.c.b16 %v2793, %v2789
        %v2862 = vpack.c.b16 %v2794, %v2790
        %v2863 = vpack.c.b16 %v2795, %v2791
        %v2864 = vpack.c.b16 %v2796, %v2792
        %v2865 = vpack.c.b16 %v2801, %v2797
        %v2866 = vpack.c.b16 %v2802, %v2798
        %v2867 = vpack.c.b16 %v2803, %v2799
        %v2868 = vpack.c.b16 %v2804, %v2800
        %2933 = vmatprep.subr.bf16.mxu0 %v2806
        %2934 = vmatpush1.bf16.msra.mxu0 %v2805
        %2935 = vmatprep.subr.bf16.mxu0 %v2810
        %2936 = vmatpush1.bf16.msra.mxu0 %v2809
        %2937 = vmatprep.subr.bf16.mxu0 %v2814
        %2938 = vmatpush1.bf16.msra.mxu0 %v2813
        %2939 = vmatprep.subr.bf16.mxu0 %v2818
        %2940 = vmatpush1.bf16.msra.mxu0 %v2817
        %2941 = vmatprep.subr.bf16.mxu0 %v2822
        %2942 = vmatpush1.bf16.msra.mxu0 %v2821
        %2943 = vmatprep.subr.bf16.mxu0 %v2826
        %2944 = vmatpush1.bf16.msra.mxu0 %v2825
        %2945 = vmatprep.subr.bf16.mxu0 %v2830
        %2946 = vmatpush1.bf16.msra.mxu0 %v2829
        %2947 = vmatprep.subr.bf16.mxu0 %v2834
        %2948 = vmatpush1.bf16.msra.mxu0 %v2833
        %2949 = vmatprep.subr.bf16.mxu0 %v2838
        %2950 = vmatpush1.bf16.msra.mxu0 %v2837
        %2951 = vmatprep.subr.bf16.mxu0 %v2842
        %2952 = vmatpush1.bf16.msra.mxu0 %v2841
        %2953 = vmatprep.subr.bf16.mxu0 %v2846
        %2954 = vmatpush1.bf16.msra.mxu0 %v2845
        %2955 = vmatprep.subr.bf16.mxu0 %v2850
        %2956 = vmatpush1.bf16.msra.mxu0 %v2849
        %2957 = vmatprep.subr.bf16.mxu0 %v2854
        %2958 = vmatpush1.bf16.msra.mxu0 %v2853
        %2959 = vmatprep.subr.bf16.mxu0 %v2858
        %2960 = vmatpush1.bf16.msra.mxu0 %v2857
        %2961 = vmatprep.subr.bf16.mxu0 %v2862
        %2962 = vmatpush1.bf16.msra.mxu0 %v2861
        %2963 = vmatprep.subr.bf16.mxu0 %v2866
        %2964 = vmatpush1.bf16.msra.mxu0 %v2865
        %2965 = vmatprep.mubr.bf16.mxu0 %v2524
        %2966 = vmatmul.mubr.bf16.gmra.mrb[0].mxu0 %v2523
        %v2967 = vpop.f32.mrb[0].mxu0
        %v2968 = vadd.f32 %v2596, %v2967
        %v2969 = vpop.f32.mrb[0].mxu0
        %v2970 = vadd.f32 %v2600, %v2969
        %v2971 = vpop.f32.mrb[0].mxu0
        %v2972 = vadd.f32 %v2596, %v2971
        %v2973 = vpop.f32.mrb[0].mxu0
        %v2974 = vadd.f32 %v2600, %v2973
        %2975 = vmatprep.mubr.bf16.mxu0 %v2526
        %2976 = vmatmul.mubr.bf16.gmra.mrb[0].mxu0 %v2525
        %v2977 = vpop.f32.mrb[0].mxu0
        %v2978 = vadd.f32 %v2596, %v2977
        %v2979 = vpop.f32.mrb[0].mxu0
        %v2980 = vadd.f32 %v2600, %v2979
        %v2981 = vpop.f32.mrb[0].mxu0
        %v2982 = vpop.f32.mrb[0].mxu0
        %2983 = vdwg.mxu0
        %2984 = vmatprep.subr.bf16.mxu0 %v2808
        %2985 = vmatpush1.bf16.msra.mxu0 %v2807
        %2986 = vmatprep.subr.bf16.mxu0 %v2812
        %2987 = vmatpush1.bf16.msra.mxu0 %v2811
        %2988 = vmatprep.subr.bf16.mxu0 %v2816
        %2989 = vmatpush1.bf16.msra.mxu0 %v2815
        %2990 = vmatprep.subr.bf16.mxu0 %v2820
        %2991 = vmatpush1.bf16.msra.mxu0 %v2819
        %2992 = vmatprep.subr.bf16.mxu0 %v2824
        %2993 = vmatpush1.bf16.msra.mxu0 %v2823
        %2994 = vmatprep.subr.bf16.mxu0 %v2828
        %2995 = vmatpush1.bf16.msra.mxu0 %v2827
        %2996 = vmatprep.subr.bf16.mxu0 %v2832
        %2997 = vmatpush1.bf16.msra.mxu0 %v2831
        %2998 = vmatprep.subr.bf16.mxu0 %v2836
        %2999 = vmatpush1.bf16.msra.mxu0 %v2835
        %3000 = vmatprep.subr.bf16.mxu0 %v2840
        %3001 = vmatpush1.bf16.msra.mxu0 %v2839
        %3002 = vmatprep.subr.bf16.mxu0 %v2844
        %3003 = vmatpush1.bf16.msra.mxu0 %v2843
        %3004 = vmatprep.subr.bf16.mxu0 %v2848
        %3005 = vmatpush1.bf16.msra.mxu0 %v2847
        %3006 = vmatprep.subr.bf16.mxu0 %v2852
        %3007 = vmatpush1.bf16.msra.mxu0 %v2851
        %3008 = vmatprep.subr.bf16.mxu0 %v2856
        %3009 = vmatpush1.bf16.msra.mxu0 %v2855
        %3010 = vmatprep.subr.bf16.mxu0 %v2860
        %3011 = vmatpush1.bf16.msra.mxu0 %v2859
        %3012 = vmatprep.subr.bf16.mxu0 %v2864
        %3013 = vmatpush1.bf16.msra.mxu0 %v2863
        %3014 = vmatprep.subr.bf16.mxu0 %v2868
        %3015 = vmatpush1.bf16.msra.mxu0 %v2867
        %3016 = vmatprep.mubr.bf16.mxu0 %v2524
        %3017 = vmatmul.mubr.bf16.gmra.mrb[0].mxu0 %v2523
        %v3018 = vpop.f32.mrb[0].mxu0
        %v3019 = vadd.f32 %v2604, %v3018
        %v3020 = vpop.f32.mrb[0].mxu0
        %v3021 = vadd.f32 %v2608, %v3020
        %v3022 = vpop.f32.mrb[0].mxu0
        %v3023 = vadd.f32 %v2604, %v3022
        %v3024 = vpop.f32.mrb[0].mxu0
        %v3025 = vadd.f32 %v2608, %v3024
        %3026 = vmatprep.mubr.bf16.mxu0 %v2526
        %3027 = vmatmul.mubr.bf16.gmra.mrb[0].mxu0 %v2525
        %v3028 = vpop.f32.mrb[0].mxu0
        %v3029 = vadd.f32 %v2604, %v3028
        %v3030 = vpop.f32.mrb[0].mxu0
        %v3031 = vadd.f32 %v2608, %v3030
        %v3032 = vpop.f32.mrb[0].mxu0
        %v3033 = vpop.f32.mrb[0].mxu0
        %3034 = vdwg.mxu0
        %v3035 = vpack.c.bf16 %v2519, %v2515
        %v3036 = vpack.c.bf16 %v2972, %v2968
        %v3037 = vpack.c.bf16 %v2978, %v2978
        %v3038 = vpack.c.bf16 %v3023, %v3019
        %v3039 = vpack.c.bf16 %v3029, %v3029
        %3040 = vmatprep.subr.bf16.mxu0 0
        %3041 = vmatpush1.bf16.xpose.msra.mxu0 %v3036
        %3042 = vmatprep.subr.bf16.mxu0 0
        %3043 = vmatpush1.bf16.xpose.msra.mxu0 %v3037
        %3044 = vmatprep.subr.bf16.mxu0 0
        %3045 = vmatpush1.bf16.xpose.msra.mxu0 0
        %3046 = vmatprep.subr.bf16.mxu0 0
        %3047 = vmatpush1.bf16.xpose.msra.mxu0 0
        %3048 = vmatprep.subr.bf16.mxu0 0
        %3049 = vmatpush1.bf16.xpose.msra.mxu0 0
        %3050 = vmatprep.subr.bf16.mxu0 0
        %3051 = vmatpush1.bf16.xpose.msra.mxu0 0
        %3052 = vmatprep.subr.bf16.mxu0 0
        %3053 = vmatpush1.bf16.xpose.msra.mxu0 0
        %3054 = vmatprep.subr.bf16.mxu0 0
        %3055 = vmatpush1.bf16.xpose.msra.mxu0 0
        %3056 = vmatprep.subr.bf16.mxu0 0
        %3057 = vmatpush1.bf16.xpose.msra.mxu0 0
        %3058 = vmatprep.subr.bf16.mxu0 0
        %3059 = vmatpush1.bf16.xpose.msra.mxu0 0
        %3060 = vmatprep.subr.bf16.mxu0 0
        %3061 = vmatpush1.bf16.xpose.msra.mxu0 0
        %3062 = vmatprep.subr.bf16.mxu0 0
        %3063 = vmatpush1.bf16.xpose.msra.mxu0 0
        %3064 = vmatprep.subr.bf16.mxu0 0
        %3065 = vmatpush1.bf16.xpose.msra.mxu0 0
        %3066 = vmatprep.subr.bf16.mxu0 0
        %3067 = vmatpush1.bf16.xpose.msra.mxu0 0
        %3068 = vmatprep.subr.bf16.mxu0 0
        %3069 = vmatpush1.bf16.xpose.msra.mxu0 0
        %3070 = vmatprep.subr.bf16.mxu0 0
        %3071 = vmatpush1.bf16.xpose.msra.mxu0 0
        %3072 = vmatprep.mubr.bf16.mxu0 0
        %3073 = vmatmul.mubr.bf16.gmra.mrb[0].mxu0 %v3035
        %v3074 = vpop.f32.mrb[0].mxu0
        %v3075 = vadd.f32 0.0, %v3074
        %v3076 = vpop.f32.mrb[0].mxu0
        %v3077 = vpop.f32.mrb[0].mxu0
        %v3078 = vadd.f32 0.0, %v3077
        %v3079 = vpop.f32.mrb[0].mxu0
        %3080 = vdwg.mxu0
        %v3081 = vmul.f32 %v3075, 0.088388346
        %v3082 = vmul.f32 %v3078, 0.088388346
        %vm3083 = vcmask 195584
        %v3084 = vsel %vm3083, %v3081, -inf
        %3085 = vmax.xlane.f32.xlu0 %v3084
        %v3086 = vpop.xlane.xlu0 %3085
        %v3087 = vsel %vm3083, %v3082, -inf
        %3088 = vmax.xlane.f32.xlu0 %v3087
        %v3089 = vpop.xlane.xlu0 %3088
        %v3090 = vsub.f32 %v3081, %v3086
        %v3091 = vsub.f32 %v3082, %v3089
        %v3092 = vmul.f32 %v3090, 1.442695
        %v3093 = vpow.pop %v3092
        %v3094 = vmul.f32 %v3091, 1.442695
        %v3095 = vpow.pop %v3094
        %v3096 = vsel %vm3083, %v3093, 0.0
        %3097 = vadd.xlane.f32.xlu0 %v3096
        %v3098 = vpop.xlane.xlu0 %3097
        %v3099 = vsel %vm3083, %v3095, 0.0
        %3100 = vadd.xlane.f32.xlu0 %v3099
        %v3101 = vpop.xlane.xlu0 %3100
        %v3102 = vrcp.pop %v3098
        %v3103 = vrcp.pop %v3101
        %v3104 = vmul.f32 %v3093, %v3102
        %v3105 = vmul.f32 %v3095, %v3103
        %v3106 = vpack.c.bf16 %v3105, %v3104
        %v3108 = vsel %vm3083, %v3106, 0
        %vm3110 = vcmask 1043456
        %v3112 = vsel %vm3110, %v3039, 0
        %3114 = vmatprep.subr.bf16.mxu0 0
        %3115 = vmatpush1.bf16.msra.mxu0 %v3038
        %3116 = vmatprep.subr.bf16.mxu0 0
        %3117 = vmatpush1.bf16.msra.mxu0 %v3112
        %3118 = vmatprep.subr.bf16.mxu0 0
        %3119 = vmatpush1.bf16.msra.mxu0 0
        %3120 = vmatprep.subr.bf16.mxu0 0
        %3121 = vmatpush1.bf16.msra.mxu0 0
        %3122 = vmatprep.subr.bf16.mxu0 0
        %3123 = vmatpush1.bf16.msra.mxu0 0
        %3124 = vmatprep.subr.bf16.mxu0 0
        %3125 = vmatpush1.bf16.msra.mxu0 0
        %3126 = vmatprep.subr.bf16.mxu0 0
        %3127 = vmatpush1.bf16.msra.mxu0 0
        %3128 = vmatprep.subr.bf16.mxu0 0
        %3129 = vmatpush1.bf16.msra.mxu0 0
        %3130 = vmatprep.subr.bf16.mxu0 0
        %3131 = vmatpush1.bf16.msra.mxu0 0
        %3132 = vmatprep.subr.bf16.mxu0 0
        %3133 = vmatpush1.bf16.msra.mxu0 0
        %3134 = vmatprep.subr.bf16.mxu0 0
        %3135 = vmatpush1.bf16.msra.mxu0 0
        %3136 = vmatprep.subr.bf16.mxu0 0
        %3137 = vmatpush1.bf16.msra.mxu0 0
        %3138 = vmatprep.subr.bf16.mxu0 0
        %3139 = vmatpush1.bf16.msra.mxu0 0
        %3140 = vmatprep.subr.bf16.mxu0 0
        %3141 = vmatpush1.bf16.msra.mxu0 0
        %3142 = vmatprep.subr.bf16.mxu0 0
        %3143 = vmatpush1.bf16.msra.mxu0 0
        %3144 = vmatprep.subr.bf16.mxu0 0
        %3145 = vmatpush1.bf16.msra.mxu0 0
        %3146 = vmatprep.mubr.bf16.mxu0 0
        %3147 = vmatmul.mubr.bf16.gmra.mrb[0].mxu0 %v3108
        %v3148 = vpop.f32.mrb[0].mxu0
        %v3149 = vadd.f32 0.0, %v3148
        %v3150 = vpop.f32.mrb[0].mxu0
        %v3151 = vpop.f32.mrb[0].mxu0
        %v3152 = vadd.f32 0.0, %v3151
        %v3153 = vpop.f32.mrb[0].mxu0
        %3154 = vdwg.mxu0
        %v3155 = vpack.c.bf16 %v3152, %v3149
        %v3156 = vld [vmem:[#allocation16] sm:$0xff]
        %v3157 = vld [vmem:[#allocation16 + $0x8] sm:$0xff]
        %v3158 = vld [vmem:[#allocation16 + $0x10] sm:$0xff]
        %v3159 = vld [vmem:[#allocation16 + $0x18] sm:$0xff]
        %v3160 = vld [vmem:[#allocation16 + $0x20] sm:$0xff]
        %v3161 = vld [vmem:[#allocation16 + $0x28] sm:$0xff]
        %v3162 = vld [vmem:[#allocation16 + $0x30] sm:$0xff]
        %v3163 = vld [vmem:[#allocation16 + $0x38] sm:$0xff]
        %v3164 = vld [vmem:[#allocation16 + $0x40] sm:$0xff]
        %v3165 = vld [vmem:[#allocation16 + $0x48] sm:$0xff]
        %v3166 = vld [vmem:[#allocation16 + $0x50] sm:$0xff]
        %v3167 = vld [vmem:[#allocation16 + $0x58] sm:$0xff]
        %v3168 = vld [vmem:[#allocation16 + $0x60] sm:$0xff]
        %v3169 = vld [vmem:[#allocation16 + $0x68] sm:$0xff]
        %v3170 = vld [vmem:[#allocation16 + $0x70] sm:$0xff]
        %v3171 = vld [vmem:[#allocation16 + $0x78] sm:$0xff]
        %v3172 = vpack.c.bf16 %v2521, %v2517
        %v3173 = vpack.c.bf16 %v2974, %v2970
        %v3174 = vpack.c.bf16 %v2980, %v2980
        %v3175 = vpack.c.bf16 %v3025, %v3021
        %v3176 = vpack.c.bf16 %v3031, %v3031
        %3177 = vmatprep.subr.bf16.mxu0 0
        %3178 = vmatpush1.bf16.xpose.msra.mxu0 %v3173
        %3179 = vmatprep.subr.bf16.mxu0 0
        %3180 = vmatpush1.bf16.xpose.msra.mxu0 %v3174
        %3181 = vmatprep.subr.bf16.mxu0 0
        %3182 = vmatpush1.bf16.xpose.msra.mxu0 0
        %3183 = vmatprep.subr.bf16.mxu0 0
        %3184 = vmatpush1.bf16.xpose.msra.mxu0 0
        %3185 = vmatprep.subr.bf16.mxu0 0
        %3186 = vmatpush1.bf16.xpose.msra.mxu0 0
        %3187 = vmatprep.subr.bf16.mxu0 0
        %3188 = vmatpush1.bf16.xpose.msra.mxu0 0
        %3189 = vmatprep.subr.bf16.mxu0 0
        %3190 = vmatpush1.bf16.xpose.msra.mxu0 0
        %3191 = vmatprep.subr.bf16.mxu0 0
        %3192 = vmatpush1.bf16.xpose.msra.mxu0 0
        %3193 = vmatprep.subr.bf16.mxu0 0
        %3194 = vmatpush1.bf16.xpose.msra.mxu0 0
        %3195 = vmatprep.subr.bf16.mxu0 0
        %3196 = vmatpush1.bf16.xpose.msra.mxu0 0
        %3197 = vmatprep.subr.bf16.mxu0 0
        %3198 = vmatpush1.bf16.xpose.msra.mxu0 0
        %3199 = vmatprep.subr.bf16.mxu0 0
        %3200 = vmatpush1.bf16.xpose.msra.mxu0 0
        %3201 = vmatprep.subr.bf16.mxu0 0
        %3202 = vmatpush1.bf16.xpose.msra.mxu0 0
        %3203 = vmatprep.subr.bf16.mxu0 0
        %3204 = vmatpush1.bf16.xpose.msra.mxu0 0
        %3205 = vmatprep.subr.bf16.mxu0 0
        %3206 = vmatpush1.bf16.xpose.msra.mxu0 0
        %3207 = vmatprep.subr.bf16.mxu0 0
        %3208 = vmatpush1.bf16.xpose.msra.mxu0 0
        %3209 = vmatprep.mubr.bf16.mxu0 0
        %3210 = vmatmul.mubr.bf16.gmra.mrb[0].mxu0 %v3172
        %v3211 = vpop.f32.mrb[0].mxu0
        %v3212 = vadd.f32 0.0, %v3211
        %v3213 = vpop.f32.mrb[0].mxu0
        %v3214 = vpop.f32.mrb[0].mxu0
        %v3215 = vadd.f32 0.0, %v3214
        %v3216 = vpop.f32.mrb[0].mxu0
        %3217 = vdwg.mxu0
        %v3218 = vmul.f32 %v3212, 0.088388346
        %v3219 = vmul.f32 %v3215, 0.088388346
        %v3220 = vsel %vm3083, %v3218, -inf
        %3221 = vmax.xlane.f32.xlu0 %v3220
        %v3222 = vpop.xlane.xlu0 %3221
        %v3223 = vsel %vm3083, %v3219, -inf
        %3224 = vmax.xlane.f32.xlu0 %v3223
        %v3225 = vpop.xlane.xlu0 %3224
        %v3226 = vsub.f32 %v3218, %v3222
        %v3227 = vsub.f32 %v3219, %v3225
        %v3228 = vmul.f32 %v3226, 1.442695
        %v3229 = vpow.pop %v3228
        %v3230 = vmul.f32 %v3227, 1.442695
        %v3231 = vpow.pop %v3230
        %v3232 = vsel %vm3083, %v3229, 0.0
        %3233 = vadd.xlane.f32.xlu0 %v3232
        %v3234 = vpop.xlane.xlu0 %3233
        %v3235 = vsel %vm3083, %v3231, 0.0
        %3236 = vadd.xlane.f32.xlu0 %v3235
        %v3237 = vpop.xlane.xlu0 %3236
        %v3238 = vrcp.pop %v3234
        %v3239 = vrcp.pop %v3237
        %v3240 = vmul.f32 %v3229, %v3238
        %v3241 = vmul.f32 %v3231, %v3239
        %v3242 = vpack.c.bf16 %v3241, %v3240
        %v3244 = vsel %vm3083, %v3242, 0
        %v3247 = vsel %vm3110, %v3176, 0
        %3249 = vmatprep.subr.bf16.mxu0 0
        %3250 = vmatpush1.bf16.msra.mxu0 %v3175
        %3251 = vmatprep.subr.bf16.mxu0 0
        %3252 = vmatpush1.bf16.msra.mxu0 %v3247
        %3253 = vmatprep.subr.bf16.mxu0 0
        %3254 = vmatpush1.bf16.msra.mxu0 0
        %3255 = vmatprep.subr.bf16.mxu0 0
        %3256 = vmatpush1.bf16.msra.mxu0 0
        %3257 = vmatprep.subr.bf16.mxu0 0
        %3258 = vmatpush1.bf16.msra.mxu0 0
        %3259 = vmatprep.subr.bf16.mxu0 0
        %3260 = vmatpush1.bf16.msra.mxu0 0
        %3261 = vmatprep.subr.bf16.mxu0 0
        %3262 = vmatpush1.bf16.msra.mxu0 0
        %3263 = vmatprep.subr.bf16.mxu0 0
        %3264 = vmatpush1.bf16.msra.mxu0 0
        %3265 = vmatprep.subr.bf16.mxu0 0
        %3266 = vmatpush1.bf16.msra.mxu0 0
        %3267 = vmatprep.subr.bf16.mxu0 0
        %3268 = vmatpush1.bf16.msra.mxu0 0
        %3269 = vmatprep.subr.bf16.mxu0 0
        %3270 = vmatpush1.bf16.msra.mxu0 0
        %3271 = vmatprep.subr.bf16.mxu0 0
        %3272 = vmatpush1.bf16.msra.mxu0 0
        %3273 = vmatprep.subr.bf16.mxu0 0
        %3274 = vmatpush1.bf16.msra.mxu0 0
        %3275 = vmatprep.subr.bf16.mxu0 0
        %3276 = vmatpush1.bf16.msra.mxu0 0
        %3277 = vmatprep.subr.bf16.mxu0 0
        %3278 = vmatpush1.bf16.msra.mxu0 0
        %3279 = vmatprep.subr.bf16.mxu0 0
        %3280 = vmatpush1.bf16.msra.mxu0 0
        %3281 = vmatprep.mubr.bf16.mxu0 0
        %3282 = vmatmul.mubr.bf16.gmra.mrb[0].mxu0 %v3244
        %v3283 = vpop.f32.mrb[0].mxu0
        %v3284 = vadd.f32 0.0, %v3283
        %v3285 = vpop.f32.mrb[0].mxu0
        %v3286 = vpop.f32.mrb[0].mxu0
        %v3287 = vadd.f32 0.0, %v3286
        %v3288 = vpop.f32.mrb[0].mxu0
        %3289 = vdwg.mxu0
        %v3290 = vpack.c.bf16 %v3287, %v3284
        %v3291 = vld [vmem:[#allocation16 + $0x80] sm:$0xff]
        %v3292 = vld [vmem:[#allocation16 + $0x88] sm:$0xff]
        %v3293 = vld [vmem:[#allocation16 + $0x90] sm:$0xff]
        %v3294 = vld [vmem:[#allocation16 + $0x98] sm:$0xff]
        %v3295 = vld [vmem:[#allocation16 + $0xa0] sm:$0xff]
        %v3296 = vld [vmem:[#allocation16 + $0xa8] sm:$0xff]
        %v3297 = vld [vmem:[#allocation16 + $0xb0] sm:$0xff]
        %v3298 = vld [vmem:[#allocation16 + $0xb8] sm:$0xff]
        %v3299 = vld [vmem:[#allocation16 + $0xc0] sm:$0xff]
        %v3300 = vld [vmem:[#allocation16 + $0xc8] sm:$0xff]
        %v3301 = vld [vmem:[#allocation16 + $0xd0] sm:$0xff]
        %v3302 = vld [vmem:[#allocation16 + $0xd8] sm:$0xff]
        %v3303 = vld [vmem:[#allocation16 + $0xe0] sm:$0xff]
        %v3304 = vld [vmem:[#allocation16 + $0xe8] sm:$0xff]
        %v3305 = vld [vmem:[#allocation16 + $0xf0] sm:$0xff]
        %v3306 = vld [vmem:[#allocation16 + $0xf8] sm:$0xff]
        %v3323 = vunpack.c.l.b16 %v3291
        %v3324 = vunpack.c.h.b16 %v3291
        %v3325 = vunpack.c.l.b16 %v3292
        %v3326 = vunpack.c.h.b16 %v3292
        %v3327 = vunpack.c.l.b16 %v3293
        %v3328 = vunpack.c.h.b16 %v3293
        %v3329 = vunpack.c.l.b16 %v3294
        %v3330 = vunpack.c.h.b16 %v3294
        %v3331 = vunpack.c.l.b16 %v3295
        %v3332 = vunpack.c.h.b16 %v3295
        %v3333 = vunpack.c.l.b16 %v3296
        %v3334 = vunpack.c.h.b16 %v3296
        %v3335 = vunpack.c.l.b16 %v3297
        %v3336 = vunpack.c.h.b16 %v3297
        %v3337 = vunpack.c.l.b16 %v3298
        %v3338 = vunpack.c.h.b16 %v3298
        %v3339 = vunpack.c.l.b16 %v3299
        %v3340 = vunpack.c.h.b16 %v3299
        %v3341 = vunpack.c.l.b16 %v3300
        %v3342 = vunpack.c.h.b16 %v3300
        %v3343 = vunpack.c.l.b16 %v3301
        %v3344 = vunpack.c.h.b16 %v3301
        %v3345 = vunpack.c.l.b16 %v3302
        %v3346 = vunpack.c.h.b16 %v3302
        %v3347 = vunpack.c.l.b16 %v3303
        %v3348 = vunpack.c.h.b16 %v3303
        %v3349 = vunpack.c.l.b16 %v3304
        %v3350 = vunpack.c.h.b16 %v3304
        %v3351 = vunpack.c.l.b16 %v3305
        %v3352 = vunpack.c.h.b16 %v3305
        %v3353 = vunpack.c.l.b16 %v3306
        %v3354 = vunpack.c.h.b16 %v3306
        %v3355 = vpack.c.b16 %v3325, %v3323
        %v3356 = vpack.c.b16 %v3326, %v3324
        %v3357 = vpack.c.b16 %v3329, %v3327
        %v3358 = vpack.c.b16 %v3330, %v3328
        %v3359 = vpack.c.b16 %v3333, %v3331
        %v3360 = vpack.c.b16 %v3334, %v3332
        %v3361 = vpack.c.b16 %v3337, %v3335
        %v3362 = vpack.c.b16 %v3338, %v3336
        %v3363 = vpack.c.b16 %v3341, %v3339
        %v3364 = vpack.c.b16 %v3342, %v3340
        %v3365 = vpack.c.b16 %v3345, %v3343
        %v3366 = vpack.c.b16 %v3346, %v3344
        %v3367 = vpack.c.b16 %v3349, %v3347
        %v3368 = vpack.c.b16 %v3350, %v3348
        %v3369 = vpack.c.b16 %v3353, %v3351
        %v3370 = vpack.c.b16 %v3354, %v3352
        %3387 = vmatprep.subr.bf16.mxu0 %v3356
        %3388 = vmatpush1.bf16.msra.mxu0 %v3355
        %3389 = vmatprep.subr.bf16.mxu0 %v3358
        %3390 = vmatpush1.bf16.msra.mxu0 %v3357
        %3391 = vmatprep.subr.bf16.mxu0 %v3360
        %3392 = vmatpush1.bf16.msra.mxu0 %v3359
        %3393 = vmatprep.subr.bf16.mxu0 %v3362
        %3394 = vmatpush1.bf16.msra.mxu0 %v3361
        %3395 = vmatprep.subr.bf16.mxu0 %v3364
        %3396 = vmatpush1.bf16.msra.mxu0 %v3363
        %3397 = vmatprep.subr.bf16.mxu0 %v3366
        %3398 = vmatpush1.bf16.msra.mxu0 %v3365
        %3399 = vmatprep.subr.bf16.mxu0 %v3368
        %3400 = vmatpush1.bf16.msra.mxu0 %v3367
        %3401 = vmatprep.subr.bf16.mxu0 %v3370
        %3402 = vmatpush1.bf16.msra.mxu0 %v3369
        %3403 = vmatprep.subr.bf16.mxu0 0
        %3404 = vmatpush1.bf16.msra.mxu0 0
        %3405 = vmatprep.subr.bf16.mxu0 0
        %3406 = vmatpush1.bf16.msra.mxu0 0
        %3407 = vmatprep.subr.bf16.mxu0 0
        %3408 = vmatpush1.bf16.msra.mxu0 0
        %3409 = vmatprep.subr.bf16.mxu0 0
        %3410 = vmatpush1.bf16.msra.mxu0 0
        %3411 = vmatprep.subr.bf16.mxu0 0
        %3412 = vmatpush1.bf16.msra.mxu0 0
        %3413 = vmatprep.subr.bf16.mxu0 0
        %3414 = vmatpush1.bf16.msra.mxu0 0
        %3415 = vmatprep.subr.bf16.mxu0 0
        %3416 = vmatpush1.bf16.msra.mxu0 0
        %3417 = vmatprep.subr.bf16.mxu0 0
        %3418 = vmatpush1.bf16.msra.mxu0 0
        %3419 = vmatprep.mubr.bf16.mxu0 0
        %3420 = vmatmul.mubr.bf16.gmra.mrb[0].mxu0 %v3290
        %v3421 = vpop.f32.mrb[0].mxu0
        %v3422 = vadd.f32 0.0, %v3421
        %v3423 = vpop.f32.mrb[0].mxu0
        %v3424 = vadd.f32 0.0, %v3423
        %v3425 = vpop.f32.mrb[0].mxu0
        %v3426 = vadd.f32 0.0, %v3425
        %v3427 = vpop.f32.mrb[0].mxu0
        %v3428 = vadd.f32 0.0, %v3427
        %3429 = vdwg.mxu0
        %v3446 = vunpack.c.l.b16 %v3156
        %v3447 = vunpack.c.h.b16 %v3156
        %v3448 = vunpack.c.l.b16 %v3157
        %v3449 = vunpack.c.h.b16 %v3157
        %v3450 = vunpack.c.l.b16 %v3158
        %v3451 = vunpack.c.h.b16 %v3158
        %v3452 = vunpack.c.l.b16 %v3159
        %v3453 = vunpack.c.h.b16 %v3159
        %v3454 = vunpack.c.l.b16 %v3160
        %v3455 = vunpack.c.h.b16 %v3160
        %v3456 = vunpack.c.l.b16 %v3161
        %v3457 = vunpack.c.h.b16 %v3161
        %v3458 = vunpack.c.l.b16 %v3162
        %v3459 = vunpack.c.h.b16 %v3162
        %v3460 = vunpack.c.l.b16 %v3163
        %v3461 = vunpack.c.h.b16 %v3163
        %v3462 = vunpack.c.l.b16 %v3164
        %v3463 = vunpack.c.h.b16 %v3164
        %v3464 = vunpack.c.l.b16 %v3165
        %v3465 = vunpack.c.h.b16 %v3165
        %v3466 = vunpack.c.l.b16 %v3166
        %v3467 = vunpack.c.h.b16 %v3166
        %v3468 = vunpack.c.l.b16 %v3167
        %v3469 = vunpack.c.h.b16 %v3167
        %v3470 = vunpack.c.l.b16 %v3168
        %v3471 = vunpack.c.h.b16 %v3168
        %v3472 = vunpack.c.l.b16 %v3169
        %v3473 = vunpack.c.h.b16 %v3169
        %v3474 = vunpack.c.l.b16 %v3170
        %v3475 = vunpack.c.h.b16 %v3170
        %v3476 = vunpack.c.l.b16 %v3171
        %v3477 = vunpack.c.h.b16 %v3171
        %v3478 = vpack.c.b16 %v3448, %v3446
        %v3479 = vpack.c.b16 %v3449, %v3447
        %v3480 = vpack.c.b16 %v3452, %v3450
        %v3481 = vpack.c.b16 %v3453, %v3451
        %v3482 = vpack.c.b16 %v3456, %v3454
        %v3483 = vpack.c.b16 %v3457, %v3455
        %v3484 = vpack.c.b16 %v3460, %v3458
        %v3485 = vpack.c.b16 %v3461, %v3459
        %v3486 = vpack.c.b16 %v3464, %v3462
        %v3487 = vpack.c.b16 %v3465, %v3463
        %v3488 = vpack.c.b16 %v3468, %v3466
        %v3489 = vpack.c.b16 %v3469, %v3467
        %v3490 = vpack.c.b16 %v3472, %v3470
        %v3491 = vpack.c.b16 %v3473, %v3471
        %v3492 = vpack.c.b16 %v3476, %v3474
        %v3493 = vpack.c.b16 %v3477, %v3475
        %3510 = vmatprep.subr.bf16.mxu0 %v3479
        %3511 = vmatpush1.bf16.msra.mxu0 %v3478
        %3512 = vmatprep.subr.bf16.mxu0 %v3481
        %3513 = vmatpush1.bf16.msra.mxu0 %v3480
        %3514 = vmatprep.subr.bf16.mxu0 %v3483
        %3515 = vmatpush1.bf16.msra.mxu0 %v3482
        %3516 = vmatprep.subr.bf16.mxu0 %v3485
        %3517 = vmatpush1.bf16.msra.mxu0 %v3484
        %3518 = vmatprep.subr.bf16.mxu0 %v3487
        %3519 = vmatpush1.bf16.msra.mxu0 %v3486
        %3520 = vmatprep.subr.bf16.mxu0 %v3489
        %3521 = vmatpush1.bf16.msra.mxu0 %v3488
        %3522 = vmatprep.subr.bf16.mxu0 %v3491
        %3523 = vmatpush1.bf16.msra.mxu0 %v3490
        %3524 = vmatprep.subr.bf16.mxu0 %v3493
        %3525 = vmatpush1.bf16.msra.mxu0 %v3492
        %3526 = vmatprep.subr.bf16.mxu0 0
        %3527 = vmatpush1.bf16.msra.mxu0 0
        %3528 = vmatprep.subr.bf16.mxu0 0
        %3529 = vmatpush1.bf16.msra.mxu0 0
        %3530 = vmatprep.subr.bf16.mxu0 0
        %3531 = vmatpush1.bf16.msra.mxu0 0
        %3532 = vmatprep.subr.bf16.mxu0 0
        %3533 = vmatpush1.bf16.msra.mxu0 0
        %3534 = vmatprep.subr.bf16.mxu0 0
        %3535 = vmatpush1.bf16.msra.mxu0 0
        %3536 = vmatprep.subr.bf16.mxu0 0
        %3537 = vmatpush1.bf16.msra.mxu0 0
        %3538 = vmatprep.subr.bf16.mxu0 0
        %3539 = vmatpush1.bf16.msra.mxu0 0
        %3540 = vmatprep.subr.bf16.mxu0 0
        %3541 = vmatpush1.bf16.msra.mxu0 0
        %3542 = vmatprep.mubr.bf16.mxu0 0
        %3543 = vmatmul.mubr.bf16.gmra.mrb[0].mxu0 %v3155
        %v3544 = vpop.f32.mrb[0].mxu0
        %v3545 = vadd.f32 %v3422, %v3544
        %v3546 = vpop.f32.mrb[0].mxu0
        %v3547 = vadd.f32 %v3424, %v3546
        %v3548 = vpop.f32.mrb[0].mxu0
        %v3549 = vadd.f32 %v3426, %v3548
        %v3550 = vpop.f32.mrb[0].mxu0
        %v3551 = vadd.f32 %v3428, %v3550
        %3552 = vdwg.mxu0
        %v3553 = vadd.f32 %v2200, %v3545
        %v3554 = vadd.f32 %v2201, %v3547
        %v3555 = vadd.f32 %v2202, %v3549
        %v3556 = vadd.f32 %v2203, %v3551
        %v3557 = vld [vmem:[%s15] sm:$0x3]
        %v3559 = vlaneseq
        %v3560 = vshrl.u32 %v3559, 7
        %v3561 = vsub.s32 0, %v3560
        %v3562 = vrot.slane %v3557, %v3561
        %v3563 = vlaneseq
        %v3564 = vshrl.u32 %v3563, 7
        %v3565 = vsub.s32 1, %v3564
        %v3566 = vrot.slane %v3557, %v3565
        %v3569 = vadd.f32 %v3553, %v3562
        %v3570 = vadd.f32 %v3554, %v3566
        %v3571 = vadd.f32 %v3555, %v3562
        %v3572 = vadd.f32 %v3556, %v3566
        %v3573 = vadd.f32 %v3569, %v3570
        %3574 = vadd.xlane.f32.xlu0 %v3573
        %v3575 = vpop.xlane.xlu0 %3574
        %v3576 = vadd.f32 %v3571, %v3572
        %3577 = vadd.xlane.f32.xlu0 %v3576
        %v3578 = vpop.xlane.xlu0 %3577
        %v3579 = vmul.f32 %v3575, %v879
        %v3580 = vmul.f32 %v3578, %v879
        %v3581 = vsub.f32 %v3569, %v3579
        %v3582 = vsub.f32 %v3570, %v3579
        %v3583 = vsub.f32 %v3571, %v3580
        %v3584 = vsub.f32 %v3572, %v3580
        %v3585 = vmul.f32 %v3581, %v3581
        %v3586 = vmul.f32 %v3582, %v3582
        %v3587 = vmul.f32 %v3583, %v3583
        %v3588 = vmul.f32 %v3584, %v3584
        %v3589 = vadd.f32 %v3585, %v3586
        %3590 = vadd.xlane.f32.xlu0 %v3589
        %v3591 = vpop.xlane.xlu0 %3590
        %v3592 = vadd.f32 %v3587, %v3588
        %3593 = vadd.xlane.f32.xlu0 %v3592
        %v3594 = vpop.xlane.xlu0 %3593
        %v3595 = vmul.f32 %v3591, %v879
        %v3596 = vmul.f32 %v3594, %v879
        %v3597 = vadd.f32 %v3595, 1e-05
        %v3598 = vadd.f32 %v3596, 1e-05
        %v3599 = vrsqrt.pop %v3597
        %v3600 = vrsqrt.pop %v3598
        %v3601 = vmul.f32 %v3581, %v3599
        %v3602 = vmul.f32 %v3582, %v3599
        %v3603 = vmul.f32 %v3583, %v3600
        %v3604 = vmul.f32 %v3584, %v3600
        %v3605 = vld [vmem:[%s16] sm:$0x3]
        %v3607 = vlaneseq
        %v3608 = vshrl.u32 %v3607, 7
        %v3609 = vsub.s32 0, %v3608
        %v3610 = vrot.slane %v3605, %v3609
        %v3611 = vlaneseq
        %v3612 = vshrl.u32 %v3611, 7
        %v3613 = vsub.s32 1, %v3612
        %v3614 = vrot.slane %v3605, %v3613
        %v3617 = vmul.f32 %v3601, %v3610
        %v3618 = vmul.f32 %v3602, %v3614
        %v3619 = vmul.f32 %v3603, %v3610
        %v3620 = vmul.f32 %v3604, %v3614
        %v3621 = vld [vmem:[%s17] sm:$0x3]
        %v3623 = vlaneseq
        %v3624 = vshrl.u32 %v3623, 7
        %v3625 = vsub.s32 0, %v3624
        %v3626 = vrot.slane %v3621, %v3625
        %v3627 = vlaneseq
        %v3628 = vshrl.u32 %v3627, 7
        %v3629 = vsub.s32 1, %v3628
        %v3630 = vrot.slane %v3621, %v3629
        %v3633 = vadd.f32 %v3617, %v3626
        %v3634 = vadd.f32 %v3618, %v3630
        %v3635 = vadd.f32 %v3619, %v3626
        %v3636 = vadd.f32 %v3620, %v3630
        %v3637 = vpack.c.bf16 %v3635, %v3633
        %v3638 = vpack.c.bf16 %v3636, %v3634
        %v3639 = vld [vmem:[#allocation17] sm:$0xff]
        %v3640 = vld [vmem:[#allocation17 + $0x8] sm:$0xff]
        %v3641 = vld [vmem:[#allocation17 + $0x10] sm:$0xff]
        %v3642 = vld [vmem:[#allocation17 + $0x18] sm:$0xff]
        %v3643 = vld [vmem:[#allocation17 + $0x20] sm:$0xff]
        %v3644 = vld [vmem:[#allocation17 + $0x28] sm:$0xff]
        %v3645 = vld [vmem:[#allocation17 + $0x30] sm:$0xff]
        %v3646 = vld [vmem:[#allocation17 + $0x38] sm:$0xff]
        %v3647 = vld [vmem:[#allocation17 + $0x40] sm:$0xff]
        %v3648 = vld [vmem:[#allocation17 + $0x48] sm:$0xff]
        %v3649 = vld [vmem:[#allocation17 + $0x50] sm:$0xff]
        %v3650 = vld [vmem:[#allocation17 + $0x58] sm:$0xff]
        %v3651 = vld [vmem:[#allocation17 + $0x60] sm:$0xff]
        %v3652 = vld [vmem:[#allocation17 + $0x68] sm:$0xff]
        %v3653 = vld [vmem:[#allocation17 + $0x70] sm:$0xff]
        %v3654 = vld [vmem:[#allocation17 + $0x78] sm:$0xff]
        %v3655 = vld [vmem:[#allocation17 + $0x80] sm:$0xff]
        %v3656 = vld [vmem:[#allocation17 + $0x88] sm:$0xff]
        %v3657 = vld [vmem:[#allocation17 + $0x90] sm:$0xff]
        %v3658 = vld [vmem:[#allocation17 + $0x98] sm:$0xff]
        %v3659 = vld [vmem:[#allocation17 + $0xa0] sm:$0xff]
        %v3660 = vld [vmem:[#allocation17 + $0xa8] sm:$0xff]
        %v3661 = vld [vmem:[#allocation17 + $0xb0] sm:$0xff]
        %v3662 = vld [vmem:[#allocation17 + $0xb8] sm:$0xff]
        %v3663 = vld [vmem:[#allocation17 + $0xc0] sm:$0xff]
        %v3664 = vld [vmem:[#allocation17 + $0xc8] sm:$0xff]
        %v3665 = vld [vmem:[#allocation17 + $0xd0] sm:$0xff]
        %v3666 = vld [vmem:[#allocation17 + $0xd8] sm:$0xff]
        %v3667 = vld [vmem:[#allocation17 + $0xe0] sm:$0xff]
        %v3668 = vld [vmem:[#allocation17 + $0xe8] sm:$0xff]
        %v3669 = vld [vmem:[#allocation17 + $0xf0] sm:$0xff]
        %v3670 = vld [vmem:[#allocation17 + $0xf8] sm:$0xff]
        %v3671 = vld [vmem:[#allocation17 + $0x100] sm:$0xff]
        %v3672 = vld [vmem:[#allocation17 + $0x108] sm:$0xff]
        %v3673 = vld [vmem:[#allocation17 + $0x110] sm:$0xff]
        %v3674 = vld [vmem:[#allocation17 + $0x118] sm:$0xff]
        %v3675 = vld [vmem:[#allocation17 + $0x120] sm:$0xff]
        %v3676 = vld [vmem:[#allocation17 + $0x128] sm:$0xff]
        %v3677 = vld [vmem:[#allocation17 + $0x130] sm:$0xff]
        %v3678 = vld [vmem:[#allocation17 + $0x138] sm:$0xff]
        %v3679 = vld [vmem:[#allocation17 + $0x140] sm:$0xff]
        %v3680 = vld [vmem:[#allocation17 + $0x148] sm:$0xff]
        %v3681 = vld [vmem:[#allocation17 + $0x150] sm:$0xff]
        %v3682 = vld [vmem:[#allocation17 + $0x158] sm:$0xff]
        %v3683 = vld [vmem:[#allocation17 + $0x160] sm:$0xff]
        %v3684 = vld [vmem:[#allocation17 + $0x168] sm:$0xff]
        %v3685 = vld [vmem:[#allocation17 + $0x170] sm:$0xff]
        %v3686 = vld [vmem:[#allocation17 + $0x178] sm:$0xff]
        %v3687 = vld [vmem:[#allocation17 + $0x180] sm:$0xff]
        %v3688 = vld [vmem:[#allocation17 + $0x188] sm:$0xff]
        %v3689 = vld [vmem:[#allocation17 + $0x190] sm:$0xff]
        %v3690 = vld [vmem:[#allocation17 + $0x198] sm:$0xff]
        %v3691 = vld [vmem:[#allocation17 + $0x1a0] sm:$0xff]
        %v3692 = vld [vmem:[#allocation17 + $0x1a8] sm:$0xff]
        %v3693 = vld [vmem:[#allocation17 + $0x1b0] sm:$0xff]
        %v3694 = vld [vmem:[#allocation17 + $0x1b8] sm:$0xff]
        %v3695 = vld [vmem:[#allocation17 + $0x1c0] sm:$0xff]
        %v3696 = vld [vmem:[#allocation17 + $0x1c8] sm:$0xff]
        %v3697 = vld [vmem:[#allocation17 + $0x1d0] sm:$0xff]
        %v3698 = vld [vmem:[#allocation17 + $0x1d8] sm:$0xff]
        %v3699 = vld [vmem:[#allocation17 + $0x1e0] sm:$0xff]
        %v3700 = vld [vmem:[#allocation17 + $0x1e8] sm:$0xff]
        %v3701 = vld [vmem:[#allocation17 + $0x1f0] sm:$0xff]
        %v3702 = vld [vmem:[#allocation17 + $0x1f8] sm:$0xff]
        %v3703 = vld [vmem:[%s19] sm:$0xf]
        %v3705 = vlaneseq
        %v3706 = vshrl.u32 %v3705, 7
        %v3707 = vsub.s32 0, %v3706
        %v3708 = vrot.slane %v3703, %v3707
        %v3709 = vlaneseq
        %v3710 = vshrl.u32 %v3709, 7
        %v3711 = vsub.s32 1, %v3710
        %v3712 = vrot.slane %v3703, %v3711
        %v3713 = vlaneseq
        %v3714 = vshrl.u32 %v3713, 7
        %v3715 = vsub.s32 2, %v3714
        %v3716 = vrot.slane %v3703, %v3715
        %v3717 = vlaneseq
        %v3718 = vshrl.u32 %v3717, 7
        %v3719 = vsub.s32 3, %v3718
        %v3720 = vrot.slane %v3703, %v3719
        %v3789 = vunpack.c.l.b16 %v3639
        %v3790 = vunpack.c.h.b16 %v3639
        %v3791 = vunpack.c.l.b16 %v3640
        %v3792 = vunpack.c.h.b16 %v3640
        %v3793 = vunpack.c.l.b16 %v3641
        %v3794 = vunpack.c.h.b16 %v3641
        %v3795 = vunpack.c.l.b16 %v3642
        %v3796 = vunpack.c.h.b16 %v3642
        %v3797 = vunpack.c.l.b16 %v3643
        %v3798 = vunpack.c.h.b16 %v3643
        %v3799 = vunpack.c.l.b16 %v3644
        %v3800 = vunpack.c.h.b16 %v3644
        %v3801 = vunpack.c.l.b16 %v3645
        %v3802 = vunpack.c.h.b16 %v3645
        %v3803 = vunpack.c.l.b16 %v3646
        %v3804 = vunpack.c.h.b16 %v3646
        %v3805 = vunpack.c.l.b16 %v3647
        %v3806 = vunpack.c.h.b16 %v3647
        %v3807 = vunpack.c.l.b16 %v3648
        %v3808 = vunpack.c.h.b16 %v3648
        %v3809 = vunpack.c.l.b16 %v3649
        %v3810 = vunpack.c.h.b16 %v3649
        %v3811 = vunpack.c.l.b16 %v3650
        %v3812 = vunpack.c.h.b16 %v3650
        %v3813 = vunpack.c.l.b16 %v3651
        %v3814 = vunpack.c.h.b16 %v3651
        %v3815 = vunpack.c.l.b16 %v3652
        %v3816 = vunpack.c.h.b16 %v3652
        %v3817 = vunpack.c.l.b16 %v3653
        %v3818 = vunpack.c.h.b16 %v3653
        %v3819 = vunpack.c.l.b16 %v3654
        %v3820 = vunpack.c.h.b16 %v3654
        %v3821 = vunpack.c.l.b16 %v3655
        %v3822 = vunpack.c.h.b16 %v3655
        %v3823 = vunpack.c.l.b16 %v3656
        %v3824 = vunpack.c.h.b16 %v3656
        %v3825 = vunpack.c.l.b16 %v3657
        %v3826 = vunpack.c.h.b16 %v3657
        %v3827 = vunpack.c.l.b16 %v3658
        %v3828 = vunpack.c.h.b16 %v3658
        %v3829 = vunpack.c.l.b16 %v3659
        %v3830 = vunpack.c.h.b16 %v3659
        %v3831 = vunpack.c.l.b16 %v3660
        %v3832 = vunpack.c.h.b16 %v3660
        %v3833 = vunpack.c.l.b16 %v3661
        %v3834 = vunpack.c.h.b16 %v3661
        %v3835 = vunpack.c.l.b16 %v3662
        %v3836 = vunpack.c.h.b16 %v3662
        %v3837 = vunpack.c.l.b16 %v3663
        %v3838 = vunpack.c.h.b16 %v3663
        %v3839 = vunpack.c.l.b16 %v3664
        %v3840 = vunpack.c.h.b16 %v3664
        %v3841 = vunpack.c.l.b16 %v3665
        %v3842 = vunpack.c.h.b16 %v3665
        %v3843 = vunpack.c.l.b16 %v3666
        %v3844 = vunpack.c.h.b16 %v3666
        %v3845 = vunpack.c.l.b16 %v3667
        %v3846 = vunpack.c.h.b16 %v3667
        %v3847 = vunpack.c.l.b16 %v3668
        %v3848 = vunpack.c.h.b16 %v3668
        %v3849 = vunpack.c.l.b16 %v3669
        %v3850 = vunpack.c.h.b16 %v3669
        %v3851 = vunpack.c.l.b16 %v3670
        %v3852 = vunpack.c.h.b16 %v3670
        %v3853 = vunpack.c.l.b16 %v3671
        %v3854 = vunpack.c.h.b16 %v3671
        %v3855 = vunpack.c.l.b16 %v3672
        %v3856 = vunpack.c.h.b16 %v3672
        %v3857 = vunpack.c.l.b16 %v3673
        %v3858 = vunpack.c.h.b16 %v3673
        %v3859 = vunpack.c.l.b16 %v3674
        %v3860 = vunpack.c.h.b16 %v3674
        %v3861 = vunpack.c.l.b16 %v3675
        %v3862 = vunpack.c.h.b16 %v3675
        %v3863 = vunpack.c.l.b16 %v3676
        %v3864 = vunpack.c.h.b16 %v3676
        %v3865 = vunpack.c.l.b16 %v3677
        %v3866 = vunpack.c.h.b16 %v3677
        %v3867 = vunpack.c.l.b16 %v3678
        %v3868 = vunpack.c.h.b16 %v3678
        %v3869 = vunpack.c.l.b16 %v3679
        %v3870 = vunpack.c.h.b16 %v3679
        %v3871 = vunpack.c.l.b16 %v3680
        %v3872 = vunpack.c.h.b16 %v3680
        %v3873 = vunpack.c.l.b16 %v3681
        %v3874 = vunpack.c.h.b16 %v3681
        %v3875 = vunpack.c.l.b16 %v3682
        %v3876 = vunpack.c.h.b16 %v3682
        %v3877 = vunpack.c.l.b16 %v3683
        %v3878 = vunpack.c.h.b16 %v3683
        %v3879 = vunpack.c.l.b16 %v3684
        %v3880 = vunpack.c.h.b16 %v3684
        %v3881 = vunpack.c.l.b16 %v3685
        %v3882 = vunpack.c.h.b16 %v3685
        %v3883 = vunpack.c.l.b16 %v3686
        %v3884 = vunpack.c.h.b16 %v3686
        %v3885 = vunpack.c.l.b16 %v3687
        %v3886 = vunpack.c.h.b16 %v3687
        %v3887 = vunpack.c.l.b16 %v3688
        %v3888 = vunpack.c.h.b16 %v3688
        %v3889 = vunpack.c.l.b16 %v3689
        %v3890 = vunpack.c.h.b16 %v3689
        %v3891 = vunpack.c.l.b16 %v3690
        %v3892 = vunpack.c.h.b16 %v3690
        %v3893 = vunpack.c.l.b16 %v3691
        %v3894 = vunpack.c.h.b16 %v3691
        %v3895 = vunpack.c.l.b16 %v3692
        %v3896 = vunpack.c.h.b16 %v3692
        %v3897 = vunpack.c.l.b16 %v3693
        %v3898 = vunpack.c.h.b16 %v3693
        %v3899 = vunpack.c.l.b16 %v3694
        %v3900 = vunpack.c.h.b16 %v3694
        %v3901 = vunpack.c.l.b16 %v3695
        %v3902 = vunpack.c.h.b16 %v3695
        %v3903 = vunpack.c.l.b16 %v3696
        %v3904 = vunpack.c.h.b16 %v3696
        %v3905 = vunpack.c.l.b16 %v3697
        %v3906 = vunpack.c.h.b16 %v3697
        %v3907 = vunpack.c.l.b16 %v3698
        %v3908 = vunpack.c.h.b16 %v3698
        %v3909 = vunpack.c.l.b16 %v3699
        %v3910 = vunpack.c.h.b16 %v3699
        %v3911 = vunpack.c.l.b16 %v3700
        %v3912 = vunpack.c.h.b16 %v3700
        %v3913 = vunpack.c.l.b16 %v3701
        %v3914 = vunpack.c.h.b16 %v3701
        %v3915 = vunpack.c.l.b16 %v3702
        %v3916 = vunpack.c.h.b16 %v3702
        %v3917 = vpack.c.b16 %v3793, %v3789
        %v3918 = vpack.c.b16 %v3794, %v3790
        %v3919 = vpack.c.b16 %v3795, %v3791
        %v3920 = vpack.c.b16 %v3796, %v3792
        %v3921 = vpack.c.b16 %v3801, %v3797
        %v3922 = vpack.c.b16 %v3802, %v3798
        %v3923 = vpack.c.b16 %v3803, %v3799
        %v3924 = vpack.c.b16 %v3804, %v3800
        %v3925 = vpack.c.b16 %v3809, %v3805
        %v3926 = vpack.c.b16 %v3810, %v3806
        %v3927 = vpack.c.b16 %v3811, %v3807
        %v3928 = vpack.c.b16 %v3812, %v3808
        %v3929 = vpack.c.b16 %v3817, %v3813
        %v3930 = vpack.c.b16 %v3818, %v3814
        %v3931 = vpack.c.b16 %v3819, %v3815
        %v3932 = vpack.c.b16 %v3820, %v3816
        %v3933 = vpack.c.b16 %v3825, %v3821
        %v3934 = vpack.c.b16 %v3826, %v3822
        %v3935 = vpack.c.b16 %v3827, %v3823
        %v3936 = vpack.c.b16 %v3828, %v3824
        %v3937 = vpack.c.b16 %v3833, %v3829
        %v3938 = vpack.c.b16 %v3834, %v3830
        %v3939 = vpack.c.b16 %v3835, %v3831
        %v3940 = vpack.c.b16 %v3836, %v3832
        %v3941 = vpack.c.b16 %v3841, %v3837
        %v3942 = vpack.c.b16 %v3842, %v3838
        %v3943 = vpack.c.b16 %v3843, %v3839
        %v3944 = vpack.c.b16 %v3844, %v3840
        %v3945 = vpack.c.b16 %v3849, %v3845
        %v3946 = vpack.c.b16 %v3850, %v3846
        %v3947 = vpack.c.b16 %v3851, %v3847
        %v3948 = vpack.c.b16 %v3852, %v3848
        %v3949 = vpack.c.b16 %v3857, %v3853
        %v3950 = vpack.c.b16 %v3858, %v3854
        %v3951 = vpack.c.b16 %v3859, %v3855
        %v3952 = vpack.c.b16 %v3860, %v3856
        %v3953 = vpack.c.b16 %v3865, %v3861
        %v3954 = vpack.c.b16 %v3866, %v3862
        %v3955 = vpack.c.b16 %v3867, %v3863
        %v3956 = vpack.c.b16 %v3868, %v3864
        %v3957 = vpack.c.b16 %v3873, %v3869
        %v3958 = vpack.c.b16 %v3874, %v3870
        %v3959 = vpack.c.b16 %v3875, %v3871
        %v3960 = vpack.c.b16 %v3876, %v3872
        %v3961 = vpack.c.b16 %v3881, %v3877
        %v3962 = vpack.c.b16 %v3882, %v3878
        %v3963 = vpack.c.b16 %v3883, %v3879
        %v3964 = vpack.c.b16 %v3884, %v3880
        %v3965 = vpack.c.b16 %v3889, %v3885
        %v3966 = vpack.c.b16 %v3890, %v3886
        %v3967 = vpack.c.b16 %v3891, %v3887
        %v3968 = vpack.c.b16 %v3892, %v3888
        %v3969 = vpack.c.b16 %v3897, %v3893
        %v3970 = vpack.c.b16 %v3898, %v3894
        %v3971 = vpack.c.b16 %v3899, %v3895
        %v3972 = vpack.c.b16 %v3900, %v3896
        %v3973 = vpack.c.b16 %v3905, %v3901
        %v3974 = vpack.c.b16 %v3906, %v3902
        %v3975 = vpack.c.b16 %v3907, %v3903
        %v3976 = vpack.c.b16 %v3908, %v3904
        %v3977 = vpack.c.b16 %v3913, %v3909
        %v3978 = vpack.c.b16 %v3914, %v3910
        %v3979 = vpack.c.b16 %v3915, %v3911
        %v3980 = vpack.c.b16 %v3916, %v3912
        %4045 = vmatprep.subr.bf16.mxu0 %v3918
        %4046 = vmatpush1.bf16.msra.mxu0 %v3917
        %4047 = vmatprep.subr.bf16.mxu0 %v3922
        %4048 = vmatpush1.bf16.msra.mxu0 %v3921
        %4049 = vmatprep.subr.bf16.mxu0 %v3926
        %4050 = vmatpush1.bf16.msra.mxu0 %v3925
        %4051 = vmatprep.subr.bf16.mxu0 %v3930
        %4052 = vmatpush1.bf16.msra.mxu0 %v3929
        %4053 = vmatprep.subr.bf16.mxu0 %v3934
        %4054 = vmatpush1.bf16.msra.mxu0 %v3933
        %4055 = vmatprep.subr.bf16.mxu0 %v3938
        %4056 = vmatpush1.bf16.msra.mxu0 %v3937
        %4057 = vmatprep.subr.bf16.mxu0 %v3942
        %4058 = vmatpush1.bf16.msra.mxu0 %v3941
        %4059 = vmatprep.subr.bf16.mxu0 %v3946
        %4060 = vmatpush1.bf16.msra.mxu0 %v3945
        %4061 = vmatprep.subr.bf16.mxu0 %v3950
        %4062 = vmatpush1.bf16.msra.mxu0 %v3949
        %4063 = vmatprep.subr.bf16.mxu0 %v3954
        %4064 = vmatpush1.bf16.msra.mxu0 %v3953
        %4065 = vmatprep.subr.bf16.mxu0 %v3958
        %4066 = vmatpush1.bf16.msra.mxu0 %v3957
        %4067 = vmatprep.subr.bf16.mxu0 %v3962
        %4068 = vmatpush1.bf16.msra.mxu0 %v3961
        %4069 = vmatprep.subr.bf16.mxu0 %v3966
        %4070 = vmatpush1.bf16.msra.mxu0 %v3965
        %4071 = vmatprep.subr.bf16.mxu0 %v3970
        %4072 = vmatpush1.bf16.msra.mxu0 %v3969
        %4073 = vmatprep.subr.bf16.mxu0 %v3974
        %4074 = vmatpush1.bf16.msra.mxu0 %v3973
        %4075 = vmatprep.subr.bf16.mxu0 %v3978
        %4076 = vmatpush1.bf16.msra.mxu0 %v3977
        %4077 = vmatprep.mubr.bf16.mxu0 %v3638
        %4078 = vmatmul.mubr.bf16.gmra.mrb[0].mxu0 %v3637
        %v4079 = vpop.f32.mrb[0].mxu0
        %v4080 = vadd.f32 %v3708, %v4079
        %v4081 = vpop.f32.mrb[0].mxu0
        %v4082 = vadd.f32 %v3712, %v4081
        %v4083 = vpop.f32.mrb[0].mxu0
        %v4084 = vadd.f32 %v3708, %v4083
        %v4085 = vpop.f32.mrb[0].mxu0
        %v4086 = vadd.f32 %v3712, %v4085
        %4087 = vdwg.mxu0
        %4088 = vmatprep.subr.bf16.mxu0 %v3920
        %4089 = vmatpush1.bf16.msra.mxu0 %v3919
        %4090 = vmatprep.subr.bf16.mxu0 %v3924
        %4091 = vmatpush1.bf16.msra.mxu0 %v3923
        %4092 = vmatprep.subr.bf16.mxu0 %v3928
        %4093 = vmatpush1.bf16.msra.mxu0 %v3927
        %4094 = vmatprep.subr.bf16.mxu0 %v3932
        %4095 = vmatpush1.bf16.msra.mxu0 %v3931
        %4096 = vmatprep.subr.bf16.mxu0 %v3936
        %4097 = vmatpush1.bf16.msra.mxu0 %v3935
        %4098 = vmatprep.subr.bf16.mxu0 %v3940
        %4099 = vmatpush1.bf16.msra.mxu0 %v3939
        %4100 = vmatprep.subr.bf16.mxu0 %v3944
        %4101 = vmatpush1.bf16.msra.mxu0 %v3943
        %4102 = vmatprep.subr.bf16.mxu0 %v3948
        %4103 = vmatpush1.bf16.msra.mxu0 %v3947
        %4104 = vmatprep.subr.bf16.mxu0 %v3952
        %4105 = vmatpush1.bf16.msra.mxu0 %v3951
        %4106 = vmatprep.subr.bf16.mxu0 %v3956
        %4107 = vmatpush1.bf16.msra.mxu0 %v3955
        %4108 = vmatprep.subr.bf16.mxu0 %v3960
        %4109 = vmatpush1.bf16.msra.mxu0 %v3959
        %4110 = vmatprep.subr.bf16.mxu0 %v3964
        %4111 = vmatpush1.bf16.msra.mxu0 %v3963
        %4112 = vmatprep.subr.bf16.mxu0 %v3968
        %4113 = vmatpush1.bf16.msra.mxu0 %v3967
        %4114 = vmatprep.subr.bf16.mxu0 %v3972
        %4115 = vmatpush1.bf16.msra.mxu0 %v3971
        %4116 = vmatprep.subr.bf16.mxu0 %v3976
        %4117 = vmatpush1.bf16.msra.mxu0 %v3975
        %4118 = vmatprep.subr.bf16.mxu0 %v3980
        %4119 = vmatpush1.bf16.msra.mxu0 %v3979
        %4120 = vmatprep.mubr.bf16.mxu0 %v3638
        %4121 = vmatmul.mubr.bf16.gmra.mrb[0].mxu0 %v3637
        %v4122 = vpop.f32.mrb[0].mxu0
        %v4123 = vadd.f32 %v3716, %v4122
        %v4124 = vpop.f32.mrb[0].mxu0
        %v4125 = vadd.f32 %v3720, %v4124
        %v4126 = vpop.f32.mrb[0].mxu0
        %v4127 = vadd.f32 %v3716, %v4126
        %v4128 = vpop.f32.mrb[0].mxu0
        %v4129 = vadd.f32 %v3720, %v4128
        %4130 = vdwg.mxu0
        %v4131 = vmul.f32 %v4080, 0.5
        %v4132 = vmul.f32 %v4082, 0.5
        %v4133 = vmul.f32 %v4123, 0.5
        %v4134 = vmul.f32 %v4125, 0.5
        %v4135 = vmul.f32 %v4084, 0.5
        %v4136 = vmul.f32 %v4086, 0.5
        %v4137 = vmul.f32 %v4127, 0.5
        %v4138 = vmul.f32 %v4129, 0.5
        %v4139 = vmul.f32 %v4080, 0.044715
        %v4140 = vmul.f32 %v4082, 0.044715
        %v4141 = vmul.f32 %v4123, 0.044715
        %v4142 = vmul.f32 %v4125, 0.044715
        %v4143 = vmul.f32 %v4084, 0.044715
        %v4144 = vmul.f32 %v4086, 0.044715
        %v4145 = vmul.f32 %v4127, 0.044715
        %v4146 = vmul.f32 %v4129, 0.044715
        %v4147 = vmul.f32 %v4139, %v4080
        %v4148 = vmul.f32 %v4140, %v4082
        %v4149 = vmul.f32 %v4141, %v4123
        %v4150 = vmul.f32 %v4142, %v4125
        %v4151 = vmul.f32 %v4143, %v4084
        %v4152 = vmul.f32 %v4144, %v4086
        %v4153 = vmul.f32 %v4145, %v4127
        %v4154 = vmul.f32 %v4146, %v4129
        %v4155 = vmul.f32 %v4147, %v4080
        %v4156 = vmul.f32 %v4148, %v4082
        %v4157 = vmul.f32 %v4149, %v4123
        %v4158 = vmul.f32 %v4150, %v4125
        %v4159 = vmul.f32 %v4151, %v4084
        %v4160 = vmul.f32 %v4152, %v4086
        %v4161 = vmul.f32 %v4153, %v4127
        %v4162 = vmul.f32 %v4154, %v4129
        %v4163 = vadd.f32 %v4080, %v4155
        %v4164 = vadd.f32 %v4082, %v4156
        %v4165 = vadd.f32 %v4123, %v4157
        %v4166 = vadd.f32 %v4125, %v4158
        %v4167 = vadd.f32 %v4084, %v4159
        %v4168 = vadd.f32 %v4086, %v4160
        %v4169 = vadd.f32 %v4127, %v4161
        %v4170 = vadd.f32 %v4129, %v4162
        %v4171 = vmul.f32 %v4163, 0.7978846
        %v4172 = vmul.f32 %v4164, 0.7978846
        %v4173 = vmul.f32 %v4165, 0.7978846
        %v4174 = vmul.f32 %v4166, 0.7978846
        %v4175 = vmul.f32 %v4167, 0.7978846
        %v4176 = vmul.f32 %v4168, 0.7978846
        %v4177 = vmul.f32 %v4169, 0.7978846
        %v4178 = vmul.f32 %v4170, 0.7978846
        %v4179 = vtanh.pop %v4171
        %v4180 = vtanh.pop %v4172
        %v4181 = vtanh.pop %v4173
        %v4182 = vtanh.pop %v4174
        %v4183 = vtanh.pop %v4175
        %v4184 = vtanh.pop %v4176
        %v4185 = vtanh.pop %v4177
        %v4186 = vtanh.pop %v4178
        %v4187 = vadd.f32 %v4179, 1.0
        %v4188 = vadd.f32 %v4180, 1.0
        %v4189 = vadd.f32 %v4181, 1.0
        %v4190 = vadd.f32 %v4182, 1.0
        %v4191 = vadd.f32 %v4183, 1.0
        %v4192 = vadd.f32 %v4184, 1.0
        %v4193 = vadd.f32 %v4185, 1.0
        %v4194 = vadd.f32 %v4186, 1.0
        %v4195 = vmul.f32 %v4131, %v4187
        %v4196 = vmul.f32 %v4132, %v4188
        %v4197 = vmul.f32 %v4133, %v4189
        %v4198 = vmul.f32 %v4134, %v4190
        %v4199 = vmul.f32 %v4135, %v4191
        %v4200 = vmul.f32 %v4136, %v4192
        %v4201 = vmul.f32 %v4137, %v4193
        %v4202 = vmul.f32 %v4138, %v4194
        %v4203 = vpack.c.bf16 %v4199, %v4195
        %v4204 = vpack.c.bf16 %v4200, %v4196
        %v4205 = vpack.c.bf16 %v4201, %v4197
        %v4206 = vpack.c.bf16 %v4202, %v4198
        %v4207 = vld [vmem:[#allocation19] sm:$0xff]
        %v4208 = vld [vmem:[#allocation19 + $0x8] sm:$0xff]
        %v4209 = vld [vmem:[#allocation19 + $0x10] sm:$0xff]
        %v4210 = vld [vmem:[#allocation19 + $0x18] sm:$0xff]
        %v4211 = vld [vmem:[#allocation19 + $0x20] sm:$0xff]
        %v4212 = vld [vmem:[#allocation19 + $0x28] sm:$0xff]
        %v4213 = vld [vmem:[#allocation19 + $0x30] sm:$0xff]
        %v4214 = vld [vmem:[#allocation19 + $0x38] sm:$0xff]
        %v4215 = vld [vmem:[#allocation19 + $0x40] sm:$0xff]
        %v4216 = vld [vmem:[#allocation19 + $0x48] sm:$0xff]
        %v4217 = vld [vmem:[#allocation19 + $0x50] sm:$0xff]
        %v4218 = vld [vmem:[#allocation19 + $0x58] sm:$0xff]
        %v4219 = vld [vmem:[#allocation19 + $0x60] sm:$0xff]
        %v4220 = vld [vmem:[#allocation19 + $0x68] sm:$0xff]
        %v4221 = vld [vmem:[#allocation19 + $0x70] sm:$0xff]
        %v4222 = vld [vmem:[#allocation19 + $0x78] sm:$0xff]
        %v4223 = vld [vmem:[#allocation19 + $0x80] sm:$0xff]
        %v4224 = vld [vmem:[#allocation19 + $0x88] sm:$0xff]
        %v4225 = vld [vmem:[#allocation19 + $0x90] sm:$0xff]
        %v4226 = vld [vmem:[#allocation19 + $0x98] sm:$0xff]
        %v4227 = vld [vmem:[#allocation19 + $0xa0] sm:$0xff]
        %v4228 = vld [vmem:[#allocation19 + $0xa8] sm:$0xff]
        %v4229 = vld [vmem:[#allocation19 + $0xb0] sm:$0xff]
        %v4230 = vld [vmem:[#allocation19 + $0xb8] sm:$0xff]
        %v4231 = vld [vmem:[#allocation19 + $0xc0] sm:$0xff]
        %v4232 = vld [vmem:[#allocation19 + $0xc8] sm:$0xff]
        %v4233 = vld [vmem:[#allocation19 + $0xd0] sm:$0xff]
        %v4234 = vld [vmem:[#allocation19 + $0xd8] sm:$0xff]
        %v4235 = vld [vmem:[#allocation19 + $0xe0] sm:$0xff]
        %v4236 = vld [vmem:[#allocation19 + $0xe8] sm:$0xff]
        %v4237 = vld [vmem:[#allocation19 + $0xf0] sm:$0xff]
        %v4238 = vld [vmem:[#allocation19 + $0xf8] sm:$0xff]
        %v4239 = vld [vmem:[#allocation19 + $0x100] sm:$0xff]
        %v4240 = vld [vmem:[#allocation19 + $0x108] sm:$0xff]
        %v4241 = vld [vmem:[#allocation19 + $0x110] sm:$0xff]
        %v4242 = vld [vmem:[#allocation19 + $0x118] sm:$0xff]
        %v4243 = vld [vmem:[#allocation19 + $0x120] sm:$0xff]
        %v4244 = vld [vmem:[#allocation19 + $0x128] sm:$0xff]
        %v4245 = vld [vmem:[#allocation19 + $0x130] sm:$0xff]
        %v4246 = vld [vmem:[#allocation19 + $0x138] sm:$0xff]
        %v4247 = vld [vmem:[#allocation19 + $0x140] sm:$0xff]
        %v4248 = vld [vmem:[#allocation19 + $0x148] sm:$0xff]
        %v4249 = vld [vmem:[#allocation19 + $0x150] sm:$0xff]
        %v4250 = vld [vmem:[#allocation19 + $0x158] sm:$0xff]
        %v4251 = vld [vmem:[#allocation19 + $0x160] sm:$0xff]
        %v4252 = vld [vmem:[#allocation19 + $0x168] sm:$0xff]
        %v4253 = vld [vmem:[#allocation19 + $0x170] sm:$0xff]
        %v4254 = vld [vmem:[#allocation19 + $0x178] sm:$0xff]
        %v4255 = vld [vmem:[#allocation19 + $0x180] sm:$0xff]
        %v4256 = vld [vmem:[#allocation19 + $0x188] sm:$0xff]
        %v4257 = vld [vmem:[#allocation19 + $0x190] sm:$0xff]
        %v4258 = vld [vmem:[#allocation19 + $0x198] sm:$0xff]
        %v4259 = vld [vmem:[#allocation19 + $0x1a0] sm:$0xff]
        %v4260 = vld [vmem:[#allocation19 + $0x1a8] sm:$0xff]
        %v4261 = vld [vmem:[#allocation19 + $0x1b0] sm:$0xff]
        %v4262 = vld [vmem:[#allocation19 + $0x1b8] sm:$0xff]
        %v4263 = vld [vmem:[#allocation19 + $0x1c0] sm:$0xff]
        %v4264 = vld [vmem:[#allocation19 + $0x1c8] sm:$0xff]
        %v4265 = vld [vmem:[#allocation19 + $0x1d0] sm:$0xff]
        %v4266 = vld [vmem:[#allocation19 + $0x1d8] sm:$0xff]
        %v4267 = vld [vmem:[#allocation19 + $0x1e0] sm:$0xff]
        %v4268 = vld [vmem:[#allocation19 + $0x1e8] sm:$0xff]
        %v4269 = vld [vmem:[#allocation19 + $0x1f0] sm:$0xff]
        %v4270 = vld [vmem:[#allocation19 + $0x1f8] sm:$0xff]
        %v4271 = vld [vmem:[%s21] sm:$0x3]
        %v4273 = vlaneseq
        %v4274 = vshrl.u32 %v4273, 7
        %v4275 = vsub.s32 0, %v4274
        %v4276 = vrot.slane %v4271, %v4275
        %v4277 = vlaneseq
        %v4278 = vshrl.u32 %v4277, 7
        %v4279 = vsub.s32 1, %v4278
        %v4280 = vrot.slane %v4271, %v4279
        %v4347 = vunpack.c.l.b16 %v4207
        %v4348 = vunpack.c.h.b16 %v4207
        %v4349 = vunpack.c.l.b16 %v4208
        %v4350 = vunpack.c.h.b16 %v4208
        %v4351 = vunpack.c.l.b16 %v4209
        %v4352 = vunpack.c.h.b16 %v4209
        %v4353 = vunpack.c.l.b16 %v4210
        %v4354 = vunpack.c.h.b16 %v4210
        %v4355 = vunpack.c.l.b16 %v4211
        %v4356 = vunpack.c.h.b16 %v4211
        %v4357 = vunpack.c.l.b16 %v4212
        %v4358 = vunpack.c.h.b16 %v4212
        %v4359 = vunpack.c.l.b16 %v4213
        %v4360 = vunpack.c.h.b16 %v4213
        %v4361 = vunpack.c.l.b16 %v4214
        %v4362 = vunpack.c.h.b16 %v4214
        %v4363 = vunpack.c.l.b16 %v4215
        %v4364 = vunpack.c.h.b16 %v4215
        %v4365 = vunpack.c.l.b16 %v4216
        %v4366 = vunpack.c.h.b16 %v4216
        %v4367 = vunpack.c.l.b16 %v4217
        %v4368 = vunpack.c.h.b16 %v4217
        %v4369 = vunpack.c.l.b16 %v4218
        %v4370 = vunpack.c.h.b16 %v4218
        %v4371 = vunpack.c.l.b16 %v4219
        %v4372 = vunpack.c.h.b16 %v4219
        %v4373 = vunpack.c.l.b16 %v4220
        %v4374 = vunpack.c.h.b16 %v4220
        %v4375 = vunpack.c.l.b16 %v4221
        %v4376 = vunpack.c.h.b16 %v4221
        %v4377 = vunpack.c.l.b16 %v4222
        %v4378 = vunpack.c.h.b16 %v4222
        %v4379 = vunpack.c.l.b16 %v4223
        %v4380 = vunpack.c.h.b16 %v4223
        %v4381 = vunpack.c.l.b16 %v4224
        %v4382 = vunpack.c.h.b16 %v4224
        %v4383 = vunpack.c.l.b16 %v4225
        %v4384 = vunpack.c.h.b16 %v4225
        %v4385 = vunpack.c.l.b16 %v4226
        %v4386 = vunpack.c.h.b16 %v4226
        %v4387 = vunpack.c.l.b16 %v4227
        %v4388 = vunpack.c.h.b16 %v4227
        %v4389 = vunpack.c.l.b16 %v4228
        %v4390 = vunpack.c.h.b16 %v4228
        %v4391 = vunpack.c.l.b16 %v4229
        %v4392 = vunpack.c.h.b16 %v4229
        %v4393 = vunpack.c.l.b16 %v4230
        %v4394 = vunpack.c.h.b16 %v4230
        %v4395 = vunpack.c.l.b16 %v4231
        %v4396 = vunpack.c.h.b16 %v4231
        %v4397 = vunpack.c.l.b16 %v4232
        %v4398 = vunpack.c.h.b16 %v4232
        %v4399 = vunpack.c.l.b16 %v4233
        %v4400 = vunpack.c.h.b16 %v4233
        %v4401 = vunpack.c.l.b16 %v4234
        %v4402 = vunpack.c.h.b16 %v4234
        %v4403 = vunpack.c.l.b16 %v4235
        %v4404 = vunpack.c.h.b16 %v4235
        %v4405 = vunpack.c.l.b16 %v4236
        %v4406 = vunpack.c.h.b16 %v4236
        %v4407 = vunpack.c.l.b16 %v4237
        %v4408 = vunpack.c.h.b16 %v4237
        %v4409 = vunpack.c.l.b16 %v4238
        %v4410 = vunpack.c.h.b16 %v4238
        %v4411 = vunpack.c.l.b16 %v4239
        %v4412 = vunpack.c.h.b16 %v4239
        %v4413 = vunpack.c.l.b16 %v4240
        %v4414 = vunpack.c.h.b16 %v4240
        %v4415 = vunpack.c.l.b16 %v4241
        %v4416 = vunpack.c.h.b16 %v4241
        %v4417 = vunpack.c.l.b16 %v4242
        %v4418 = vunpack.c.h.b16 %v4242
        %v4419 = vunpack.c.l.b16 %v4243
        %v4420 = vunpack.c.h.b16 %v4243
        %v4421 = vunpack.c.l.b16 %v4244
        %v4422 = vunpack.c.h.b16 %v4244
        %v4423 = vunpack.c.l.b16 %v4245
        %v4424 = vunpack.c.h.b16 %v4245
        %v4425 = vunpack.c.l.b16 %v4246
        %v4426 = vunpack.c.h.b16 %v4246
        %v4427 = vunpack.c.l.b16 %v4247
        %v4428 = vunpack.c.h.b16 %v4247
        %v4429 = vunpack.c.l.b16 %v4248
        %v4430 = vunpack.c.h.b16 %v4248
        %v4431 = vunpack.c.l.b16 %v4249
        %v4432 = vunpack.c.h.b16 %v4249
        %v4433 = vunpack.c.l.b16 %v4250
        %v4434 = vunpack.c.h.b16 %v4250
        %v4435 = vunpack.c.l.b16 %v4251
        %v4436 = vunpack.c.h.b16 %v4251
        %v4437 = vunpack.c.l.b16 %v4252
        %v4438 = vunpack.c.h.b16 %v4252
        %v4439 = vunpack.c.l.b16 %v4253
        %v4440 = vunpack.c.h.b16 %v4253
        %v4441 = vunpack.c.l.b16 %v4254
        %v4442 = vunpack.c.h.b16 %v4254
        %v4443 = vunpack.c.l.b16 %v4255
        %v4444 = vunpack.c.h.b16 %v4255
        %v4445 = vunpack.c.l.b16 %v4256
        %v4446 = vunpack.c.h.b16 %v4256
        %v4447 = vunpack.c.l.b16 %v4257
        %v4448 = vunpack.c.h.b16 %v4257
        %v4449 = vunpack.c.l.b16 %v4258
        %v4450 = vunpack.c.h.b16 %v4258
        %v4451 = vunpack.c.l.b16 %v4259
        %v4452 = vunpack.c.h.b16 %v4259
        %v4453 = vunpack.c.l.b16 %v4260
        %v4454 = vunpack.c.h.b16 %v4260
        %v4455 = vunpack.c.l.b16 %v4261
        %v4456 = vunpack.c.h.b16 %v4261
        %v4457 = vunpack.c.l.b16 %v4262
        %v4458 = vunpack.c.h.b16 %v4262
        %v4459 = vunpack.c.l.b16 %v4263
        %v4460 = vunpack.c.h.b16 %v4263
        %v4461 = vunpack.c.l.b16 %v4264
        %v4462 = vunpack.c.h.b16 %v4264
        %v4463 = vunpack.c.l.b16 %v4265
        %v4464 = vunpack.c.h.b16 %v4265
        %v4465 = vunpack.c.l.b16 %v4266
        %v4466 = vunpack.c.h.b16 %v4266
        %v4467 = vunpack.c.l.b16 %v4267
        %v4468 = vunpack.c.h.b16 %v4267
        %v4469 = vunpack.c.l.b16 %v4268
        %v4470 = vunpack.c.h.b16 %v4268
        %v4471 = vunpack.c.l.b16 %v4269
        %v4472 = vunpack.c.h.b16 %v4269
        %v4473 = vunpack.c.l.b16 %v4270
        %v4474 = vunpack.c.h.b16 %v4270
        %v4475 = vpack.c.b16 %v4349, %v4347
        %v4476 = vpack.c.b16 %v4350, %v4348
        %v4477 = vpack.c.b16 %v4353, %v4351
        %v4478 = vpack.c.b16 %v4354, %v4352
        %v4479 = vpack.c.b16 %v4357, %v4355
        %v4480 = vpack.c.b16 %v4358, %v4356
        %v4481 = vpack.c.b16 %v4361, %v4359
        %v4482 = vpack.c.b16 %v4362, %v4360
        %v4483 = vpack.c.b16 %v4365, %v4363
        %v4484 = vpack.c.b16 %v4366, %v4364
        %v4485 = vpack.c.b16 %v4369, %v4367
        %v4486 = vpack.c.b16 %v4370, %v4368
        %v4487 = vpack.c.b16 %v4373, %v4371
        %v4488 = vpack.c.b16 %v4374, %v4372
        %v4489 = vpack.c.b16 %v4377, %v4375
        %v4490 = vpack.c.b16 %v4378, %v4376
        %v4491 = vpack.c.b16 %v4381, %v4379
        %v4492 = vpack.c.b16 %v4382, %v4380
        %v4493 = vpack.c.b16 %v4385, %v4383
        %v4494 = vpack.c.b16 %v4386, %v4384
        %v4495 = vpack.c.b16 %v4389, %v4387
        %v4496 = vpack.c.b16 %v4390, %v4388
        %v4497 = vpack.c.b16 %v4393, %v4391
        %v4498 = vpack.c.b16 %v4394, %v4392
        %v4499 = vpack.c.b16 %v4397, %v4395
        %v4500 = vpack.c.b16 %v4398, %v4396
        %v4501 = vpack.c.b16 %v4401, %v4399
        %v4502 = vpack.c.b16 %v4402, %v4400
        %v4503 = vpack.c.b16 %v4405, %v4403
        %v4504 = vpack.c.b16 %v4406, %v4404
        %v4505 = vpack.c.b16 %v4409, %v4407
        %v4506 = vpack.c.b16 %v4410, %v4408
        %v4507 = vpack.c.b16 %v4413, %v4411
        %v4508 = vpack.c.b16 %v4414, %v4412
        %v4509 = vpack.c.b16 %v4417, %v4415
        %v4510 = vpack.c.b16 %v4418, %v4416
        %v4511 = vpack.c.b16 %v4421, %v4419
        %v4512 = vpack.c.b16 %v4422, %v4420
        %v4513 = vpack.c.b16 %v4425, %v4423
        %v4514 = vpack.c.b16 %v4426, %v4424
        %v4515 = vpack.c.b16 %v4429, %v4427
        %v4516 = vpack.c.b16 %v4430, %v4428
        %v4517 = vpack.c.b16 %v4433, %v4431
        %v4518 = vpack.c.b16 %v4434, %v4432
        %v4519 = vpack.c.b16 %v4437, %v4435
        %v4520 = vpack.c.b16 %v4438, %v4436
        %v4521 = vpack.c.b16 %v4441, %v4439
        %v4522 = vpack.c.b16 %v4442, %v4440
        %v4523 = vpack.c.b16 %v4445, %v4443
        %v4524 = vpack.c.b16 %v4446, %v4444
        %v4525 = vpack.c.b16 %v4449, %v4447
        %v4526 = vpack.c.b16 %v4450, %v4448
        %v4527 = vpack.c.b16 %v4453, %v4451
        %v4528 = vpack.c.b16 %v4454, %v4452
        %v4529 = vpack.c.b16 %v4457, %v4455
        %v4530 = vpack.c.b16 %v4458, %v4456
        %v4531 = vpack.c.b16 %v4461, %v4459
        %v4532 = vpack.c.b16 %v4462, %v4460
        %v4533 = vpack.c.b16 %v4465, %v4463
        %v4534 = vpack.c.b16 %v4466, %v4464
        %v4535 = vpack.c.b16 %v4469, %v4467
        %v4536 = vpack.c.b16 %v4470, %v4468
        %v4537 = vpack.c.b16 %v4473, %v4471
        %v4538 = vpack.c.b16 %v4474, %v4472
        %4603 = vmatprep.subr.bf16.mxu0 %v4476
        %4604 = vmatpush1.bf16.msra.mxu0 %v4475
        %4605 = vmatprep.subr.bf16.mxu0 %v4478
        %4606 = vmatpush1.bf16.msra.mxu0 %v4477
        %4607 = vmatprep.subr.bf16.mxu0 %v4480
        %4608 = vmatpush1.bf16.msra.mxu0 %v4479
        %4609 = vmatprep.subr.bf16.mxu0 %v4482
        %4610 = vmatpush1.bf16.msra.mxu0 %v4481
        %4611 = vmatprep.subr.bf16.mxu0 %v4484
        %4612 = vmatpush1.bf16.msra.mxu0 %v4483
        %4613 = vmatprep.subr.bf16.mxu0 %v4486
        %4614 = vmatpush1.bf16.msra.mxu0 %v4485
        %4615 = vmatprep.subr.bf16.mxu0 %v4488
        %4616 = vmatpush1.bf16.msra.mxu0 %v4487
        %4617 = vmatprep.subr.bf16.mxu0 %v4490
        %4618 = vmatpush1.bf16.msra.mxu0 %v4489
        %4619 = vmatprep.subr.bf16.mxu0 %v4492
        %4620 = vmatpush1.bf16.msra.mxu0 %v4491
        %4621 = vmatprep.subr.bf16.mxu0 %v4494
        %4622 = vmatpush1.bf16.msra.mxu0 %v4493
        %4623 = vmatprep.subr.bf16.mxu0 %v4496
        %4624 = vmatpush1.bf16.msra.mxu0 %v4495
        %4625 = vmatprep.subr.bf16.mxu0 %v4498
        %4626 = vmatpush1.bf16.msra.mxu0 %v4497
        %4627 = vmatprep.subr.bf16.mxu0 %v4500
        %4628 = vmatpush1.bf16.msra.mxu0 %v4499
        %4629 = vmatprep.subr.bf16.mxu0 %v4502
        %4630 = vmatpush1.bf16.msra.mxu0 %v4501
        %4631 = vmatprep.subr.bf16.mxu0 %v4504
        %4632 = vmatpush1.bf16.msra.mxu0 %v4503
        %4633 = vmatprep.subr.bf16.mxu0 %v4506
        %4634 = vmatpush1.bf16.msra.mxu0 %v4505
        %4635 = vmatprep.mubr.bf16.mxu0 %v4204
        %4636 = vmatmul.mubr.bf16.gmra.mrb[0].mxu0 %v4203
        %v4637 = vpop.f32.mrb[0].mxu0
        %v4638 = vadd.f32 %v4276, %v4637
        %v4639 = vpop.f32.mrb[0].mxu0
        %v4640 = vadd.f32 %v4280, %v4639
        %v4641 = vpop.f32.mrb[0].mxu0
        %v4642 = vadd.f32 %v4276, %v4641
        %v4643 = vpop.f32.mrb[0].mxu0
        %v4644 = vadd.f32 %v4280, %v4643
        %4645 = vdwg.mxu0
        %4646 = vmatprep.subr.bf16.mxu0 %v4508
        %4647 = vmatpush1.bf16.msra.mxu0 %v4507
        %4648 = vmatprep.subr.bf16.mxu0 %v4510
        %4649 = vmatpush1.bf16.msra.mxu0 %v4509
        %4650 = vmatprep.subr.bf16.mxu0 %v4512
        %4651 = vmatpush1.bf16.msra.mxu0 %v4511
        %4652 = vmatprep.subr.bf16.mxu0 %v4514
        %4653 = vmatpush1.bf16.msra.mxu0 %v4513
        %4654 = vmatprep.subr.bf16.mxu0 %v4516
        %4655 = vmatpush1.bf16.msra.mxu0 %v4515
        %4656 = vmatprep.subr.bf16.mxu0 %v4518
        %4657 = vmatpush1.bf16.msra.mxu0 %v4517
        %4658 = vmatprep.subr.bf16.mxu0 %v4520
        %4659 = vmatpush1.bf16.msra.mxu0 %v4519
        %4660 = vmatprep.subr.bf16.mxu0 %v4522
        %4661 = vmatpush1.bf16.msra.mxu0 %v4521
        %4662 = vmatprep.subr.bf16.mxu0 %v4524
        %4663 = vmatpush1.bf16.msra.mxu0 %v4523
        %4664 = vmatprep.subr.bf16.mxu0 %v4526
        %4665 = vmatpush1.bf16.msra.mxu0 %v4525
        %4666 = vmatprep.subr.bf16.mxu0 %v4528
        %4667 = vmatpush1.bf16.msra.mxu0 %v4527
        %4668 = vmatprep.subr.bf16.mxu0 %v4530
        %4669 = vmatpush1.bf16.msra.mxu0 %v4529
        %4670 = vmatprep.subr.bf16.mxu0 %v4532
        %4671 = vmatpush1.bf16.msra.mxu0 %v4531
        %4672 = vmatprep.subr.bf16.mxu0 %v4534
        %4673 = vmatpush1.bf16.msra.mxu0 %v4533
        %4674 = vmatprep.subr.bf16.mxu0 %v4536
        %4675 = vmatpush1.bf16.msra.mxu0 %v4535
        %4676 = vmatprep.subr.bf16.mxu0 %v4538
        %4677 = vmatpush1.bf16.msra.mxu0 %v4537
        %4678 = vmatprep.mubr.bf16.mxu0 %v4206
        %4679 = vmatmul.mubr.bf16.gmra.mrb[0].mxu0 %v4205
        %v4680 = vpop.f32.mrb[0].mxu0
        %v4681 = vadd.f32 %v4638, %v4680
        %v4682 = vpop.f32.mrb[0].mxu0
        %v4683 = vadd.f32 %v4640, %v4682
        %v4684 = vpop.f32.mrb[0].mxu0
        %v4685 = vadd.f32 %v4642, %v4684
        %v4686 = vpop.f32.mrb[0].mxu0
        %v4687 = vadd.f32 %v4644, %v4686
        %4688 = vdwg.mxu0
        %v4689 = vadd.f32 %v3569, %v4681
        %v4690 = vadd.f32 %v3570, %v4683
        %v4691 = vadd.f32 %v3571, %v4685
        %v4692 = vadd.f32 %v3572, %v4687
        %4693 = vst [vmem:[%s867] sm:$0xff] %v4689
        %4694 = vst [vmem:[%s867 + $0x8] sm:$0xff] %v4690
        %4695 = vst [vmem:[%s867 + $0x10] sm:$0xff] %v4691
        %4696 = vst [vmem:[%s867 + $0x18] sm:$0xff] %v4692
        %s4697 = sand.u32 %s526, 1
        %s4698 = scalar_lea.sflag [#allocation4], %s4697
        %s4699 = sand.u32 %s526, 1
        %s4700 = smul.addr %s4699, 32
        %s4701 = scalar_lea.vmem [#allocation20], %s4700
        // Predicated region
        $region153: #{tpu_custom_call.1} parent=107 // pred_check
          %p4702 = pneg %p536
        $region154: #{tpu_custom_call.1} parent=107 // pred_check_branch
          %4704 = sbr.rel (%p4702) target = $region156
        $region155: #{tpu_custom_call.1} parent=107 // pred_region
          %s4706 = ssub.s32 512, 512
          %4707 = vsyncadd %s4698, %s4706
          %s4708 = smul.addr %s46, 4
          %s4709 = smul.addr %s4708, 128
          %s4710 = scalar_lea.hbm %s22, %s4709
          %s4711 = sshll.u32 %s4701, 4
          %s4712 = int_to_ptr.vmem [resolvable:$true] %s4711
          %4717 = dma.vmem_to_hbm [thread:$0]  %s4712, 512, %s4710, %s4698, 256, 256, 16
        $region156: #{tpu_custom_call.1} parent=107 // pred_fallthru
          _
      $region108: #{tpu_custom_call.1} parent=5 // pred_fallthru
        _
      %p4718 = scmp.le.s32.totalorder 2, %s41
      // Predicated region
      $region157: #{tpu_custom_call.1} parent=5 // pred_check
        %p4719 = pneg %p4718
      $region158: #{tpu_custom_call.1} parent=5 // pred_check_branch
        %4721 = sbr.rel (%p4719) target = $region160
      $region159: #{tpu_custom_call.1} parent=5 // pred_region
        %s4722 = ssub.s32 %s41, 2
        // Predicated region
        $region161: #{tpu_custom_call.1} parent=159 // pred_check
          %p4723 = pneg %p542
        $region162: #{tpu_custom_call.1} parent=159 // pred_check_branch
          %4725 = sbr.rel (%p4723) target = $region164
        $region163: #{tpu_custom_call.1} parent=159 // pred_region
          %s4726 = sand.u32 %s527, 1
          %s4727 = scalar_lea.sflag [#allocation4], %s4726
          %s4728 = sand.u32 %s527, 1
          %s4729 = smul.addr %s4728, 32
          %s4730 = scalar_lea.vmem [#allocation20], %s4729
          %4731 = dma.done %s4727, 512
        $region164: #{tpu_custom_call.1} parent=159 // pred_fallthru
          _
      $region160: #{tpu_custom_call.1} parent=5 // pred_fallthru
        _
    $region6: #{tpu_custom_call.1} parent=1 // loop_footer
      %s45 = sadd.s32 1, %s41
    $region7: #{tpu_custom_call.1} parent=1 // loop_footer_branch
      %40 = sbr.rel target = $region3
    $region8: #{tpu_custom_call.1} parent=1 // loop_exit
      _
    %4732 = vsyncpa [#allocation3], 1
    %s4733 = scalar_lea.sflag [#allocation3], 1
    %4734 = vsyncpa %s4733, 1
    %4735 = vsyncpa [#allocation6], 1
    %s4736 = scalar_lea.sflag [#allocation6], 1
    %4737 = vsyncpa %s4736, 1
    %4738 = vsyncpa [#allocation9], 1
    %4739 = vsyncpa [#allocation12], 1
    %4740 = vsyncpa [#allocation15], 1
    %4741 = vsyncpa [#allocation18], 1
    %4742 = vsyncpa [#allocation4], 1
    %s4743 = scalar_lea.sflag [#allocation4], 1
    %4744 = vsyncpa %s4743, 1

</llo_original>
